<compile_context>
chip_gen: v7x
topology: tpu7x:2x2x1
jax: 0.10.0
libtpu: 0.0.40
codegen_flags: <defaults>
</compile_context>

<pallas_src>
import functools

import jax
import jax.numpy as jnp
import numpy as np
from jax.experimental import pallas as pl
from jax.experimental.pallas import tpu as pltpu


# ----------------------------------------------------------------------------
# In-kernel helpers
# ----------------------------------------------------------------------------

def _gelu_tanh(x):
    # TODO(synk): HF XLM-R/ViSoBERT uses exact erf-GELU; the tanh approximation
    # has tiny numeric drift vs the PyTorch reference.
    c = np.float32(np.sqrt(2.0 / np.pi))
    return 0.5 * x * (1.0 + jnp.tanh(c * (x + 0.044715 * x * x * x)))


def _layernorm(x, g, b, eps=1e-12):
    mean = jnp.mean(x, axis=-1, keepdims=True)
    xc = x - mean
    var = jnp.mean(xc * xc, axis=-1, keepdims=True)
    return xc * jax.lax.rsqrt(var + eps) * g + b


def _vmem_limit_bytes():
    """Per-generation scoped-VMEM limit: ~100 MiB on v5e/v6e, ~54 MiB on v7x."""
    cap = 128 * 1024 * 1024
    try:
        cap = int(pltpu.get_tpu_info().vmem_capacity_bytes)
    except Exception:
        pass
    return min(100 * 1024 * 1024, int(cap * 0.85))


# ----------------------------------------------------------------------------
# Fused model kernel: embedding LN + all transformer layers + pooler + head.
# Grid = (batch_element, layer); x lives in a (S, H) VMEM scratch across the
# layer axis; only (1, C_pad) logits are written per batch element.
# ----------------------------------------------------------------------------

def _model_kernel(x_emb_ref, amask_ref, emb_g_ref, emb_b_ref,
                  wqkv_ref, bqkv_ref, wo_ref, bo_ref,
                  ln1g_ref, ln1b_ref, w1_ref, b1_ref, w2_ref, b2_ref,
                  ln2g_ref, ln2b_ref,
                  pool_w_ref, pool_b_ref, cw1_ref, cb1_ref, cw2_ref, cb2_ref,
                  out_ref, x_vmem,
                  *, num_heads, head_dim):
    layer = pl.program_id(1)
    S, H = x_vmem.shape

    @pl.when(layer == 0)
    def _():
        # Residual-free embedding LayerNorm (re-initialized per batch element).
        x_vmem[...] = _layernorm(x_emb_ref[...], emb_g_ref[...], emb_b_ref[...])

    x = x_vmem[...]                                        # (S, H) f32
    xb = x.astype(jnp.bfloat16)

    # --- self-attention (all heads batched) ---------------------------------
    qkv = jnp.dot(xb, wqkv_ref[...],
                  preferred_element_type=jnp.float32) + bqkv_ref[...]  # (S, 3H)
    # Q columns were pre-scaled by 1/sqrt(head_dim) in the wrapper.
    q = qkv[:, :H].reshape(S, num_heads, head_dim).astype(jnp.bfloat16)
    k = qkv[:, H:2 * H].reshape(S, num_heads, head_dim).astype(jnp.bfloat16)
    v = qkv[:, 2 * H:].reshape(S, num_heads, head_dim).astype(jnp.bfloat16)

    s = jnp.einsum('qhd,khd->hqk', q, k,
                   preferred_element_type=jnp.float32)     # (nh, S, S)
    s = s + amask_ref[...]                                 # (1, S) — added once
    s = s - jnp.max(s, axis=-1, keepdims=True)
    p = jnp.exp(s)
    p = p * pl.reciprocal(jnp.sum(p, axis=-1, keepdims=True), approx=True)

    ctx = jnp.einsum('hqk,khd->qhd', p.astype(jnp.bfloat16), v,
                     preferred_element_type=jnp.float32)   # (S, nh, dh)
    # Head merge as a single reshape -> full-H-wide output projection.
    attn = jnp.dot(ctx.reshape(S, H).astype(jnp.bfloat16), wo_ref[...],
                   preferred_element_type=jnp.float32) + bo_ref[...]
    x = _layernorm(attn + x, ln1g_ref[...], ln1b_ref[...])

    # --- feed-forward --------------------------------------------------------
    h1 = jnp.dot(x.astype(jnp.bfloat16), w1_ref[...],
                 preferred_element_type=jnp.float32) + b1_ref[...]
    h1 = _gelu_tanh(h1)
    h2 = jnp.dot(h1.astype(jnp.bfloat16), w2_ref[...],
                 preferred_element_type=jnp.float32) + b2_ref[...]
    x = _layernorm(h2 + x, ln2g_ref[...], ln2b_ref[...])

    x_vmem[...] = x

    # --- pooler + classifier head on the CLS row (fused, last layer only) ---
    @pl.when(layer == pl.num_programs(1) - 1)
    def _():
        cls = x[0:1, :]                                    # (1, H)
        pooled = jnp.tanh(
            jnp.dot(cls.astype(jnp.bfloat16), pool_w_ref[...],
                    preferred_element_type=jnp.float32) + pool_b_ref[...])
        # dropout -> identity (eval mode)
        h = jnp.dot(pooled.astype(jnp.bfloat16), cw1_ref[...],
                    preferred_element_type=jnp.float32) + cb1_ref[...]
        h = jnp.maximum(h, 0.0)
        out_ref[...] = jnp.dot(h.astype(jnp.bfloat16), cw2_ref[...],
                               preferred_element_type=jnp.float32) + cb2_ref[...]


def encoder_and_head_forward(x_emb, amask, enc, head, *, num_heads):
    B, S, H = x_emb.shape
    L = enc["wqkv"].shape[0]
    inter = enc["w1"].shape[-1]
    c_pad = head["cls_w2"].shape[-1]
    dh = H // num_heads

    per_b = lambda shape: pl.BlockSpec(
        shape, lambda b, l: (b,) + (0,) * (len(shape) - 1))
    per_l = lambda shape: pl.BlockSpec(
        shape, lambda b, l: (l,) + (0,) * (len(shape) - 1))
    const = lambda shape: pl.BlockSpec(shape, lambda b, l: (0,) * len(shape))

    kernel = functools.partial(_model_kernel, num_heads=num_heads, head_dim=dh)

    out = pl.pallas_call(
        kernel,
        out_shape=jax.ShapeDtypeStruct((B, 1, c_pad), jnp.float32),
        grid=(B, L),
        in_specs=[
            per_b((None, S, H)),                              # summed embeddings
            per_b((None, 1, S)),                              # additive key mask
            const(enc["emb_ln_g"].shape), const(enc["emb_ln_b"].shape),
            per_l((None, H, 3 * H)), per_l((None, 1, 3 * H)), # wqkv, bqkv
            per_l((None, H, H)),     per_l((None, 1, H)),     # wo, bo
            per_l((None, 1, H)),     per_l((None, 1, H)),     # ln1 g/b
            per_l((None, H, inter)), per_l((None, 1, inter)), # w1, b1
            per_l((None, inter, H)), per_l((None, 1, H)),     # w2, b2
            per_l((None, 1, H)),     per_l((None, 1, H)),     # ln2 g/b
            const(head["pool_w"].shape), const(head["pool_b"].shape),
            const(head["cls_w1"].shape), const(head["cls_b1"].shape),
            const(head["cls_w2"].shape), const(head["cls_b2"].shape),
        ],
        out_specs=per_b((None, 1, c_pad)),
        scratch_shapes=[pltpu.VMEM((S, H), jnp.float32)],
        compiler_params=pltpu.CompilerParams(
            dimension_semantics=("parallel", "arbitrary"),
            vmem_limit_bytes=_vmem_limit_bytes()),
    )(x_emb, amask, enc["emb_ln_g"], enc["emb_ln_b"],
      enc["wqkv"], enc["bqkv"], enc["wo"], enc["bo"],
      enc["ln1_g"], enc["ln1_b"], enc["w1"], enc["b1"], enc["w2"], enc["b2"],
      enc["ln2_g"], enc["ln2_b"],
      head["pool_w"], head["pool_b"], head["cls_w1"], head["cls_b1"],
      head["cls_w2"], head["cls_b2"])
    return out[:, 0, :]                                      # (B, C_pad)


# ----------------------------------------------------------------------------
# Parameter init (deterministic, synthetic) and kernel-layout preparation
# ----------------------------------------------------------------------------

def init_params(key, *, vocab=64, max_pos=32, hidden=32, num_heads=2,
                intermediate=64, num_layers=2, num_classes=7):
    def nrm(k, shape):
        return (0.02 * jax.random.normal(k, shape)).astype(jnp.float32)

    keys = jax.random.split(key, 8 + 12 * num_layers)
    it = iter(keys)
    p = {
        "num_heads": num_heads,
        "word_emb": nrm(next(it), (vocab, hidden)),
        "pos_emb": nrm(next(it), (max_pos, hidden)),
        "type_emb": nrm(next(it), (2, hidden)),
        "emb_ln_g": jnp.ones((hidden,), jnp.float32),
        "emb_ln_b": jnp.zeros((hidden,), jnp.float32),
        "pool_w": nrm(next(it), (hidden, hidden)),
        "pool_b": jnp.zeros((hidden,), jnp.float32),
        "cls_w1": nrm(next(it), (hidden, 512)),
        "cls_b1": jnp.zeros((512,), jnp.float32),
        "cls_w2": nrm(next(it), (512, num_classes)),
        "cls_b2": jnp.zeros((num_classes,), jnp.float32),
        "layers": [],
    }
    for _ in range(num_layers):
        p["layers"].append({
            "wqkv": nrm(next(it), (hidden, 3 * hidden)),
            "bqkv": jnp.zeros((3 * hidden,), jnp.float32),
            "wo": nrm(next(it), (hidden, hidden)),
            "bo": jnp.zeros((hidden,), jnp.float32),
            "ln1_g": jnp.ones((hidden,), jnp.float32),
            "ln1_b": jnp.zeros((hidden,), jnp.float32),
            "w1": nrm(next(it), (hidden, intermediate)),
            "b1": jnp.zeros((intermediate,), jnp.float32),
            "w2": nrm(next(it), (intermediate, hidden)),
            "b2": jnp.zeros((hidden,), jnp.float32),
            "ln2_g": jnp.ones((hidden,), jnp.float32),
            "ln2_b": jnp.zeros((hidden,), jnp.float32),
        })
    return p


def prepare_kernel_params(p):
    """Stack per-layer weights, fold 1/sqrt(Dh) into Q, cast matmul weights to
    bf16, pad the classifier output dim to 128 lanes (lane-dense store)."""
    H = p["word_emb"].shape[1]
    nh = p["num_heads"]
    dh = H // nh
    scale = np.float32(1.0 / np.sqrt(dh))

    stack = lambda name: jnp.stack([layer[name] for layer in p["layers"]])

    wqkv = stack("wqkv")                      # (L, H, 3H)
    bqkv = stack("bqkv")                      # (L, 3H)
    wqkv = wqkv.at[:, :, :H].multiply(scale)  # fold attention scale into Q
    bqkv = bqkv.at[:, :H].multiply(scale)

    bf16 = lambda a: a.astype(jnp.bfloat16)
    row = lambda a: a[:, None, :]             # (L, D) -> (L, 1, D)

    enc = {
        "emb_ln_g": p["emb_ln_g"][None, :],
        "emb_ln_b": p["emb_ln_b"][None, :],
        "wqkv": bf16(wqkv), "bqkv": row(bqkv),
        "wo": bf16(stack("wo")), "bo": row(stack("bo")),
        "ln1_g": row(stack("ln1_g")), "ln1_b": row(stack("ln1_b")),
        "w1": bf16(stack("w1")), "b1": row(stack("b1")),
        "w2": bf16(stack("w2")), "b2": row(stack("b2")),
        "ln2_g": row(stack("ln2_g")), "ln2_b": row(stack("ln2_b")),
    }

    num_classes = p["cls_w2"].shape[1]
    c_pad = -(-num_classes // 128) * 128
    w2p = jnp.zeros((p["cls_w2"].shape[0], c_pad), jnp.float32)
    w2p = w2p.at[:, :num_classes].set(p["cls_w2"])
    b2p = jnp.zeros((c_pad,), jnp.float32).at[:num_classes].set(p["cls_b2"])

    head = {
        "num_classes": num_classes,
        "pool_w": bf16(p["pool_w"]), "pool_b": p["pool_b"][None, :],
        "cls_w1": bf16(p["cls_w1"]), "cls_b1": p["cls_b1"][None, :],
        "cls_w2": bf16(w2p), "cls_b2": b2p[None, :],
    }
    return enc, head


# ----------------------------------------------------------------------------
# Forward pass
# ----------------------------------------------------------------------------

def visobert_emotion_classifier(params, input_ids, attention_mask):
    B, S = input_ids.shape
    H = params["word_emb"].shape[1]
    enc, head = prepare_kernel_params(params)

    # XLM-R style position ids: padding_idx + cumsum(mask)*mask.
    padding_idx = 1
    m = attention_mask.astype(jnp.int32)
    pos_ids = jnp.cumsum(m, axis=1) * m + padding_idx

    # Embedding gathers stay in XLA (data-dependent gather); their LayerNorm
    # runs inside the fused kernel at layer 0.
    x = (params["word_emb"][input_ids]
         + params["pos_emb"][pos_ids]
         + params["type_emb"][0][None, None, :]).astype(jnp.float32)  # (B,S,H)

    amask = ((1.0 - attention_mask.astype(jnp.float32))
             * jnp.float32(-1e9))[:, None, :]                          # (B,1,S)

    logits_padded = encoder_and_head_forward(
        x, amask, enc, head, num_heads=params["num_heads"])            # (B,128)
    return logits_padded[:, :head["num_classes"]]                      # (B, 7)


# ----------------------------------------------------------------------------
# Main
# ----------------------------------------------------------------------------

if __name__ == "__main__":
    key = jax.random.PRNGKey(0)
    pkey, ikey = jax.random.split(key)

    B, S = 2, 8
    VOCAB, HIDDEN, HEADS, INTER, LAYERS, NUM_CLASSES = 64, 32, 2, 64, 2, 7

    params = init_params(pkey, vocab=VOCAB, hidden=HIDDEN, num_heads=HEADS,
                         intermediate=INTER, num_layers=LAYERS,
                         num_classes=NUM_CLASSES)

    input_ids = jax.random.randint(ikey, (B, S), 0, VOCAB, dtype=jnp.int32)
    attention_mask = jnp.array(
        [[1, 1, 1, 1, 1, 1, 1, 1],
         [1, 1, 1, 1, 1, 1, 0, 0]], dtype=jnp.int32)

    logits = visobert_emotion_classifier(params, input_ids, attention_mask)
    logits = jax.block_until_ready(logits)

    assert logits.shape == (B, NUM_CLASSES), logits.shape
    assert bool(jnp.all(jnp.isfinite(logits)))
    print("KERNEL_OK")
</pallas_src>

<mosaic_0001>
module attributes {stable_mosaic.version = 11 : i64} {
  func.func @_model_kernel(%arg0: i32, %arg1: i32, %arg2: memref<1x8x32xf32, #tpu.memory_space<vmem>>, %arg3: memref<1x1x8xf32, #tpu.memory_space<vmem>>, %arg4: memref<1x32xf32, #tpu.memory_space<vmem>>, %arg5: memref<1x32xf32, #tpu.memory_space<vmem>>, %arg6: memref<1x32x96xbf16, #tpu.memory_space<vmem>>, %arg7: memref<1x1x96xf32, #tpu.memory_space<vmem>>, %arg8: memref<1x32x32xbf16, #tpu.memory_space<vmem>>, %arg9: memref<1x1x32xf32, #tpu.memory_space<vmem>>, %arg10: memref<1x1x32xf32, #tpu.memory_space<vmem>>, %arg11: memref<1x1x32xf32, #tpu.memory_space<vmem>>, %arg12: memref<1x32x64xbf16, #tpu.memory_space<vmem>>, %arg13: memref<1x1x64xf32, #tpu.memory_space<vmem>>, %arg14: memref<1x64x32xbf16, #tpu.memory_space<vmem>>, %arg15: memref<1x1x32xf32, #tpu.memory_space<vmem>>, %arg16: memref<1x1x32xf32, #tpu.memory_space<vmem>>, %arg17: memref<1x1x32xf32, #tpu.memory_space<vmem>>, %arg18: memref<32x32xbf16, #tpu.memory_space<vmem>>, %arg19: memref<1x32xf32, #tpu.memory_space<vmem>>, %arg20: memref<32x512xbf16, #tpu.memory_space<vmem>>, %arg21: memref<1x512xf32, #tpu.memory_space<vmem>>, %arg22: memref<512x128xbf16, #tpu.memory_space<vmem>>, %arg23: memref<1x128xf32, #tpu.memory_space<vmem>>, %arg24: memref<1x1x128xf32, #tpu.memory_space<vmem>>, %arg25: memref<8x32xf32, #tpu.memory_space<vmem>>) attributes {dimension_semantics = [#tpu.dimension_semantics<parallel>, #tpu.dimension_semantics<arbitrary>], iteration_bounds = array<i64: 2, 2>, scalar_prefetch = 0 : i64, scratch_operands = 1 : i64, tpu.core_type = #tpu.core_type<tc>, window_params = [{transform_indices = @transform_0, window_bounds = array<i64: 1, 8, 32>}, {transform_indices = @transform_1, window_bounds = array<i64: 1, 1, 8>}, {pipeline_mode = #tpu.pipeline_mode<synchronous>, transform_indices = @transform_2, window_bounds = array<i64: 1, 32>}, {pipeline_mode = #tpu.pipeline_mode<synchronous>, transform_indices = @transform_3, window_bounds = array<i64: 1, 32>}, {transform_indices = @transform_4, window_bounds = array<i64: 1, 32, 96>}, {transform_indices = @transform_5, window_bounds = array<i64: 1, 1, 96>}, {transform_indices = @transform_6, window_bounds = array<i64: 1, 32, 32>}, {transform_indices = @transform_7, window_bounds = array<i64: 1, 1, 32>}, {transform_indices = @transform_8, window_bounds = array<i64: 1, 1, 32>}, {transform_indices = @transform_9, window_bounds = array<i64: 1, 1, 32>}, {transform_indices = @transform_10, window_bounds = array<i64: 1, 32, 64>}, {transform_indices = @transform_11, window_bounds = array<i64: 1, 1, 64>}, {transform_indices = @transform_12, window_bounds = array<i64: 1, 64, 32>}, {transform_indices = @transform_13, window_bounds = array<i64: 1, 1, 32>}, {transform_indices = @transform_14, window_bounds = array<i64: 1, 1, 32>}, {transform_indices = @transform_15, window_bounds = array<i64: 1, 1, 32>}, {pipeline_mode = #tpu.pipeline_mode<synchronous>, transform_indices = @transform_16, window_bounds = array<i64: 32, 32>}, {pipeline_mode = #tpu.pipeline_mode<synchronous>, transform_indices = @transform_17, window_bounds = array<i64: 1, 32>}, {pipeline_mode = #tpu.pipeline_mode<synchronous>, transform_indices = @transform_18, window_bounds = array<i64: 32, 512>}, {pipeline_mode = #tpu.pipeline_mode<synchronous>, transform_indices = @transform_19, window_bounds = array<i64: 1, 512>}, {pipeline_mode = #tpu.pipeline_mode<synchronous>, transform_indices = @transform_20, window_bounds = array<i64: 512, 128>}, {pipeline_mode = #tpu.pipeline_mode<synchronous>, transform_indices = @transform_21, window_bounds = array<i64: 1, 128>}, {transform_indices = @transform_22, window_bounds = array<i64: 1, 1, 128>}]} {
    %c0_i32 = arith.constant 0 : i32
    %0 = arith.cmpi eq, %arg1, %c0_i32 : i32
    %1 = arith.extui %0 : i1 to i32
    %c0_i32_0 = arith.constant 0 : i32
    %2 = arith.cmpi ne, %1, %c0_i32_0 : i32
    scf.if %2 {
      %c0_65 = arith.constant 0 : index
      %c0_66 = arith.constant 0 : index
      %c0_67 = arith.constant 0 : index
      %132 = vector.load %arg2[%c0_65, %c0_66, %c0_67] : memref<1x8x32xf32, #tpu.memory_space<vmem>>, vector<1x8x32xf32>
      %133 = vector.shape_cast %132 : vector<1x8x32xf32> to vector<8x32xf32>
      %c0_68 = arith.constant 0 : index
      %c0_69 = arith.constant 0 : index
      %134 = vector.load %arg4[%c0_68, %c0_69] : memref<1x32xf32, #tpu.memory_space<vmem>>, vector<1x32xf32>
      %c0_70 = arith.constant 0 : index
      %c0_71 = arith.constant 0 : index
      %135 = vector.load %arg5[%c0_70, %c0_71] : memref<1x32xf32, #tpu.memory_space<vmem>>, vector<1x32xf32>
      %cst_72 = arith.constant dense<0.000000e+00> : vector<8xf32>
      %136 = vector.multi_reduction <add>, %133, %cst_72 [1] : vector<8x32xf32> to vector<8xf32>
      %137 = vector.shape_cast %136 : vector<8xf32> to vector<8x1xf32>
      %cst_73 = arith.constant 3.200000e+01 : f32
      %138 = vector.broadcast %cst_73 : f32 to vector<8x1xf32>
      %139 = arith.divf %137, %138 : vector<8x1xf32>
      %140 = vector.broadcast %139 : vector<8x1xf32> to vector<8x32xf32>
      %141 = arith.subf %133, %140 : vector<8x32xf32>
      %142 = arith.mulf %141, %141 : vector<8x32xf32>
      %cst_74 = arith.constant dense<0.000000e+00> : vector<8xf32>
      %143 = vector.multi_reduction <add>, %142, %cst_74 [1] : vector<8x32xf32> to vector<8xf32>
      %144 = vector.shape_cast %143 : vector<8xf32> to vector<8x1xf32>
      %cst_75 = arith.constant 3.200000e+01 : f32
      %145 = vector.broadcast %cst_75 : f32 to vector<8x1xf32>
      %146 = arith.divf %144, %145 : vector<8x1xf32>
      %cst_76 = arith.constant 9.99999996E-13 : f32
      %147 = vector.broadcast %cst_76 : f32 to vector<8x1xf32>
      %148 = arith.addf %146, %147 : vector<8x1xf32>
      %149 = math.rsqrt %148 : vector<8x1xf32>
      %150 = vector.broadcast %149 : vector<8x1xf32> to vector<8x32xf32>
      %151 = arith.mulf %141, %150 : vector<8x32xf32>
      %152 = vector.broadcast %134 : vector<1x32xf32> to vector<8x32xf32>
      %153 = arith.mulf %151, %152 : vector<8x32xf32>
      %154 = vector.broadcast %135 : vector<1x32xf32> to vector<8x32xf32>
      %155 = arith.addf %153, %154 : vector<8x32xf32>
      %c0_77 = arith.constant 0 : index
      %c0_78 = arith.constant 0 : index
      %156 = vector.load %arg25[%c0_77, %c0_78] : memref<8x32xf32, #tpu.memory_space<vmem>>, vector<8x32xf32>
      tpu.vector_store %arg25[%c0_77, %c0_78], %155 {strides = array<i32>} : memref<8x32xf32, #tpu.memory_space<vmem>>, vector<8x32xf32>,
    } else {
    }
    %c0 = arith.constant 0 : index
    %c0_1 = arith.constant 0 : index
    %3 = vector.load %arg25[%c0, %c0_1] : memref<8x32xf32, #tpu.memory_space<vmem>>, vector<8x32xf32>
    %4 = arith.truncf %3 : vector<8x32xf32> to vector<8x32xbf16>
    %c0_2 = arith.constant 0 : index
    %c0_3 = arith.constant 0 : index
    %c0_4 = arith.constant 0 : index
    %5 = vector.load %arg6[%c0_2, %c0_3, %c0_4] : memref<1x32x96xbf16, #tpu.memory_space<vmem>>, vector<1x32x96xbf16>
    %6 = vector.shape_cast %5 : vector<1x32x96xbf16> to vector<32x96xbf16>
    %cst = arith.constant dense<0.000000e+00> : vector<8x96xf32>
    %7 = tpu.matmul %4, %6, %cst {dimension_numbers = #tpu.dot_dimension_numbers<[1], [0], [0], [1], [0, 0, 1, 1], [], []>} : vector<8x32xbf16>, vector<32x96xbf16>, vector<8x96xf32> -> vector<8x96xf32>
    %c0_5 = arith.constant 0 : index
    %c0_6 = arith.constant 0 : index
    %c0_7 = arith.constant 0 : index
    %8 = vector.load %arg7[%c0_5, %c0_6, %c0_7] : memref<1x1x96xf32, #tpu.memory_space<vmem>>, vector<1x1x96xf32>
    %9 = vector.shape_cast %8 : vector<1x1x96xf32> to vector<1x96xf32>
    %10 = vector.broadcast %9 : vector<1x96xf32> to vector<8x96xf32>
    %11 = arith.addf %7, %10 : vector<8x96xf32>
    %12 = vector.extract_strided_slice %11 {offsets = [0, 0], sizes = [8, 32], strides = [1, 1]} : vector<8x96xf32> to vector<8x32xf32>
    %13 = vector.shape_cast %12 : vector<8x32xf32> to vector<8x2x16xf32>
    %14 = arith.truncf %13 : vector<8x2x16xf32> to vector<8x2x16xbf16>
    %15 = vector.extract_strided_slice %11 {offsets = [0, 32], sizes = [8, 32], strides = [1, 1]} : vector<8x96xf32> to vector<8x32xf32>
    %16 = vector.shape_cast %15 : vector<8x32xf32> to vector<8x2x16xf32>
    %17 = arith.truncf %16 : vector<8x2x16xf32> to vector<8x2x16xbf16>
    %18 = vector.extract_strided_slice %11 {offsets = [0, 64], sizes = [8, 32], strides = [1, 1]} : vector<8x96xf32> to vector<8x32xf32>
    %19 = vector.shape_cast %18 : vector<8x32xf32> to vector<8x2x16xf32>
    %20 = arith.truncf %19 : vector<8x2x16xf32> to vector<8x2x16xbf16>
    "tpu.trace_start"() <{level = 10 : i32, message = "qhd,khd->hqk"}> : () -> ()
    %cst_8 = arith.constant dense<0.000000e+00> : vector<2x8x8xf32>
    %21 = tpu.matmul %14, %17, %cst_8 {dimension_numbers = #tpu.dot_dimension_numbers<[2], [2], [0], [0], [0, 1, 0, 0, 1, 0], [1], [1]>} : vector<8x2x16xbf16>, vector<8x2x16xbf16>, vector<2x8x8xf32> -> vector<2x8x8xf32>
    "tpu.trace_stop"() : () -> ()
    %c0_9 = arith.constant 0 : index
    %c0_10 = arith.constant 0 : index
    %c0_11 = arith.constant 0 : index
    %22 = vector.load %arg3[%c0_9, %c0_10, %c0_11] : memref<1x1x8xf32, #tpu.memory_space<vmem>>, vector<1x1x8xf32>
    %23 = vector.shape_cast %22 : vector<1x1x8xf32> to vector<1x8xf32>
    %24 = vector.shape_cast %23 : vector<1x8xf32> to vector<1x1x8xf32>
    %25 = vector.broadcast %24 : vector<1x1x8xf32> to vector<2x8x8xf32>
    %26 = arith.addf %21, %25 : vector<2x8x8xf32>
    %cst_12 = arith.constant dense<0xFF800000> : vector<2x8xf32>
    %27 = vector.multi_reduction <maximumf>, %26, %cst_12 [2] : vector<2x8x8xf32> to vector<2x8xf32>
    %28 = vector.shape_cast %27 : vector<2x8xf32> to vector<2x8x1xf32>
    %29 = vector.broadcast %28 : vector<2x8x1xf32> to vector<2x8x8xf32>
    %30 = arith.subf %26, %29 : vector<2x8x8xf32>
    %31 = math.exp %30 : vector<2x8x8xf32>
    %cst_13 = arith.constant dense<0.000000e+00> : vector<2x8xf32>
    %32 = vector.multi_reduction <add>, %31, %cst_13 [2] : vector<2x8x8xf32> to vector<2x8xf32>
    %33 = vector.shape_cast %32 : vector<2x8xf32> to vector<2x8x1xf32>
    %34 = tpu.reciprocal %33 {approx = true} : vector<2x8x1xf32> -> vector<2x8x1xf32>
    %35 = vector.broadcast %34 : vector<2x8x1xf32> to vector<2x8x8xf32>
    %36 = arith.mulf %31, %35 : vector<2x8x8xf32>
    %37 = arith.truncf %36 : vector<2x8x8xf32> to vector<2x8x8xbf16>
    "tpu.trace_start"() <{level = 10 : i32, message = "hqk,khd->qhd"}> : () -> ()
    %cst_14 = arith.constant dense<0.000000e+00> : vector<2x16x8xf32>
    %38 = tpu.matmul %20, %37, %cst_14 {dimension_numbers = #tpu.dot_dimension_numbers<[0], [2], [2], [1], [0, 1, 0, 2, 1, 1], [1], [0]>} : vector<8x2x16xbf16>, vector<2x8x8xbf16>, vector<2x16x8xf32> -> vector<2x16x8xf32>
    %39 = tpu.transpose %38, [2, 0, 1] : vector<2x16x8xf32> -> vector<8x2x16xf32>
    "tpu.trace_stop"() : () -> ()
    %40 = vector.shape_cast %39 : vector<8x2x16xf32> to vector<8x32xf32>
    %41 = arith.truncf %40 : vector<8x32xf32> to vector<8x32xbf16>
    %c0_15 = arith.constant 0 : index
    %c0_16 = arith.constant 0 : index
    %c0_17 = arith.constant 0 : index
    %42 = vector.load %arg8[%c0_15, %c0_16, %c0_17] : memref<1x32x32xbf16, #tpu.memory_space<vmem>>, vector<1x32x32xbf16>
    %43 = vector.shape_cast %42 : vector<1x32x32xbf16> to vector<32x32xbf16>
    %cst_18 = arith.constant dense<0.000000e+00> : vector<8x32xf32>
    %44 = tpu.matmul %41, %43, %cst_18 {dimension_numbers = #tpu.dot_dimension_numbers<[1], [0], [0], [1], [0, 0, 1, 1], [], []>} : vector<8x32xbf16>, vector<32x32xbf16>, vector<8x32xf32> -> vector<8x32xf32>
    %c0_19 = arith.constant 0 : index
    %c0_20 = arith.constant 0 : index
    %c0_21 = arith.constant 0 : index
    %45 = vector.load %arg9[%c0_19, %c0_20, %c0_21] : memref<1x1x32xf32, #tpu.memory_space<vmem>>, vector<1x1x32xf32>
    %46 = vector.shape_cast %45 : vector<1x1x32xf32> to vector<1x32xf32>
    %47 = vector.broadcast %46 : vector<1x32xf32> to vector<8x32xf32>
    %48 = arith.addf %44, %47 : vector<8x32xf32>
    %49 = arith.addf %48, %3 : vector<8x32xf32>
    %c0_22 = arith.constant 0 : index
    %c0_23 = arith.constant 0 : index
    %c0_24 = arith.constant 0 : index
    %50 = vector.load %arg10[%c0_22, %c0_23, %c0_24] : memref<1x1x32xf32, #tpu.memory_space<vmem>>, vector<1x1x32xf32>
    %51 = vector.shape_cast %50 : vector<1x1x32xf32> to vector<1x32xf32>
    %c0_25 = arith.constant 0 : index
    %c0_26 = arith.constant 0 : index
    %c0_27 = arith.constant 0 : index
    %52 = vector.load %arg11[%c0_25, %c0_26, %c0_27] : memref<1x1x32xf32, #tpu.memory_space<vmem>>, vector<1x1x32xf32>
    %53 = vector.shape_cast %52 : vector<1x1x32xf32> to vector<1x32xf32>
    %cst_28 = arith.constant dense<0.000000e+00> : vector<8xf32>
    %54 = vector.multi_reduction <add>, %49, %cst_28 [1] : vector<8x32xf32> to vector<8xf32>
    %55 = vector.shape_cast %54 : vector<8xf32> to vector<8x1xf32>
    %cst_29 = arith.constant 3.200000e+01 : f32
    %56 = vector.broadcast %cst_29 : f32 to vector<8x1xf32>
    %57 = arith.divf %55, %56 : vector<8x1xf32>
    %58 = vector.broadcast %57 : vector<8x1xf32> to vector<8x32xf32>
    %59 = arith.subf %49, %58 : vector<8x32xf32>
    %60 = arith.mulf %59, %59 : vector<8x32xf32>
    %cst_30 = arith.constant dense<0.000000e+00> : vector<8xf32>
    %61 = vector.multi_reduction <add>, %60, %cst_30 [1] : vector<8x32xf32> to vector<8xf32>
    %62 = vector.shape_cast %61 : vector<8xf32> to vector<8x1xf32>
    %cst_31 = arith.constant 3.200000e+01 : f32
    %63 = vector.broadcast %cst_31 : f32 to vector<8x1xf32>
    %64 = arith.divf %62, %63 : vector<8x1xf32>
    %cst_32 = arith.constant 9.99999996E-13 : f32
    %65 = vector.broadcast %cst_32 : f32 to vector<8x1xf32>
    %66 = arith.addf %64, %65 : vector<8x1xf32>
    %67 = math.rsqrt %66 : vector<8x1xf32>
    %68 = vector.broadcast %67 : vector<8x1xf32> to vector<8x32xf32>
    %69 = arith.mulf %59, %68 : vector<8x32xf32>
    %70 = vector.broadcast %51 : vector<1x32xf32> to vector<8x32xf32>
    %71 = arith.mulf %69, %70 : vector<8x32xf32>
    %72 = vector.broadcast %53 : vector<1x32xf32> to vector<8x32xf32>
    %73 = arith.addf %71, %72 : vector<8x32xf32>
    %74 = arith.truncf %73 : vector<8x32xf32> to vector<8x32xbf16>
    %c0_33 = arith.constant 0 : index
    %c0_34 = arith.constant 0 : index
    %c0_35 = arith.constant 0 : index
    %75 = vector.load %arg12[%c0_33, %c0_34, %c0_35] : memref<1x32x64xbf16, #tpu.memory_space<vmem>>, vector<1x32x64xbf16>
    %76 = vector.shape_cast %75 : vector<1x32x64xbf16> to vector<32x64xbf16>
    %cst_36 = arith.constant dense<0.000000e+00> : vector<8x64xf32>
    %77 = tpu.matmul %74, %76, %cst_36 {dimension_numbers = #tpu.dot_dimension_numbers<[1], [0], [0], [1], [0, 0, 1, 1], [], []>} : vector<8x32xbf16>, vector<32x64xbf16>, vector<8x64xf32> -> vector<8x64xf32>
    %c0_37 = arith.constant 0 : index
    %c0_38 = arith.constant 0 : index
    %c0_39 = arith.constant 0 : index
    %78 = vector.load %arg13[%c0_37, %c0_38, %c0_39] : memref<1x1x64xf32, #tpu.memory_space<vmem>>, vector<1x1x64xf32>
    %79 = vector.shape_cast %78 : vector<1x1x64xf32> to vector<1x64xf32>
    %80 = vector.broadcast %79 : vector<1x64xf32> to vector<8x64xf32>
    %81 = arith.addf %77, %80 : vector<8x64xf32>
    %cst_40 = arith.constant 5.000000e-01 : f32
    %82 = vector.broadcast %cst_40 : f32 to vector<8x64xf32>
    %83 = arith.mulf %82, %81 : vector<8x64xf32>
    %cst_41 = arith.constant 4.471500e-02 : f32
    %84 = vector.broadcast %cst_41 : f32 to vector<8x64xf32>
    %85 = arith.mulf %84, %81 : vector<8x64xf32>
    %86 = arith.mulf %85, %81 : vector<8x64xf32>
    %87 = arith.mulf %86, %81 : vector<8x64xf32>
    %88 = arith.addf %81, %87 : vector<8x64xf32>
    %cst_42 = arith.constant 0.797884583 : f32
    %89 = vector.broadcast %cst_42 : f32 to vector<8x64xf32>
    %90 = arith.mulf %89, %88 : vector<8x64xf32>
    %91 = math.tanh %90 : vector<8x64xf32>
    %cst_43 = arith.constant 1.000000e+00 : f32
    %92 = vector.broadcast %cst_43 : f32 to vector<8x64xf32>
    %93 = arith.addf %92, %91 : vector<8x64xf32>
    %94 = arith.mulf %83, %93 : vector<8x64xf32>
    %95 = arith.truncf %94 : vector<8x64xf32> to vector<8x64xbf16>
    %c0_44 = arith.constant 0 : index
    %c0_45 = arith.constant 0 : index
    %c0_46 = arith.constant 0 : index
    %96 = vector.load %arg14[%c0_44, %c0_45, %c0_46] : memref<1x64x32xbf16, #tpu.memory_space<vmem>>, vector<1x64x32xbf16>
    %97 = vector.shape_cast %96 : vector<1x64x32xbf16> to vector<64x32xbf16>
    %cst_47 = arith.constant dense<0.000000e+00> : vector<8x32xf32>
    %98 = tpu.matmul %95, %97, %cst_47 {dimension_numbers = #tpu.dot_dimension_numbers<[1], [0], [0], [1], [0, 0, 1, 1], [], []>} : vector<8x64xbf16>, vector<64x32xbf16>, vector<8x32xf32> -> vector<8x32xf32>
    %c0_48 = arith.constant 0 : index
    %c0_49 = arith.constant 0 : index
    %c0_50 = arith.constant 0 : index
    %99 = vector.load %arg15[%c0_48, %c0_49, %c0_50] : memref<1x1x32xf32, #tpu.memory_space<vmem>>, vector<1x1x32xf32>
    %100 = vector.shape_cast %99 : vector<1x1x32xf32> to vector<1x32xf32>
    %101 = vector.broadcast %100 : vector<1x32xf32> to vector<8x32xf32>
    %102 = arith.addf %98, %101 : vector<8x32xf32>
    %103 = arith.addf %102, %73 : vector<8x32xf32>
    %c0_51 = arith.constant 0 : index
    %c0_52 = arith.constant 0 : index
    %c0_53 = arith.constant 0 : index
    %104 = vector.load %arg16[%c0_51, %c0_52, %c0_53] : memref<1x1x32xf32, #tpu.memory_space<vmem>>, vector<1x1x32xf32>
    %105 = vector.shape_cast %104 : vector<1x1x32xf32> to vector<1x32xf32>
    %c0_54 = arith.constant 0 : index
    %c0_55 = arith.constant 0 : index
    %c0_56 = arith.constant 0 : index
    %106 = vector.load %arg17[%c0_54, %c0_55, %c0_56] : memref<1x1x32xf32, #tpu.memory_space<vmem>>, vector<1x1x32xf32>
    %107 = vector.shape_cast %106 : vector<1x1x32xf32> to vector<1x32xf32>
    %cst_57 = arith.constant dense<0.000000e+00> : vector<8xf32>
    %108 = vector.multi_reduction <add>, %103, %cst_57 [1] : vector<8x32xf32> to vector<8xf32>
    %109 = vector.shape_cast %108 : vector<8xf32> to vector<8x1xf32>
    %cst_58 = arith.constant 3.200000e+01 : f32
    %110 = vector.broadcast %cst_58 : f32 to vector<8x1xf32>
    %111 = arith.divf %109, %110 : vector<8x1xf32>
    %112 = vector.broadcast %111 : vector<8x1xf32> to vector<8x32xf32>
    %113 = arith.subf %103, %112 : vector<8x32xf32>
    %114 = arith.mulf %113, %113 : vector<8x32xf32>
    %cst_59 = arith.constant dense<0.000000e+00> : vector<8xf32>
    %115 = vector.multi_reduction <add>, %114, %cst_59 [1] : vector<8x32xf32> to vector<8xf32>
    %116 = vector.shape_cast %115 : vector<8xf32> to vector<8x1xf32>
    %cst_60 = arith.constant 3.200000e+01 : f32
    %117 = vector.broadcast %cst_60 : f32 to vector<8x1xf32>
    %118 = arith.divf %116, %117 : vector<8x1xf32>
    %cst_61 = arith.constant 9.99999996E-13 : f32
    %119 = vector.broadcast %cst_61 : f32 to vector<8x1xf32>
    %120 = arith.addf %118, %119 : vector<8x1xf32>
    %121 = math.rsqrt %120 : vector<8x1xf32>
    %122 = vector.broadcast %121 : vector<8x1xf32> to vector<8x32xf32>
    %123 = arith.mulf %113, %122 : vector<8x32xf32>
    %124 = vector.broadcast %105 : vector<1x32xf32> to vector<8x32xf32>
    %125 = arith.mulf %123, %124 : vector<8x32xf32>
    %126 = vector.broadcast %107 : vector<1x32xf32> to vector<8x32xf32>
    %127 = arith.addf %125, %126 : vector<8x32xf32>
    %c0_62 = arith.constant 0 : index
    %c0_63 = arith.constant 0 : index
    %128 = vector.load %arg25[%c0_62, %c0_63] : memref<8x32xf32, #tpu.memory_space<vmem>>, vector<8x32xf32>
    tpu.vector_store %arg25[%c0_62, %c0_63], %127 {strides = array<i32>} : memref<8x32xf32, #tpu.memory_space<vmem>>, vector<8x32xf32>,
    %c1_i32 = arith.constant 1 : i32
    %129 = arith.cmpi eq, %arg1, %c1_i32 : i32
    %130 = arith.extui %129 : i1 to i32
    %c0_i32_64 = arith.constant 0 : i32
    %131 = arith.cmpi ne, %130, %c0_i32_64 : i32
    scf.if %131 {
      %132 = vector.extract_strided_slice %127 {offsets = [0, 0], sizes = [1, 32], strides = [1, 1]} : vector<8x32xf32> to vector<1x32xf32>
      %133 = arith.truncf %132 : vector<1x32xf32> to vector<1x32xbf16>
      %c0_65 = arith.constant 0 : index
      %c0_66 = arith.constant 0 : index
      %134 = vector.load %arg18[%c0_65, %c0_66] : memref<32x32xbf16, #tpu.memory_space<vmem>>, vector<32x32xbf16>
      %cst_67 = arith.constant dense<0.000000e+00> : vector<1x32xf32>
      %135 = tpu.matmul %133, %134, %cst_67 {dimension_numbers = #tpu.dot_dimension_numbers<[1], [0], [0], [1], [0, 0, 1, 1], [], []>} : vector<1x32xbf16>, vector<32x32xbf16>, vector<1x32xf32> -> vector<1x32xf32>
      %c0_68 = arith.constant 0 : index
      %c0_69 = arith.constant 0 : index
      %136 = vector.load %arg19[%c0_68, %c0_69] : memref<1x32xf32, #tpu.memory_space<vmem>>, vector<1x32xf32>
      %137 = arith.addf %135, %136 : vector<1x32xf32>
      %138 = math.tanh %137 : vector<1x32xf32>
      %139 = arith.truncf %138 : vector<1x32xf32> to vector<1x32xbf16>
      %c0_70 = arith.constant 0 : index
      %c0_71 = arith.constant 0 : index
      %140 = vector.load %arg20[%c0_70, %c0_71] : memref<32x512xbf16, #tpu.memory_space<vmem>>, vector<32x512xbf16>
      %cst_72 = arith.constant dense<0.000000e+00> : vector<1x512xf32>
      %141 = tpu.matmul %139, %140, %cst_72 {dimension_numbers = #tpu.dot_dimension_numbers<[1], [0], [0], [1], [0, 0, 1, 1], [], []>} : vector<1x32xbf16>, vector<32x512xbf16>, vector<1x512xf32> -> vector<1x512xf32>
      %c0_73 = arith.constant 0 : index
      %c0_74 = arith.constant 0 : index
      %142 = vector.load %arg21[%c0_73, %c0_74] : memref<1x512xf32, #tpu.memory_space<vmem>>, vector<1x512xf32>
      %143 = arith.addf %141, %142 : vector<1x512xf32>
      %cst_75 = arith.constant 0.000000e+00 : f32
      %144 = vector.broadcast %cst_75 : f32 to vector<1x512xf32>
      %145 = arith.maximumf %143, %144 : vector<1x512xf32>
      %146 = arith.truncf %145 : vector<1x512xf32> to vector<1x512xbf16>
      %c0_76 = arith.constant 0 : index
      %c0_77 = arith.constant 0 : index
      %147 = vector.load %arg22[%c0_76, %c0_77] : memref<512x128xbf16, #tpu.memory_space<vmem>>, vector<512x128xbf16>
      %cst_78 = arith.constant dense<0.000000e+00> : vector<1x128xf32>
      %148 = tpu.matmul %146, %147, %cst_78 {dimension_numbers = #tpu.dot_dimension_numbers<[1], [0], [0], [1], [0, 0, 1, 1], [], []>} : vector<1x512xbf16>, vector<512x128xbf16>, vector<1x128xf32> -> vector<1x128xf32>
      %c0_79 = arith.constant 0 : index
      %c0_80 = arith.constant 0 : index
      %149 = vector.load %arg23[%c0_79, %c0_80] : memref<1x128xf32, #tpu.memory_space<vmem>>, vector<1x128xf32>
      %150 = arith.addf %148, %149 : vector<1x128xf32>
      %c0_81 = arith.constant 0 : index
      %c0_82 = arith.constant 0 : index
      %c0_83 = arith.constant 0 : index
      %151 = vector.load %arg24[%c0_81, %c0_82, %c0_83] : memref<1x1x128xf32, #tpu.memory_space<vmem>>, vector<1x1x128xf32>
      %152 = vector.shape_cast %151 : vector<1x1x128xf32> to vector<1x128xf32>
      %153 = vector.shape_cast %150 : vector<1x128xf32> to vector<1x1x128xf32>
      tpu.vector_store %arg24[%c0_81, %c0_82, %c0_83], %153 {strides = array<i32>} : memref<1x1x128xf32, #tpu.memory_space<vmem>>, vector<1x1x128xf32>,
    } else {
    }
    return
  }
  func.func @transform_0(%arg0: i32, %arg1: i32) -> (i32, i32, i32) {
    %c0_i32 = arith.constant 0 : i32
    %c0_i32_0 = arith.constant 0 : i32
    %c0_i32_1 = arith.constant 0 : i32
    return %arg0, %c0_i32, %c0_i32_0 : i32, i32, i32
  }
  func.func @transform_1(%arg0: i32, %arg1: i32) -> (i32, i32, i32) {
    %c0_i32 = arith.constant 0 : i32
    %c0_i32_0 = arith.constant 0 : i32
    %c0_i32_1 = arith.constant 0 : i32
    return %arg0, %c0_i32, %c0_i32_0 : i32, i32, i32
  }
  func.func @transform_2(%arg0: i32, %arg1: i32) -> (i32, i32) {
    %c0_i32 = arith.constant 0 : i32
    %c0_i32_0 = arith.constant 0 : i32
    %c0_i32_1 = arith.constant 0 : i32
    return %c0_i32, %c0_i32_0 : i32, i32
  }
  func.func @transform_3(%arg0: i32, %arg1: i32) -> (i32, i32) {
    %c0_i32 = arith.constant 0 : i32
    %c0_i32_0 = arith.constant 0 : i32
    %c0_i32_1 = arith.constant 0 : i32
    return %c0_i32, %c0_i32_0 : i32, i32
  }
  func.func @transform_4(%arg0: i32, %arg1: i32) -> (i32, i32, i32) {
    %c0_i32 = arith.constant 0 : i32
    %c0_i32_0 = arith.constant 0 : i32
    %c0_i32_1 = arith.constant 0 : i32
    return %arg1, %c0_i32, %c0_i32_0 : i32, i32, i32
  }
  func.func @transform_5(%arg0: i32, %arg1: i32) -> (i32, i32, i32) {
    %c0_i32 = arith.constant 0 : i32
    %c0_i32_0 = arith.constant 0 : i32
    %c0_i32_1 = arith.constant 0 : i32
    return %arg1, %c0_i32, %c0_i32_0 : i32, i32, i32
  }
  func.func @transform_6(%arg0: i32, %arg1: i32) -> (i32, i32, i32) {
    %c0_i32 = arith.constant 0 : i32
    %c0_i32_0 = arith.constant 0 : i32
    %c0_i32_1 = arith.constant 0 : i32
    return %arg1, %c0_i32, %c0_i32_0 : i32, i32, i32
  }
  func.func @transform_7(%arg0: i32, %arg1: i32) -> (i32, i32, i32) {
    %c0_i32 = arith.constant 0 : i32
    %c0_i32_0 = arith.constant 0 : i32
    %c0_i32_1 = arith.constant 0 : i32
    return %arg1, %c0_i32, %c0_i32_0 : i32, i32, i32
  }
  func.func @transform_8(%arg0: i32, %arg1: i32) -> (i32, i32, i32) {
    %c0_i32 = arith.constant 0 : i32
    %c0_i32_0 = arith.constant 0 : i32
    %c0_i32_1 = arith.constant 0 : i32
    return %arg1, %c0_i32, %c0_i32_0 : i32, i32, i32
  }
  func.func @transform_9(%arg0: i32, %arg1: i32) -> (i32, i32, i32) {
    %c0_i32 = arith.constant 0 : i32
    %c0_i32_0 = arith.constant 0 : i32
    %c0_i32_1 = arith.constant 0 : i32
    return %arg1, %c0_i32, %c0_i32_0 : i32, i32, i32
  }
  func.func @transform_10(%arg0: i32, %arg1: i32) -> (i32, i32, i32) {
    %c0_i32 = arith.constant 0 : i32
    %c0_i32_0 = arith.constant 0 : i32
    %c0_i32_1 = arith.constant 0 : i32
    return %arg1, %c0_i32, %c0_i32_0 : i32, i32, i32
  }
  func.func @transform_11(%arg0: i32, %arg1: i32) -> (i32, i32, i32) {
    %c0_i32 = arith.constant 0 : i32
    %c0_i32_0 = arith.constant 0 : i32
    %c0_i32_1 = arith.constant 0 : i32
    return %arg1, %c0_i32, %c0_i32_0 : i32, i32, i32
  }
  func.func @transform_12(%arg0: i32, %arg1: i32) -> (i32, i32, i32) {
    %c0_i32 = arith.constant 0 : i32
    %c0_i32_0 = arith.constant 0 : i32
    %c0_i32_1 = arith.constant 0 : i32
    return %arg1, %c0_i32, %c0_i32_0 : i32, i32, i32
  }
  func.func @transform_13(%arg0: i32, %arg1: i32) -> (i32, i32, i32) {
    %c0_i32 = arith.constant 0 : i32
    %c0_i32_0 = arith.constant 0 : i32
    %c0_i32_1 = arith.constant 0 : i32
    return %arg1, %c0_i32, %c0_i32_0 : i32, i32, i32
  }
  func.func @transform_14(%arg0: i32, %arg1: i32) -> (i32, i32, i32) {
    %c0_i32 = arith.constant 0 : i32
    %c0_i32_0 = arith.constant 0 : i32
    %c0_i32_1 = arith.constant 0 : i32
    return %arg1, %c0_i32, %c0_i32_0 : i32, i32, i32
  }
  func.func @transform_15(%arg0: i32, %arg1: i32) -> (i32, i32, i32) {
    %c0_i32 = arith.constant 0 : i32
    %c0_i32_0 = arith.constant 0 : i32
    %c0_i32_1 = arith.constant 0 : i32
    return %arg1, %c0_i32, %c0_i32_0 : i32, i32, i32
  }
  func.func @transform_16(%arg0: i32, %arg1: i32) -> (i32, i32) {
    %c0_i32 = arith.constant 0 : i32
    %c0_i32_0 = arith.constant 0 : i32
    %c0_i32_1 = arith.constant 0 : i32
    return %c0_i32, %c0_i32_0 : i32, i32
  }
  func.func @transform_17(%arg0: i32, %arg1: i32) -> (i32, i32) {
    %c0_i32 = arith.constant 0 : i32
    %c0_i32_0 = arith.constant 0 : i32
    %c0_i32_1 = arith.constant 0 : i32
    return %c0_i32, %c0_i32_0 : i32, i32
  }
  func.func @transform_18(%arg0: i32, %arg1: i32) -> (i32, i32) {
    %c0_i32 = arith.constant 0 : i32
    %c0_i32_0 = arith.constant 0 : i32
    %c0_i32_1 = arith.constant 0 : i32
    return %c0_i32, %c0_i32_0 : i32, i32
  }
  func.func @transform_19(%arg0: i32, %arg1: i32) -> (i32, i32) {
    %c0_i32 = arith.constant 0 : i32
    %c0_i32_0 = arith.constant 0 : i32
    %c0_i32_1 = arith.constant 0 : i32
    return %c0_i32, %c0_i32_0 : i32, i32
  }
  func.func @transform_20(%arg0: i32, %arg1: i32) -> (i32, i32) {
    %c0_i32 = arith.constant 0 : i32
    %c0_i32_0 = arith.constant 0 : i32
    %c0_i32_1 = arith.constant 0 : i32
    return %c0_i32, %c0_i32_0 : i32, i32
  }
  func.func @transform_21(%arg0: i32, %arg1: i32) -> (i32, i32) {
    %c0_i32 = arith.constant 0 : i32
    %c0_i32_0 = arith.constant 0 : i32
    %c0_i32_1 = arith.constant 0 : i32
    return %c0_i32, %c0_i32_0 : i32, i32
  }
  func.func @transform_22(%arg0: i32, %arg1: i32) -> (i32, i32, i32) {
    %c0_i32 = arith.constant 0 : i32
    %c0_i32_0 = arith.constant 0 : i32
    %c0_i32_1 = arith.constant 0 : i32
    return %arg0, %c0_i32, %c0_i32_0 : i32, i32, i32
  }
}

</mosaic_0001>

<llo_original>
// kernel: tpu_custom_call.1
$region0: #{tpu_custom_call.1}
  #allocation0 [shape = 'u32[]', space=smem, size = 0x4, offset = 0x4, fixed_abs, tag = 'smem constant byte address 0x4 - core index']
  #allocation1 [shape = 'u32[144,128]{1,0:T(1,128)}', space=vmem, size = 0x12000, scoped, tag = 'internal scratch']
  #allocation2 [shape = 'f32[8,32]{1,0:T(8,128)}', space=vmem, size = 0x1000, scoped, tag = 'scratch operand']
  %s0 = inlined_call_operand.hbm [shape: f32[2,8,32], index: 0, kind: input, shape index: {}]
  %s1 = inlined_call_operand.hbm [shape: f32[2,1,8], index: 1, kind: input, shape index: {}]
  %s2 = inlined_call_operand.hbm [shape: f32[1,32], index: 2, kind: input, shape index: {}]
  %s3 = inlined_call_operand.hbm [shape: f32[1,32], index: 3, kind: input, shape index: {}]
  %s4 = inlined_call_operand.hbm [shape: bf16[2,32,96], index: 4, kind: input, shape index: {}]
  %s5 = inlined_call_operand.hbm [shape: f32[2,1,96], index: 5, kind: input, shape index: {}]
  %s6 = inlined_call_operand.hbm [shape: bf16[2,32,32], index: 6, kind: input, shape index: {}]
  %s7 = inlined_call_operand.hbm [shape: f32[2,1,32], index: 7, kind: input, shape index: {}]
  %s8 = inlined_call_operand.hbm [shape: f32[2,1,32], index: 8, kind: input, shape index: {}]
  %s9 = inlined_call_operand.hbm [shape: f32[2,1,32], index: 9, kind: input, shape index: {}]
  %s10 = inlined_call_operand.hbm [shape: bf16[2,32,64], index: 10, kind: input, shape index: {}]
  %s11 = inlined_call_operand.hbm [shape: f32[2,1,64], index: 11, kind: input, shape index: {}]
  %s12 = inlined_call_operand.hbm [shape: bf16[2,64,32], index: 12, kind: input, shape index: {}]
  %s13 = inlined_call_operand.hbm [shape: f32[2,1,32], index: 13, kind: input, shape index: {}]
  %s14 = inlined_call_operand.hbm [shape: f32[2,1,32], index: 14, kind: input, shape index: {}]
  %s15 = inlined_call_operand.hbm [shape: f32[2,1,32], index: 15, kind: input, shape index: {}]
  %s16 = inlined_call_operand.hbm [shape: bf16[32,32], index: 16, kind: input, shape index: {}]
  %s17 = inlined_call_operand.hbm [shape: f32[1,32], index: 17, kind: input, shape index: {}]
  %s18 = inlined_call_operand.hbm [shape: bf16[32,512], index: 18, kind: input, shape index: {}]
  %s19 = inlined_call_operand.hbm [shape: f32[1,512], index: 19, kind: input, shape index: {}]
  %s20 = inlined_call_operand.hbm [shape: bf16[512,128], index: 20, kind: input, shape index: {}]
  %s21 = inlined_call_operand.hbm [shape: f32[1,128], index: 21, kind: input, shape index: {}]
  %s22 = inlined_call_operand.hbm [shape: f32[2,1,128], index: 22, kind: output, shape index: {}]
  %s23 = sld [smem:[#allocation0]]
  $region217: #{tpu_custom_call.1} parent=0
    _
  %s25 = ssub.s32 1, %s23
  %s26 = scalar_select 0, %s25, %s23
  $region1: #{tpu_custom_call.1} parent=0
    #allocation3 [shape = 'u8[8192]{0}', space=vmem, size = 0x2000, scoped, tag = 'input window, operand 0']
    #allocation4 [shape = 's32[2]{0}', space=sflag, size = 0x8, scoped, tag = 'scoped memory for tpu_custom_call.1']
    #allocation5 [shape = 's32[2]{0}', space=sflag, size = 0x8, scoped, tag = 'scoped memory for tpu_custom_call.1']
    #allocation6 [shape = 'u8[1024]{0}', space=vmem, size = 0x400, scoped, tag = 'input window, operand 1']
    #allocation7 [shape = 's32[2]{0}', space=sflag, size = 0x8, scoped, tag = 'scoped memory for tpu_custom_call.1']
    #allocation8 [shape = 'u8[512]{0}', space=vmem, size = 0x400, scoped, tag = 'input window, operand 2, single buffered']
    #allocation9 [shape = 'u8[512]{0}', space=vmem, size = 0x400, scoped, tag = 'input window, operand 3, single buffered']
    #allocation10 [shape = 's32[1]{0}', space=sflag, size = 0x4, scoped, tag = 'scoped memory for tpu_custom_call.1']
    #allocation11 [shape = 'u8[16384]{0}', space=vmem, size = 0x4000, scoped, tag = 'input window, operand 4']
    #allocation12 [shape = 'u8[1024]{0}', space=vmem, size = 0x400, scoped, tag = 'input window, operand 5']
    #allocation13 [shape = 'u8[16384]{0}', space=vmem, size = 0x4000, scoped, tag = 'input window, operand 6']
    #allocation14 [shape = 'u8[1024]{0}', space=vmem, size = 0x400, scoped, tag = 'input window, operand 7']
    #allocation15 [shape = 'u8[1024]{0}', space=vmem, size = 0x400, scoped, tag = 'input window, operand 8']
    #allocation16 [shape = 'u8[1024]{0}', space=vmem, size = 0x400, scoped, tag = 'input window, operand 9']
    #allocation17 [shape = 'u8[16384]{0}', space=vmem, size = 0x4000, scoped, tag = 'input window, operand 10']
    #allocation18 [shape = 'u8[1024]{0}', space=vmem, size = 0x400, scoped, tag = 'input window, operand 11']
    #allocation19 [shape = 'u8[32768]{0}', space=vmem, size = 0x8000, scoped, tag = 'input window, operand 12']
    #allocation20 [shape = 'u8[1024]{0}', space=vmem, size = 0x400, scoped, tag = 'input window, operand 13']
    #allocation21 [shape = 'u8[1024]{0}', space=vmem, size = 0x400, scoped, tag = 'input window, operand 14']
    #allocation22 [shape = 'u8[1024]{0}', space=vmem, size = 0x400, scoped, tag = 'input window, operand 15']
    #allocation23 [shape = 'u8[8192]{0}', space=vmem, size = 0x2000, scoped, tag = 'input window, operand 16, single buffered']
    #allocation24 [shape = 'u8[512]{0}', space=vmem, size = 0x400, scoped, tag = 'input window, operand 17, single buffered']
    #allocation25 [shape = 's32[1]{0}', space=sflag, size = 0x4, scoped, tag = 'scoped memory for tpu_custom_call.1']
    #allocation26 [shape = 'u8[32768]{0}', space=vmem, size = 0x8000, scoped, tag = 'input window, operand 18, single buffered']
    #allocation27 [shape = 'u8[2048]{0}', space=vmem, size = 0x800, scoped, tag = 'input window, operand 19, single buffered']
    #allocation28 [shape = 's32[1]{0}', space=sflag, size = 0x4, scoped, tag = 'scoped memory for tpu_custom_call.1']
    #allocation29 [shape = 'u8[131072]{0}', space=vmem, size = 0x20000, scoped, tag = 'input window, operand 20, single buffered']
    #allocation30 [shape = 'u8[512]{0}', space=vmem, size = 0x400, scoped, tag = 'input window, operand 21, single buffered']
    #allocation31 [shape = 's32[1]{0}', space=sflag, size = 0x4, scoped, tag = 'scoped memory for tpu_custom_call.1']
    #allocation32 [shape = 'u8[1024]{0}', space=vmem, size = 0x400, scoped, tag = 'output window, operand 0']
    %27 = vsyncpa [#allocation4], 0
    %s28 = scalar_lea.sflag [#allocation4], 1
    %29 = vsyncpa %s28, 0
    %30 = vsyncpa [#allocation7], 0
    %s31 = scalar_lea.sflag [#allocation7], 1
    %32 = vsyncpa %s31, 0
    %33 = vsyncpa [#allocation10], 0
    %34 = vsyncpa [#allocation25], 0
    %35 = vsyncpa [#allocation28], 0
    %36 = vsyncpa [#allocation31], 0
    %37 = vsyncpa [#allocation5], 0
    %s38 = scalar_lea.sflag [#allocation5], 1
    %39 = vsyncpa %s38, 0
    loop: start=0, step=1, limit=6
    $region2: #{tpu_custom_call.1} parent=1 // loop_pre_header
      _
    $region3: #{tpu_custom_call.1} parent=1 // loop_header
      %s41 = sphi 0, %s45
      %p42 = scmp.ge.s32.totalorder %s41, 6
      %s48 = sphi 0, %s60
      %s49 = sphi 0, %s56
      %s50 = sphi 0, %s48
      %s51 = sphi 0, %s49
      %s52 = sphi 0, %s50
      %s53 = sphi 0, %s51
      %s63 = sphi 0, %s65
      %s66 = sphi 0, %s63
      %s67 = sphi 0, %s66
      %s83 = sphi 0, %s67
      %s89 = sphi 0, %s91
      %s92 = sphi 0, %s89
      %s93 = sphi 0, %s92
      %s109 = sphi 0, %s93
      %s113 = sphi 0, %s113
      %s115 = sphi 0, %s113
      %s116 = sphi 0, %s115
      %s130 = sphi 0, %s116
      %s134 = sphi 0, %s134
      %s136 = sphi 0, %s134
      %s137 = sphi 0, %s136
      %s151 = sphi 0, %s137
      %s157 = sphi 0, %s159
      %s160 = sphi 0, %s157
      %s161 = sphi 0, %s160
      %s177 = sphi 0, %s161
      %s183 = sphi 0, %s185
      %s186 = sphi 0, %s183
      %s187 = sphi 0, %s186
      %s203 = sphi 0, %s187
      %s209 = sphi 0, %s211
      %s212 = sphi 0, %s209
      %s213 = sphi 0, %s212
      %s229 = sphi 0, %s213
      %s235 = sphi 0, %s237
      %s238 = sphi 0, %s235
      %s239 = sphi 0, %s238
      %s255 = sphi 0, %s239
      %s261 = sphi 0, %s263
      %s264 = sphi 0, %s261
      %s265 = sphi 0, %s264
      %s281 = sphi 0, %s265
      %s287 = sphi 0, %s289
      %s290 = sphi 0, %s287
      %s291 = sphi 0, %s290
      %s307 = sphi 0, %s291
      %s313 = sphi 0, %s315
      %s316 = sphi 0, %s313
      %s317 = sphi 0, %s316
      %s333 = sphi 0, %s317
      %s339 = sphi 0, %s341
      %s342 = sphi 0, %s339
      %s343 = sphi 0, %s342
      %s359 = sphi 0, %s343
      %s365 = sphi 0, %s367
      %s368 = sphi 0, %s365
      %s369 = sphi 0, %s368
      %s385 = sphi 0, %s369
      %s391 = sphi 0, %s393
      %s394 = sphi 0, %s391
      %s395 = sphi 0, %s394
      %s411 = sphi 0, %s395
      %s417 = sphi 0, %s419
      %s420 = sphi 0, %s417
      %s421 = sphi 0, %s420
      %s437 = sphi 0, %s421
      %s443 = sphi 0, %s445
      %s446 = sphi 0, %s443
      %s447 = sphi 0, %s446
      %s463 = sphi 0, %s447
      %s467 = sphi 0, %s467
      %s469 = sphi 0, %s467
      %s470 = sphi 0, %s469
      %s484 = sphi 0, %s470
      %s488 = sphi 0, %s488
      %s490 = sphi 0, %s488
      %s491 = sphi 0, %s490
      %s505 = sphi 0, %s491
      %s509 = sphi 0, %s509
      %s511 = sphi 0, %s509
      %s512 = sphi 0, %s511
      %s526 = sphi 0, %s512
      %s530 = sphi 0, %s530
      %s532 = sphi 0, %s530
      %s533 = sphi 0, %s532
      %s547 = sphi 0, %s533
      %s551 = sphi 0, %s551
      %s553 = sphi 0, %s551
      %s554 = sphi 0, %s553
      %s568 = sphi 0, %s554
      %s572 = sphi 0, %s572
      %s574 = sphi 0, %s572
      %s575 = sphi 0, %s574
      %s589 = sphi 0, %s575
      %s595 = sphi 0, %s597
      %s598 = sphi 0, %s595
      %s599 = sphi 0, %s598
      %s615 = sphi 0, %s599
    $region4: #{tpu_custom_call.1} parent=1 // loop_header_branch
      %44 = sbr.rel (%p42) target = $region8
    $region5: #{tpu_custom_call.1} parent=1 // loop_body
      %s46 = ssub.s32 %s41, 1
      %s47 = ssub.s32 %s41, 2
      %s54 = sadd.s32 1, %s49
      %p55 = scmp.ge.s32.totalorder %s54, 2
      %s56 = scalar_select %p55, 0, %s54
      %s57 = sadd.s32 1, %s48
      %s58 = scalar_select %p55, %s57, %s48
      %p59 = scmp.ge.s32.totalorder %s58, 2
      %s60 = scalar_select %p59, 0, %s58
      %s61 = ssub.s32 %s48, %s60
      %p62 = scmp.eq.s32.totalorder %s61, 0
      %s64 = sadd.s32 %s63, 1
      %s65 = scalar_select %p62, %s63, %s64
      %p68 = pneg %p62
      %p69 = scmp.eq.s32.totalorder %s41, 3
      %p70 = por %p68, %p69
      %p71 = scmp.ne.s32.totalorder %s63, %s66
      %p72 = scmp.eq.s32.totalorder %s41, 0
      %p73 = por %p71, %p72
      %p74 = scmp.ne.s32.totalorder %s63, %s66
      %p75 = scmp.eq.s32.totalorder %s46, 3
      %p76 = por %p74, %p75
      %p77 = scmp.ne.s32.totalorder %s66, %s67
      %p78 = scmp.eq.s32.totalorder %s46, 0
      %p79 = por %p77, %p78
      %p80 = scmp.ne.s32.totalorder %s66, %s67
      %p81 = scmp.eq.s32.totalorder %s47, 3
      %p82 = por %p80, %p81
      %p84 = scmp.ne.s32.totalorder %s67, %s83
      %p85 = scmp.eq.s32.totalorder %s47, 0
      %p86 = por %p84, %p85
      %s87 = ssub.s32 %s48, %s60
      %p88 = scmp.eq.s32.totalorder %s87, 0
      %s90 = sadd.s32 %s89, 1
      %s91 = scalar_select %p88, %s89, %s90
      %p94 = pneg %p88
      %p95 = scmp.eq.s32.totalorder %s41, 3
      %p96 = por %p94, %p95
      %p97 = scmp.ne.s32.totalorder %s89, %s92
      %p98 = scmp.eq.s32.totalorder %s41, 0
      %p99 = por %p97, %p98
      %p100 = scmp.ne.s32.totalorder %s89, %s92
      %p101 = scmp.eq.s32.totalorder %s46, 3
      %p102 = por %p100, %p101
      %p103 = scmp.ne.s32.totalorder %s92, %s93
      %p104 = scmp.eq.s32.totalorder %s46, 0
      %p105 = por %p103, %p104
      %p106 = scmp.ne.s32.totalorder %s92, %s93
      %p107 = scmp.eq.s32.totalorder %s47, 3
      %p108 = por %p106, %p107
      %p110 = scmp.ne.s32.totalorder %s93, %s109
      %p111 = scmp.eq.s32.totalorder %s47, 0
      %p112 = por %p110, %p111
      %s114 = sadd.s32 %s113, 1
      %p117 = scmp.eq.s32.totalorder %s41, 3
      %p118 = scmp.ne.s32.totalorder %s113, %s115
      %p119 = scmp.eq.s32.totalorder %s41, 0
      %p120 = por %p118, %p119
      %p121 = scmp.ne.s32.totalorder %s113, %s115
      %p122 = scmp.eq.s32.totalorder %s46, 3
      %p123 = por %p121, %p122
      %p124 = scmp.ne.s32.totalorder %s115, %s116
      %p125 = scmp.eq.s32.totalorder %s46, 0
      %p126 = por %p124, %p125
      %p127 = scmp.ne.s32.totalorder %s115, %s116
      %p128 = scmp.eq.s32.totalorder %s47, 3
      %p129 = por %p127, %p128
      %p131 = scmp.ne.s32.totalorder %s116, %s130
      %p132 = scmp.eq.s32.totalorder %s47, 0
      %p133 = por %p131, %p132
      %s135 = sadd.s32 %s134, 1
      %p138 = scmp.eq.s32.totalorder %s41, 3
      %p139 = scmp.ne.s32.totalorder %s134, %s136
      %p140 = scmp.eq.s32.totalorder %s41, 0
      %p141 = por %p139, %p140
      %p142 = scmp.ne.s32.totalorder %s134, %s136
      %p143 = scmp.eq.s32.totalorder %s46, 3
      %p144 = por %p142, %p143
      %p145 = scmp.ne.s32.totalorder %s136, %s137
      %p146 = scmp.eq.s32.totalorder %s46, 0
      %p147 = por %p145, %p146
      %p148 = scmp.ne.s32.totalorder %s136, %s137
      %p149 = scmp.eq.s32.totalorder %s47, 3
      %p150 = por %p148, %p149
      %p152 = scmp.ne.s32.totalorder %s137, %s151
      %p153 = scmp.eq.s32.totalorder %s47, 0
      %p154 = por %p152, %p153
      %s155 = ssub.s32 %s49, %s56
      %p156 = scmp.eq.s32.totalorder %s155, 0
      %s158 = sadd.s32 %s157, 1
      %s159 = scalar_select %p156, %s157, %s158
      %p162 = pneg %p156
      %p163 = scmp.eq.s32.totalorder %s41, 3
      %p164 = por %p162, %p163
      %p165 = scmp.ne.s32.totalorder %s157, %s160
      %p166 = scmp.eq.s32.totalorder %s41, 0
      %p167 = por %p165, %p166
      %p168 = scmp.ne.s32.totalorder %s157, %s160
      %p169 = scmp.eq.s32.totalorder %s46, 3
      %p170 = por %p168, %p169
      %p171 = scmp.ne.s32.totalorder %s160, %s161
      %p172 = scmp.eq.s32.totalorder %s46, 0
      %p173 = por %p171, %p172
      %p174 = scmp.ne.s32.totalorder %s160, %s161
      %p175 = scmp.eq.s32.totalorder %s47, 3
      %p176 = por %p174, %p175
      %p178 = scmp.ne.s32.totalorder %s161, %s177
      %p179 = scmp.eq.s32.totalorder %s47, 0
      %p180 = por %p178, %p179
      %s181 = ssub.s32 %s49, %s56
      %p182 = scmp.eq.s32.totalorder %s181, 0
      %s184 = sadd.s32 %s183, 1
      %s185 = scalar_select %p182, %s183, %s184
      %p188 = pneg %p182
      %p189 = scmp.eq.s32.totalorder %s41, 3
      %p190 = por %p188, %p189
      %p191 = scmp.ne.s32.totalorder %s183, %s186
      %p192 = scmp.eq.s32.totalorder %s41, 0
      %p193 = por %p191, %p192
      %p194 = scmp.ne.s32.totalorder %s183, %s186
      %p195 = scmp.eq.s32.totalorder %s46, 3
      %p196 = por %p194, %p195
      %p197 = scmp.ne.s32.totalorder %s186, %s187
      %p198 = scmp.eq.s32.totalorder %s46, 0
      %p199 = por %p197, %p198
      %p200 = scmp.ne.s32.totalorder %s186, %s187
      %p201 = scmp.eq.s32.totalorder %s47, 3
      %p202 = por %p200, %p201
      %p204 = scmp.ne.s32.totalorder %s187, %s203
      %p205 = scmp.eq.s32.totalorder %s47, 0
      %p206 = por %p204, %p205
      %s207 = ssub.s32 %s49, %s56
      %p208 = scmp.eq.s32.totalorder %s207, 0
      %s210 = sadd.s32 %s209, 1
      %s211 = scalar_select %p208, %s209, %s210
      %p214 = pneg %p208
      %p215 = scmp.eq.s32.totalorder %s41, 3
      %p216 = por %p214, %p215
      %p217 = scmp.ne.s32.totalorder %s209, %s212
      %p218 = scmp.eq.s32.totalorder %s41, 0
      %p219 = por %p217, %p218
      %p220 = scmp.ne.s32.totalorder %s209, %s212
      %p221 = scmp.eq.s32.totalorder %s46, 3
      %p222 = por %p220, %p221
      %p223 = scmp.ne.s32.totalorder %s212, %s213
      %p224 = scmp.eq.s32.totalorder %s46, 0
      %p225 = por %p223, %p224
      %p226 = scmp.ne.s32.totalorder %s212, %s213
      %p227 = scmp.eq.s32.totalorder %s47, 3
      %p228 = por %p226, %p227
      %p230 = scmp.ne.s32.totalorder %s213, %s229
      %p231 = scmp.eq.s32.totalorder %s47, 0
      %p232 = por %p230, %p231
      %s233 = ssub.s32 %s49, %s56
      %p234 = scmp.eq.s32.totalorder %s233, 0
      %s236 = sadd.s32 %s235, 1
      %s237 = scalar_select %p234, %s235, %s236
      %p240 = pneg %p234
      %p241 = scmp.eq.s32.totalorder %s41, 3
      %p242 = por %p240, %p241
      %p243 = scmp.ne.s32.totalorder %s235, %s238
      %p244 = scmp.eq.s32.totalorder %s41, 0
      %p245 = por %p243, %p244
      %p246 = scmp.ne.s32.totalorder %s235, %s238
      %p247 = scmp.eq.s32.totalorder %s46, 3
      %p248 = por %p246, %p247
      %p249 = scmp.ne.s32.totalorder %s238, %s239
      %p250 = scmp.eq.s32.totalorder %s46, 0
      %p251 = por %p249, %p250
      %p252 = scmp.ne.s32.totalorder %s238, %s239
      %p253 = scmp.eq.s32.totalorder %s47, 3
      %p254 = por %p252, %p253
      %p256 = scmp.ne.s32.totalorder %s239, %s255
      %p257 = scmp.eq.s32.totalorder %s47, 0
      %p258 = por %p256, %p257
      %s259 = ssub.s32 %s49, %s56
      %p260 = scmp.eq.s32.totalorder %s259, 0
      %s262 = sadd.s32 %s261, 1
      %s263 = scalar_select %p260, %s261, %s262
      %p266 = pneg %p260
      %p267 = scmp.eq.s32.totalorder %s41, 3
      %p268 = por %p266, %p267
      %p269 = scmp.ne.s32.totalorder %s261, %s264
      %p270 = scmp.eq.s32.totalorder %s41, 0
      %p271 = por %p269, %p270
      %p272 = scmp.ne.s32.totalorder %s261, %s264
      %p273 = scmp.eq.s32.totalorder %s46, 3
      %p274 = por %p272, %p273
      %p275 = scmp.ne.s32.totalorder %s264, %s265
      %p276 = scmp.eq.s32.totalorder %s46, 0
      %p277 = por %p275, %p276
      %p278 = scmp.ne.s32.totalorder %s264, %s265
      %p279 = scmp.eq.s32.totalorder %s47, 3
      %p280 = por %p278, %p279
      %p282 = scmp.ne.s32.totalorder %s265, %s281
      %p283 = scmp.eq.s32.totalorder %s47, 0
      %p284 = por %p282, %p283
      %s285 = ssub.s32 %s49, %s56
      %p286 = scmp.eq.s32.totalorder %s285, 0
      %s288 = sadd.s32 %s287, 1
      %s289 = scalar_select %p286, %s287, %s288
      %p292 = pneg %p286
      %p293 = scmp.eq.s32.totalorder %s41, 3
      %p294 = por %p292, %p293
      %p295 = scmp.ne.s32.totalorder %s287, %s290
      %p296 = scmp.eq.s32.totalorder %s41, 0
      %p297 = por %p295, %p296
      %p298 = scmp.ne.s32.totalorder %s287, %s290
      %p299 = scmp.eq.s32.totalorder %s46, 3
      %p300 = por %p298, %p299
      %p301 = scmp.ne.s32.totalorder %s290, %s291
      %p302 = scmp.eq.s32.totalorder %s46, 0
      %p303 = por %p301, %p302
      %p304 = scmp.ne.s32.totalorder %s290, %s291
      %p305 = scmp.eq.s32.totalorder %s47, 3
      %p306 = por %p304, %p305
      %p308 = scmp.ne.s32.totalorder %s291, %s307
      %p309 = scmp.eq.s32.totalorder %s47, 0
      %p310 = por %p308, %p309
      %s311 = ssub.s32 %s49, %s56
      %p312 = scmp.eq.s32.totalorder %s311, 0
      %s314 = sadd.s32 %s313, 1
      %s315 = scalar_select %p312, %s313, %s314
      %p318 = pneg %p312
      %p319 = scmp.eq.s32.totalorder %s41, 3
      %p320 = por %p318, %p319
      %p321 = scmp.ne.s32.totalorder %s313, %s316
      %p322 = scmp.eq.s32.totalorder %s41, 0
      %p323 = por %p321, %p322
      %p324 = scmp.ne.s32.totalorder %s313, %s316
      %p325 = scmp.eq.s32.totalorder %s46, 3
      %p326 = por %p324, %p325
      %p327 = scmp.ne.s32.totalorder %s316, %s317
      %p328 = scmp.eq.s32.totalorder %s46, 0
      %p329 = por %p327, %p328
      %p330 = scmp.ne.s32.totalorder %s316, %s317
      %p331 = scmp.eq.s32.totalorder %s47, 3
      %p332 = por %p330, %p331
      %p334 = scmp.ne.s32.totalorder %s317, %s333
      %p335 = scmp.eq.s32.totalorder %s47, 0
      %p336 = por %p334, %p335
      %s337 = ssub.s32 %s49, %s56
      %p338 = scmp.eq.s32.totalorder %s337, 0
      %s340 = sadd.s32 %s339, 1
      %s341 = scalar_select %p338, %s339, %s340
      %p344 = pneg %p338
      %p345 = scmp.eq.s32.totalorder %s41, 3
      %p346 = por %p344, %p345
      %p347 = scmp.ne.s32.totalorder %s339, %s342
      %p348 = scmp.eq.s32.totalorder %s41, 0
      %p349 = por %p347, %p348
      %p350 = scmp.ne.s32.totalorder %s339, %s342
      %p351 = scmp.eq.s32.totalorder %s46, 3
      %p352 = por %p350, %p351
      %p353 = scmp.ne.s32.totalorder %s342, %s343
      %p354 = scmp.eq.s32.totalorder %s46, 0
      %p355 = por %p353, %p354
      %p356 = scmp.ne.s32.totalorder %s342, %s343
      %p357 = scmp.eq.s32.totalorder %s47, 3
      %p358 = por %p356, %p357
      %p360 = scmp.ne.s32.totalorder %s343, %s359
      %p361 = scmp.eq.s32.totalorder %s47, 0
      %p362 = por %p360, %p361
      %s363 = ssub.s32 %s49, %s56
      %p364 = scmp.eq.s32.totalorder %s363, 0
      %s366 = sadd.s32 %s365, 1
      %s367 = scalar_select %p364, %s365, %s366
      %p370 = pneg %p364
      %p371 = scmp.eq.s32.totalorder %s41, 3
      %p372 = por %p370, %p371
      %p373 = scmp.ne.s32.totalorder %s365, %s368
      %p374 = scmp.eq.s32.totalorder %s41, 0
      %p375 = por %p373, %p374
      %p376 = scmp.ne.s32.totalorder %s365, %s368
      %p377 = scmp.eq.s32.totalorder %s46, 3
      %p378 = por %p376, %p377
      %p379 = scmp.ne.s32.totalorder %s368, %s369
      %p380 = scmp.eq.s32.totalorder %s46, 0
      %p381 = por %p379, %p380
      %p382 = scmp.ne.s32.totalorder %s368, %s369
      %p383 = scmp.eq.s32.totalorder %s47, 3
      %p384 = por %p382, %p383
      %p386 = scmp.ne.s32.totalorder %s369, %s385
      %p387 = scmp.eq.s32.totalorder %s47, 0
      %p388 = por %p386, %p387
      %s389 = ssub.s32 %s49, %s56
      %p390 = scmp.eq.s32.totalorder %s389, 0
      %s392 = sadd.s32 %s391, 1
      %s393 = scalar_select %p390, %s391, %s392
      %p396 = pneg %p390
      %p397 = scmp.eq.s32.totalorder %s41, 3
      %p398 = por %p396, %p397
      %p399 = scmp.ne.s32.totalorder %s391, %s394
      %p400 = scmp.eq.s32.totalorder %s41, 0
      %p401 = por %p399, %p400
      %p402 = scmp.ne.s32.totalorder %s391, %s394
      %p403 = scmp.eq.s32.totalorder %s46, 3
      %p404 = por %p402, %p403
      %p405 = scmp.ne.s32.totalorder %s394, %s395
      %p406 = scmp.eq.s32.totalorder %s46, 0
      %p407 = por %p405, %p406
      %p408 = scmp.ne.s32.totalorder %s394, %s395
      %p409 = scmp.eq.s32.totalorder %s47, 3
      %p410 = por %p408, %p409
      %p412 = scmp.ne.s32.totalorder %s395, %s411
      %p413 = scmp.eq.s32.totalorder %s47, 0
      %p414 = por %p412, %p413
      %s415 = ssub.s32 %s49, %s56
      %p416 = scmp.eq.s32.totalorder %s415, 0
      %s418 = sadd.s32 %s417, 1
      %s419 = scalar_select %p416, %s417, %s418
      %p422 = pneg %p416
      %p423 = scmp.eq.s32.totalorder %s41, 3
      %p424 = por %p422, %p423
      %p425 = scmp.ne.s32.totalorder %s417, %s420
      %p426 = scmp.eq.s32.totalorder %s41, 0
      %p427 = por %p425, %p426
      %p428 = scmp.ne.s32.totalorder %s417, %s420
      %p429 = scmp.eq.s32.totalorder %s46, 3
      %p430 = por %p428, %p429
      %p431 = scmp.ne.s32.totalorder %s420, %s421
      %p432 = scmp.eq.s32.totalorder %s46, 0
      %p433 = por %p431, %p432
      %p434 = scmp.ne.s32.totalorder %s420, %s421
      %p435 = scmp.eq.s32.totalorder %s47, 3
      %p436 = por %p434, %p435
      %p438 = scmp.ne.s32.totalorder %s421, %s437
      %p439 = scmp.eq.s32.totalorder %s47, 0
      %p440 = por %p438, %p439
      %s441 = ssub.s32 %s49, %s56
      %p442 = scmp.eq.s32.totalorder %s441, 0
      %s444 = sadd.s32 %s443, 1
      %s445 = scalar_select %p442, %s443, %s444
      %p448 = pneg %p442
      %p449 = scmp.eq.s32.totalorder %s41, 3
      %p450 = por %p448, %p449
      %p451 = scmp.ne.s32.totalorder %s443, %s446
      %p452 = scmp.eq.s32.totalorder %s41, 0
      %p453 = por %p451, %p452
      %p454 = scmp.ne.s32.totalorder %s443, %s446
      %p455 = scmp.eq.s32.totalorder %s46, 3
      %p456 = por %p454, %p455
      %p457 = scmp.ne.s32.totalorder %s446, %s447
      %p458 = scmp.eq.s32.totalorder %s46, 0
      %p459 = por %p457, %p458
      %p460 = scmp.ne.s32.totalorder %s446, %s447
      %p461 = scmp.eq.s32.totalorder %s47, 3
      %p462 = por %p460, %p461
      %p464 = scmp.ne.s32.totalorder %s447, %s463
      %p465 = scmp.eq.s32.totalorder %s47, 0
      %p466 = por %p464, %p465
      %s468 = sadd.s32 %s467, 1
      %p471 = scmp.eq.s32.totalorder %s41, 3
      %p472 = scmp.ne.s32.totalorder %s467, %s469
      %p473 = scmp.eq.s32.totalorder %s41, 0
      %p474 = por %p472, %p473
      %p475 = scmp.ne.s32.totalorder %s467, %s469
      %p476 = scmp.eq.s32.totalorder %s46, 3
      %p477 = por %p475, %p476
      %p478 = scmp.ne.s32.totalorder %s469, %s470
      %p479 = scmp.eq.s32.totalorder %s46, 0
      %p480 = por %p478, %p479
      %p481 = scmp.ne.s32.totalorder %s469, %s470
      %p482 = scmp.eq.s32.totalorder %s47, 3
      %p483 = por %p481, %p482
      %p485 = scmp.ne.s32.totalorder %s470, %s484
      %p486 = scmp.eq.s32.totalorder %s47, 0
      %p487 = por %p485, %p486
      %s489 = sadd.s32 %s488, 1
      %p492 = scmp.eq.s32.totalorder %s41, 3
      %p493 = scmp.ne.s32.totalorder %s488, %s490
      %p494 = scmp.eq.s32.totalorder %s41, 0
      %p495 = por %p493, %p494
      %p496 = scmp.ne.s32.totalorder %s488, %s490
      %p497 = scmp.eq.s32.totalorder %s46, 3
      %p498 = por %p496, %p497
      %p499 = scmp.ne.s32.totalorder %s490, %s491
      %p500 = scmp.eq.s32.totalorder %s46, 0
      %p501 = por %p499, %p500
      %p502 = scmp.ne.s32.totalorder %s490, %s491
      %p503 = scmp.eq.s32.totalorder %s47, 3
      %p504 = por %p502, %p503
      %p506 = scmp.ne.s32.totalorder %s491, %s505
      %p507 = scmp.eq.s32.totalorder %s47, 0
      %p508 = por %p506, %p507
      %s510 = sadd.s32 %s509, 1
      %p513 = scmp.eq.s32.totalorder %s41, 3
      %p514 = scmp.ne.s32.totalorder %s509, %s511
      %p515 = scmp.eq.s32.totalorder %s41, 0
      %p516 = por %p514, %p515
      %p517 = scmp.ne.s32.totalorder %s509, %s511
      %p518 = scmp.eq.s32.totalorder %s46, 3
      %p519 = por %p517, %p518
      %p520 = scmp.ne.s32.totalorder %s511, %s512
      %p521 = scmp.eq.s32.totalorder %s46, 0
      %p522 = por %p520, %p521
      %p523 = scmp.ne.s32.totalorder %s511, %s512
      %p524 = scmp.eq.s32.totalorder %s47, 3
      %p525 = por %p523, %p524
      %p527 = scmp.ne.s32.totalorder %s512, %s526
      %p528 = scmp.eq.s32.totalorder %s47, 0
      %p529 = por %p527, %p528
      %s531 = sadd.s32 %s530, 1
      %p534 = scmp.eq.s32.totalorder %s41, 3
      %p535 = scmp.ne.s32.totalorder %s530, %s532
      %p536 = scmp.eq.s32.totalorder %s41, 0
      %p537 = por %p535, %p536
      %p538 = scmp.ne.s32.totalorder %s530, %s532
      %p539 = scmp.eq.s32.totalorder %s46, 3
      %p540 = por %p538, %p539
      %p541 = scmp.ne.s32.totalorder %s532, %s533
      %p542 = scmp.eq.s32.totalorder %s46, 0
      %p543 = por %p541, %p542
      %p544 = scmp.ne.s32.totalorder %s532, %s533
      %p545 = scmp.eq.s32.totalorder %s47, 3
      %p546 = por %p544, %p545
      %p548 = scmp.ne.s32.totalorder %s533, %s547
      %p549 = scmp.eq.s32.totalorder %s47, 0
      %p550 = por %p548, %p549
      %s552 = sadd.s32 %s551, 1
      %p555 = scmp.eq.s32.totalorder %s41, 3
      %p556 = scmp.ne.s32.totalorder %s551, %s553
      %p557 = scmp.eq.s32.totalorder %s41, 0
      %p558 = por %p556, %p557
      %p559 = scmp.ne.s32.totalorder %s551, %s553
      %p560 = scmp.eq.s32.totalorder %s46, 3
      %p561 = por %p559, %p560
      %p562 = scmp.ne.s32.totalorder %s553, %s554
      %p563 = scmp.eq.s32.totalorder %s46, 0
      %p564 = por %p562, %p563
      %p565 = scmp.ne.s32.totalorder %s553, %s554
      %p566 = scmp.eq.s32.totalorder %s47, 3
      %p567 = por %p565, %p566
      %p569 = scmp.ne.s32.totalorder %s554, %s568
      %p570 = scmp.eq.s32.totalorder %s47, 0
      %p571 = por %p569, %p570
      %s573 = sadd.s32 %s572, 1
      %p576 = scmp.eq.s32.totalorder %s41, 3
      %p577 = scmp.ne.s32.totalorder %s572, %s574
      %p578 = scmp.eq.s32.totalorder %s41, 0
      %p579 = por %p577, %p578
      %p580 = scmp.ne.s32.totalorder %s572, %s574
      %p581 = scmp.eq.s32.totalorder %s46, 3
      %p582 = por %p580, %p581
      %p583 = scmp.ne.s32.totalorder %s574, %s575
      %p584 = scmp.eq.s32.totalorder %s46, 0
      %p585 = por %p583, %p584
      %p586 = scmp.ne.s32.totalorder %s574, %s575
      %p587 = scmp.eq.s32.totalorder %s47, 3
      %p588 = por %p586, %p587
      %p590 = scmp.ne.s32.totalorder %s575, %s589
      %p591 = scmp.eq.s32.totalorder %s47, 0
      %p592 = por %p590, %p591
      %s593 = ssub.s32 %s48, %s60
      %p594 = scmp.eq.s32.totalorder %s593, 0
      %s596 = sadd.s32 %s595, 1
      %s597 = scalar_select %p594, %s595, %s596
      %p600 = pneg %p594
      %p601 = scmp.eq.s32.totalorder %s41, 3
      %p602 = por %p600, %p601
      %p603 = scmp.ne.s32.totalorder %s595, %s598
      %p604 = scmp.eq.s32.totalorder %s41, 0
      %p605 = por %p603, %p604
      %p606 = scmp.ne.s32.totalorder %s595, %s598
      %p607 = scmp.eq.s32.totalorder %s46, 3
      %p608 = por %p606, %p607
      %p609 = scmp.ne.s32.totalorder %s598, %s599
      %p610 = scmp.eq.s32.totalorder %s46, 0
      %p611 = por %p609, %p610
      %p612 = scmp.ne.s32.totalorder %s598, %s599
      %p613 = scmp.eq.s32.totalorder %s47, 3
      %p614 = por %p612, %p613
      %p616 = scmp.ne.s32.totalorder %s599, %s615
      %p617 = scmp.eq.s32.totalorder %s47, 0
      %p618 = por %p616, %p617
      %p619 = scmp.le.s32.totalorder 1, %s41
      %p620 = scmp.lt.s32.totalorder %s41, 5
      %p621 = pnand %p619, %p620
      %p622 = pneg %p621
      // Predicated region
      $region9: #{tpu_custom_call.1} parent=5 // pred_check
        _
      $region10: #{tpu_custom_call.1} parent=5 // pred_check_branch
        %624 = sbr.rel (%p621) target = $region12
      $region11: #{tpu_custom_call.1} parent=5 // pred_region
        %s625 = ssub.s32 %s41, 1
        // Predicated region
        $region13: #{tpu_custom_call.1} parent=11 // pred_check
          %p626 = pneg %p126
        $region14: #{tpu_custom_call.1} parent=11 // pred_check_branch
          %628 = sbr.rel (%p626) target = $region16
        $region15: #{tpu_custom_call.1} parent=11 // pred_region
          %s630 = ssub.s32 16, 16
          %631 = vsyncadd [#allocation7], %s630
          %s633 = sshll.u32 [#allocation8], 4
          %s634 = int_to_ptr.vmem [resolvable:$true] %s633
          %636 = dma.hbm_to_vmem [thread:$0]  %s2, 16, %s634, [#allocation7]
        $region16: #{tpu_custom_call.1} parent=11 // pred_fallthru
          _
        // Predicated region
        $region17: #{tpu_custom_call.1} parent=11 // pred_check
          %p637 = pneg %p147
        $region18: #{tpu_custom_call.1} parent=11 // pred_check_branch
          %639 = sbr.rel (%p637) target = $region20
        $region19: #{tpu_custom_call.1} parent=11 // pred_region
          %s641 = ssub.s32 16, 16
          %642 = vsyncadd [#allocation10], %s641
          %s644 = sshll.u32 [#allocation9], 4
          %s645 = int_to_ptr.vmem [resolvable:$true] %s644
          %647 = dma.hbm_to_vmem [thread:$0]  %s3, 16, %s645, [#allocation10]
        $region20: #{tpu_custom_call.1} parent=11 // pred_fallthru
          _
        // Predicated region
        $region21: #{tpu_custom_call.1} parent=11 // pred_check
          %p648 = pneg %p480
        $region22: #{tpu_custom_call.1} parent=11 // pred_check_branch
          %650 = sbr.rel (%p648) target = $region24
        $region23: #{tpu_custom_call.1} parent=11 // pred_region
          %s652 = ssub.s32 256, 256
          %653 = vsyncadd [#allocation10], %s652
          %s654 = sshll.u32 [#allocation23], 4
          %s655 = int_to_ptr.vmem [resolvable:$true] %s654
          %660 = dma.hbm_to_vmem [thread:$0]  %s16, 256, %s655, [#allocation10], 64, 64, 4
        $region24: #{tpu_custom_call.1} parent=11 // pred_fallthru
          _
        // Predicated region
        $region25: #{tpu_custom_call.1} parent=11 // pred_check
          %p661 = pneg %p501
        $region26: #{tpu_custom_call.1} parent=11 // pred_check_branch
          %663 = sbr.rel (%p661) target = $region28
        $region27: #{tpu_custom_call.1} parent=11 // pred_region
          %s665 = ssub.s32 16, 16
          %666 = vsyncadd [#allocation25], %s665
          %s668 = sshll.u32 [#allocation24], 4
          %s669 = int_to_ptr.vmem [resolvable:$true] %s668
          %671 = dma.hbm_to_vmem [thread:$0]  %s17, 16, %s669, [#allocation25]
        $region28: #{tpu_custom_call.1} parent=11 // pred_fallthru
          _
        // Predicated region
        $region29: #{tpu_custom_call.1} parent=11 // pred_check
          %p672 = pneg %p522
        $region30: #{tpu_custom_call.1} parent=11 // pred_check_branch
          %674 = sbr.rel (%p672) target = $region32
        $region31: #{tpu_custom_call.1} parent=11 // pred_region
          %s676 = ssub.s32 1024, 1024
          %677 = vsyncadd [#allocation25], %s676
          %s678 = sshll.u32 [#allocation26], 4
          %s679 = int_to_ptr.vmem [resolvable:$true] %s678
          %684 = dma.hbm_to_vmem [thread:$0]  %s18, 1024, %s679, [#allocation25], 256, 256, 16
        $region32: #{tpu_custom_call.1} parent=11 // pred_fallthru
          _
        // Predicated region
        $region33: #{tpu_custom_call.1} parent=11 // pred_check
          %p685 = pneg %p543
        $region34: #{tpu_custom_call.1} parent=11 // pred_check_branch
          %687 = sbr.rel (%p685) target = $region36
        $region35: #{tpu_custom_call.1} parent=11 // pred_region
          %s689 = ssub.s32 64, 64
          %690 = vsyncadd [#allocation28], %s689
          %s692 = sshll.u32 [#allocation27], 4
          %s693 = int_to_ptr.vmem [resolvable:$true] %s692
          %695 = dma.hbm_to_vmem [thread:$0]  %s19, 64, %s693, [#allocation28]
        $region36: #{tpu_custom_call.1} parent=11 // pred_fallthru
          _
        // Predicated region
        $region37: #{tpu_custom_call.1} parent=11 // pred_check
          %p696 = pneg %p564
        $region38: #{tpu_custom_call.1} parent=11 // pred_check_branch
          %698 = sbr.rel (%p696) target = $region40
        $region39: #{tpu_custom_call.1} parent=11 // pred_region
          %s700 = ssub.s32 4096, 4096
          %701 = vsyncadd [#allocation28], %s700
          %s702 = sshll.u32 [#allocation29], 4
          %s703 = int_to_ptr.vmem [resolvable:$true] %s702
          %708 = dma.hbm_to_vmem [thread:$0]  %s20, 4096, %s703, [#allocation28], 64, 64, 4
        $region40: #{tpu_custom_call.1} parent=11 // pred_fallthru
          _
        // Predicated region
        $region41: #{tpu_custom_call.1} parent=11 // pred_check
          %p709 = pneg %p585
        $region42: #{tpu_custom_call.1} parent=11 // pred_check_branch
          %711 = sbr.rel (%p709) target = $region44
        $region43: #{tpu_custom_call.1} parent=11 // pred_region
          %s713 = ssub.s32 16, 16
          %714 = vsyncadd [#allocation31], %s713
          %s716 = sshll.u32 [#allocation30], 4
          %s717 = int_to_ptr.vmem [resolvable:$true] %s716
          %719 = dma.hbm_to_vmem [thread:$0]  %s21, 16, %s717, [#allocation31]
        $region44: #{tpu_custom_call.1} parent=11 // pred_fallthru
          _
      $region12: #{tpu_custom_call.1} parent=5 // pred_fallthru
        _
      %p720 = scmp.lt.s32.totalorder %s41, 4
      // Predicated region
      $region45: #{tpu_custom_call.1} parent=5 // pred_check
        %p721 = pneg %p720
      $region46: #{tpu_custom_call.1} parent=5 // pred_check_branch
        %723 = sbr.rel (%p721) target = $region48
      $region47: #{tpu_custom_call.1} parent=5 // pred_region
        // Predicated region
        $region49: #{tpu_custom_call.1} parent=47 // pred_check
          %p724 = pneg %p73
        $region50: #{tpu_custom_call.1} parent=47 // pred_check_branch
          %726 = sbr.rel (%p724) target = $region52
        $region51: #{tpu_custom_call.1} parent=47 // pred_region
          %s727 = sand.u32 %s41, 1
          %s728 = scalar_lea.sflag [#allocation4], %s727
          %s729 = sand.u32 %s63, 1
          %s730 = smul.addr %s729, 8
          %s731 = scalar_lea.vmem [#allocation3], %s730
          %s733 = ssub.s32 128, 128
          %734 = vsyncadd %s728, %s733
          %s735 = smul.addr %s48, 128
          %s736 = scalar_lea.hbm %s0, %s735
          %s738 = sshll.u32 %s731, 4
          %s739 = int_to_ptr.vmem [resolvable:$true] %s738
          %741 = dma.hbm_to_vmem [thread:$0]  %s736, 128, %s739, %s728
        $region52: #{tpu_custom_call.1} parent=47 // pred_fallthru
          _
        // Predicated region
        $region53: #{tpu_custom_call.1} parent=47 // pred_check
          %p742 = pneg %p99
        $region54: #{tpu_custom_call.1} parent=47 // pred_check_branch
          %744 = sbr.rel (%p742) target = $region56
        $region55: #{tpu_custom_call.1} parent=47 // pred_region
          %s745 = sand.u32 %s41, 1
          %s746 = scalar_lea.sflag [#allocation7], %s745
          %s747 = sand.u32 %s89, 1
          %s748 = scalar_lea.vmem [#allocation6], %s747
          %s750 = ssub.s32 16, 16
          %751 = vsyncadd %s746, %s750
          %s752 = smul.addr %s48, 16
          %s753 = scalar_lea.hbm %s1, %s752
          %s755 = sshll.u32 %s748, 4
          %s756 = int_to_ptr.vmem [resolvable:$true] %s755
          %758 = dma.hbm_to_vmem [thread:$0]  %s753, 16, %s756, %s746
        $region56: #{tpu_custom_call.1} parent=47 // pred_fallthru
          _
        // Predicated region
        $region57: #{tpu_custom_call.1} parent=47 // pred_check
          %p759 = pneg %p167
        $region58: #{tpu_custom_call.1} parent=47 // pred_check_branch
          %761 = sbr.rel (%p759) target = $region60
        $region59: #{tpu_custom_call.1} parent=47 // pred_region
          %s762 = sand.u32 %s41, 1
          %s763 = scalar_lea.sflag [#allocation4], %s762
          %s764 = sand.u32 %s157, 1
          %s765 = smul.addr %s764, 16
          %s766 = scalar_lea.vmem [#allocation11], %s765
          %s768 = ssub.s32 256, 256
          %769 = vsyncadd %s763, %s768
          %s770 = smul.addr %s49, 4
          %s771 = smul.addr %s770, 64
          %s772 = scalar_lea.hbm %s4, %s771
          %s773 = sshll.u32 %s766, 4
          %s774 = int_to_ptr.vmem [resolvable:$true] %s773
          %779 = dma.hbm_to_vmem [thread:$0]  %s772, 256, %s774, %s763, 64, 64, 4
        $region60: #{tpu_custom_call.1} parent=47 // pred_fallthru
          _
        // Predicated region
        $region61: #{tpu_custom_call.1} parent=47 // pred_check
          %p780 = pneg %p193
        $region62: #{tpu_custom_call.1} parent=47 // pred_check_branch
          %782 = sbr.rel (%p780) target = $region64
        $region63: #{tpu_custom_call.1} parent=47 // pred_region
          %s783 = sand.u32 %s41, 1
          %s784 = scalar_lea.sflag [#allocation7], %s783
          %s785 = sand.u32 %s183, 1
          %s786 = scalar_lea.vmem [#allocation12], %s785
          %s788 = ssub.s32 16, 16
          %789 = vsyncadd %s784, %s788
          %s790 = smul.addr %s49, 16
          %s791 = scalar_lea.hbm %s5, %s790
          %s793 = sshll.u32 %s786, 4
          %s794 = int_to_ptr.vmem [resolvable:$true] %s793
          %796 = dma.hbm_to_vmem [thread:$0]  %s791, 16, %s794, %s784
        $region64: #{tpu_custom_call.1} parent=47 // pred_fallthru
          _
        // Predicated region
        $region65: #{tpu_custom_call.1} parent=47 // pred_check
          %p797 = pneg %p219
        $region66: #{tpu_custom_call.1} parent=47 // pred_check_branch
          %799 = sbr.rel (%p797) target = $region68
        $region67: #{tpu_custom_call.1} parent=47 // pred_region
          %s800 = sand.u32 %s41, 1
          %s801 = scalar_lea.sflag [#allocation4], %s800
          %s802 = sand.u32 %s209, 1
          %s803 = smul.addr %s802, 16
          %s804 = scalar_lea.vmem [#allocation13], %s803
          %s806 = ssub.s32 256, 256
          %807 = vsyncadd %s801, %s806
          %s808 = smul.addr %s49, 4
          %s809 = smul.addr %s808, 64
          %s810 = scalar_lea.hbm %s6, %s809
          %s811 = sshll.u32 %s804, 4
          %s812 = int_to_ptr.vmem [resolvable:$true] %s811
          %817 = dma.hbm_to_vmem [thread:$0]  %s810, 256, %s812, %s801, 64, 64, 4
        $region68: #{tpu_custom_call.1} parent=47 // pred_fallthru
          _
        // Predicated region
        $region69: #{tpu_custom_call.1} parent=47 // pred_check
          %p818 = pneg %p245
        $region70: #{tpu_custom_call.1} parent=47 // pred_check_branch
          %820 = sbr.rel (%p818) target = $region72
        $region71: #{tpu_custom_call.1} parent=47 // pred_region
          %s821 = sand.u32 %s41, 1
          %s822 = scalar_lea.sflag [#allocation7], %s821
          %s823 = sand.u32 %s235, 1
          %s824 = scalar_lea.vmem [#allocation14], %s823
          %s826 = ssub.s32 16, 16
          %827 = vsyncadd %s822, %s826
          %s828 = smul.addr %s49, 16
          %s829 = scalar_lea.hbm %s7, %s828
          %s831 = sshll.u32 %s824, 4
          %s832 = int_to_ptr.vmem [resolvable:$true] %s831
          %834 = dma.hbm_to_vmem [thread:$0]  %s829, 16, %s832, %s822
        $region72: #{tpu_custom_call.1} parent=47 // pred_fallthru
          _
        // Predicated region
        $region73: #{tpu_custom_call.1} parent=47 // pred_check
          %p835 = pneg %p271
        $region74: #{tpu_custom_call.1} parent=47 // pred_check_branch
          %837 = sbr.rel (%p835) target = $region76
        $region75: #{tpu_custom_call.1} parent=47 // pred_region
          %s838 = sand.u32 %s41, 1
          %s839 = scalar_lea.sflag [#allocation4], %s838
          %s840 = sand.u32 %s261, 1
          %s841 = scalar_lea.vmem [#allocation15], %s840
          %s843 = ssub.s32 16, 16
          %844 = vsyncadd %s839, %s843
          %s845 = smul.addr %s49, 16
          %s846 = scalar_lea.hbm %s8, %s845
          %s848 = sshll.u32 %s841, 4
          %s849 = int_to_ptr.vmem [resolvable:$true] %s848
          %851 = dma.hbm_to_vmem [thread:$0]  %s846, 16, %s849, %s839
        $region76: #{tpu_custom_call.1} parent=47 // pred_fallthru
          _
        // Predicated region
        $region77: #{tpu_custom_call.1} parent=47 // pred_check
          %p852 = pneg %p297
        $region78: #{tpu_custom_call.1} parent=47 // pred_check_branch
          %854 = sbr.rel (%p852) target = $region80
        $region79: #{tpu_custom_call.1} parent=47 // pred_region
          %s855 = sand.u32 %s41, 1
          %s856 = scalar_lea.sflag [#allocation7], %s855
          %s857 = sand.u32 %s287, 1
          %s858 = scalar_lea.vmem [#allocation16], %s857
          %s860 = ssub.s32 16, 16
          %861 = vsyncadd %s856, %s860
          %s862 = smul.addr %s49, 16
          %s863 = scalar_lea.hbm %s9, %s862
          %s865 = sshll.u32 %s858, 4
          %s866 = int_to_ptr.vmem [resolvable:$true] %s865
          %868 = dma.hbm_to_vmem [thread:$0]  %s863, 16, %s866, %s856
        $region80: #{tpu_custom_call.1} parent=47 // pred_fallthru
          _
        // Predicated region
        $region81: #{tpu_custom_call.1} parent=47 // pred_check
          %p869 = pneg %p323
        $region82: #{tpu_custom_call.1} parent=47 // pred_check_branch
          %871 = sbr.rel (%p869) target = $region84
        $region83: #{tpu_custom_call.1} parent=47 // pred_region
          %s872 = sand.u32 %s41, 1
          %s873 = scalar_lea.sflag [#allocation4], %s872
          %s874 = sand.u32 %s313, 1
          %s875 = smul.addr %s874, 16
          %s876 = scalar_lea.vmem [#allocation17], %s875
          %s878 = ssub.s32 256, 256
          %879 = vsyncadd %s873, %s878
          %s880 = smul.addr %s49, 4
          %s881 = smul.addr %s880, 64
          %s882 = scalar_lea.hbm %s10, %s881
          %s883 = sshll.u32 %s876, 4
          %s884 = int_to_ptr.vmem [resolvable:$true] %s883
          %889 = dma.hbm_to_vmem [thread:$0]  %s882, 256, %s884, %s873, 64, 64, 4
        $region84: #{tpu_custom_call.1} parent=47 // pred_fallthru
          _
        // Predicated region
        $region85: #{tpu_custom_call.1} parent=47 // pred_check
          %p890 = pneg %p349
        $region86: #{tpu_custom_call.1} parent=47 // pred_check_branch
          %892 = sbr.rel (%p890) target = $region88
        $region87: #{tpu_custom_call.1} parent=47 // pred_region
          %s893 = sand.u32 %s41, 1
          %s894 = scalar_lea.sflag [#allocation7], %s893
          %s895 = sand.u32 %s339, 1
          %s896 = scalar_lea.vmem [#allocation18], %s895
          %s898 = ssub.s32 16, 16
          %899 = vsyncadd %s894, %s898
          %s900 = smul.addr %s49, 16
          %s901 = scalar_lea.hbm %s11, %s900
          %s903 = sshll.u32 %s896, 4
          %s904 = int_to_ptr.vmem [resolvable:$true] %s903
          %906 = dma.hbm_to_vmem [thread:$0]  %s901, 16, %s904, %s894
        $region88: #{tpu_custom_call.1} parent=47 // pred_fallthru
          _
        // Predicated region
        $region89: #{tpu_custom_call.1} parent=47 // pred_check
          %p907 = pneg %p375
        $region90: #{tpu_custom_call.1} parent=47 // pred_check_branch
          %909 = sbr.rel (%p907) target = $region92
        $region91: #{tpu_custom_call.1} parent=47 // pred_region
          %s910 = sand.u32 %s41, 1
          %s911 = scalar_lea.sflag [#allocation4], %s910
          %s912 = sand.u32 %s365, 1
          %s913 = smul.addr %s912, 32
          %s914 = scalar_lea.vmem [#allocation19], %s913
          %s916 = ssub.s32 512, 512
          %917 = vsyncadd %s911, %s916
          %s918 = smul.addr %s49, 8
          %s919 = smul.addr %s918, 64
          %s920 = scalar_lea.hbm %s12, %s919
          %s921 = sshll.u32 %s914, 4
          %s922 = int_to_ptr.vmem [resolvable:$true] %s921
          %927 = dma.hbm_to_vmem [thread:$0]  %s920, 512, %s922, %s911, 64, 64, 4
        $region92: #{tpu_custom_call.1} parent=47 // pred_fallthru
          _
        // Predicated region
        $region93: #{tpu_custom_call.1} parent=47 // pred_check
          %p928 = pneg %p401
        $region94: #{tpu_custom_call.1} parent=47 // pred_check_branch
          %930 = sbr.rel (%p928) target = $region96
        $region95: #{tpu_custom_call.1} parent=47 // pred_region
          %s931 = sand.u32 %s41, 1
          %s932 = scalar_lea.sflag [#allocation7], %s931
          %s933 = sand.u32 %s391, 1
          %s934 = scalar_lea.vmem [#allocation20], %s933
          %s936 = ssub.s32 16, 16
          %937 = vsyncadd %s932, %s936
          %s938 = smul.addr %s49, 16
          %s939 = scalar_lea.hbm %s13, %s938
          %s941 = sshll.u32 %s934, 4
          %s942 = int_to_ptr.vmem [resolvable:$true] %s941
          %944 = dma.hbm_to_vmem [thread:$0]  %s939, 16, %s942, %s932
        $region96: #{tpu_custom_call.1} parent=47 // pred_fallthru
          _
        // Predicated region
        $region97: #{tpu_custom_call.1} parent=47 // pred_check
          %p945 = pneg %p427
        $region98: #{tpu_custom_call.1} parent=47 // pred_check_branch
          %947 = sbr.rel (%p945) target = $region100
        $region99: #{tpu_custom_call.1} parent=47 // pred_region
          %s948 = sand.u32 %s41, 1
          %s949 = scalar_lea.sflag [#allocation4], %s948
          %s950 = sand.u32 %s417, 1
          %s951 = scalar_lea.vmem [#allocation21], %s950
          %s953 = ssub.s32 16, 16
          %954 = vsyncadd %s949, %s953
          %s955 = smul.addr %s49, 16
          %s956 = scalar_lea.hbm %s14, %s955
          %s958 = sshll.u32 %s951, 4
          %s959 = int_to_ptr.vmem [resolvable:$true] %s958
          %961 = dma.hbm_to_vmem [thread:$0]  %s956, 16, %s959, %s949
        $region100: #{tpu_custom_call.1} parent=47 // pred_fallthru
          _
        // Predicated region
        $region101: #{tpu_custom_call.1} parent=47 // pred_check
          %p962 = pneg %p453
        $region102: #{tpu_custom_call.1} parent=47 // pred_check_branch
          %964 = sbr.rel (%p962) target = $region104
        $region103: #{tpu_custom_call.1} parent=47 // pred_region
          %s965 = sand.u32 %s41, 1
          %s966 = scalar_lea.sflag [#allocation7], %s965
          %s967 = sand.u32 %s443, 1
          %s968 = scalar_lea.vmem [#allocation22], %s967
          %s970 = ssub.s32 16, 16
          %971 = vsyncadd %s966, %s970
          %s972 = smul.addr %s49, 16
          %s973 = scalar_lea.hbm %s15, %s972
          %s975 = sshll.u32 %s968, 4
          %s976 = int_to_ptr.vmem [resolvable:$true] %s975
          %978 = dma.hbm_to_vmem [thread:$0]  %s973, 16, %s976, %s966
        $region104: #{tpu_custom_call.1} parent=47 // pred_fallthru
          _
      $region48: #{tpu_custom_call.1} parent=5 // pred_fallthru
        _
      %p979 = scmp.le.s32.totalorder 1, %s41
      %p980 = scmp.lt.s32.totalorder %s41, 5
      %p981 = pnand %p979, %p980
      %p982 = pneg %p981
      // Predicated region
      $region105: #{tpu_custom_call.1} parent=5 // pred_check
        _
      $region106: #{tpu_custom_call.1} parent=5 // pred_check_branch
        %984 = sbr.rel (%p981) target = $region108
      $region107: #{tpu_custom_call.1} parent=5 // pred_region
        %s985 = ssub.s32 %s41, 1
        %s986 = sand.u32 %s46, 1
        %s987 = scalar_lea.sflag [#allocation4], %s986
        %s988 = sand.u32 %s66, 1
        %s989 = smul.addr %s988, 8
        %s990 = scalar_lea.vmem [#allocation3], %s989
        // Predicated region
        $region109: #{tpu_custom_call.1} parent=107 // pred_check
          %p991 = pneg %p79
        $region110: #{tpu_custom_call.1} parent=107 // pred_check_branch
          %993 = sbr.rel (%p991) target = $region112
        $region111: #{tpu_custom_call.1} parent=107 // pred_region
          %994 = dma.done %s987, 128
        $region112: #{tpu_custom_call.1} parent=107 // pred_fallthru
          _
        %s995 = sand.u32 %s46, 1
        %s996 = scalar_lea.sflag [#allocation7], %s995
        %s997 = sand.u32 %s92, 1
        %s998 = scalar_lea.vmem [#allocation6], %s997
        // Predicated region
        $region113: #{tpu_custom_call.1} parent=107 // pred_check
          %p999 = pneg %p105
        $region114: #{tpu_custom_call.1} parent=107 // pred_check_branch
          %1001 = sbr.rel (%p999) target = $region116
        $region115: #{tpu_custom_call.1} parent=107 // pred_region
          %1002 = dma.done %s996, 16
        $region116: #{tpu_custom_call.1} parent=107 // pred_fallthru
          _
        // Predicated region
        $region117: #{tpu_custom_call.1} parent=107 // pred_check
          %p1003 = pneg %p126
        $region118: #{tpu_custom_call.1} parent=107 // pred_check_branch
          %1005 = sbr.rel (%p1003) target = $region120
        $region119: #{tpu_custom_call.1} parent=107 // pred_region
          %1006 = dma.done [#allocation7], 16
        $region120: #{tpu_custom_call.1} parent=107 // pred_fallthru
          _
        // Predicated region
        $region121: #{tpu_custom_call.1} parent=107 // pred_check
          %p1007 = pneg %p147
        $region122: #{tpu_custom_call.1} parent=107 // pred_check_branch
          %1009 = sbr.rel (%p1007) target = $region124
        $region123: #{tpu_custom_call.1} parent=107 // pred_region
          %1010 = dma.done [#allocation10], 16
        $region124: #{tpu_custom_call.1} parent=107 // pred_fallthru
          _
        %s1011 = sand.u32 %s46, 1
        %s1012 = scalar_lea.sflag [#allocation4], %s1011
        %s1013 = sand.u32 %s160, 1
        %s1014 = smul.addr %s1013, 16
        %s1015 = scalar_lea.vmem [#allocation11], %s1014
        // Predicated region
        $region125: #{tpu_custom_call.1} parent=107 // pred_check
          %p1016 = pneg %p173
        $region126: #{tpu_custom_call.1} parent=107 // pred_check_branch
          %1018 = sbr.rel (%p1016) target = $region128
        $region127: #{tpu_custom_call.1} parent=107 // pred_region
          %1019 = dma.done %s1012, 256
        $region128: #{tpu_custom_call.1} parent=107 // pred_fallthru
          _
        %s1020 = sand.u32 %s46, 1
        %s1021 = scalar_lea.sflag [#allocation7], %s1020
        %s1022 = sand.u32 %s186, 1
        %s1023 = scalar_lea.vmem [#allocation12], %s1022
        // Predicated region
        $region129: #{tpu_custom_call.1} parent=107 // pred_check
          %p1024 = pneg %p199
        $region130: #{tpu_custom_call.1} parent=107 // pred_check_branch
          %1026 = sbr.rel (%p1024) target = $region132
        $region131: #{tpu_custom_call.1} parent=107 // pred_region
          %1027 = dma.done %s1021, 16
        $region132: #{tpu_custom_call.1} parent=107 // pred_fallthru
          _
        %s1028 = sand.u32 %s46, 1
        %s1029 = scalar_lea.sflag [#allocation4], %s1028
        %s1030 = sand.u32 %s212, 1
        %s1031 = smul.addr %s1030, 16
        %s1032 = scalar_lea.vmem [#allocation13], %s1031
        // Predicated region
        $region133: #{tpu_custom_call.1} parent=107 // pred_check
          %p1033 = pneg %p225
        $region134: #{tpu_custom_call.1} parent=107 // pred_check_branch
          %1035 = sbr.rel (%p1033) target = $region136
        $region135: #{tpu_custom_call.1} parent=107 // pred_region
          %1036 = dma.done %s1029, 256
        $region136: #{tpu_custom_call.1} parent=107 // pred_fallthru
          _
        %s1037 = sand.u32 %s46, 1
        %s1038 = scalar_lea.sflag [#allocation7], %s1037
        %s1039 = sand.u32 %s238, 1
        %s1040 = scalar_lea.vmem [#allocation14], %s1039
        // Predicated region
        $region137: #{tpu_custom_call.1} parent=107 // pred_check
          %p1041 = pneg %p251
        $region138: #{tpu_custom_call.1} parent=107 // pred_check_branch
          %1043 = sbr.rel (%p1041) target = $region140
        $region139: #{tpu_custom_call.1} parent=107 // pred_region
          %1044 = dma.done %s1038, 16
        $region140: #{tpu_custom_call.1} parent=107 // pred_fallthru
          _
        %s1045 = sand.u32 %s46, 1
        %s1046 = scalar_lea.sflag [#allocation4], %s1045
        %s1047 = sand.u32 %s264, 1
        %s1048 = scalar_lea.vmem [#allocation15], %s1047
        // Predicated region
        $region141: #{tpu_custom_call.1} parent=107 // pred_check
          %p1049 = pneg %p277
        $region142: #{tpu_custom_call.1} parent=107 // pred_check_branch
          %1051 = sbr.rel (%p1049) target = $region144
        $region143: #{tpu_custom_call.1} parent=107 // pred_region
          %1052 = dma.done %s1046, 16
        $region144: #{tpu_custom_call.1} parent=107 // pred_fallthru
          _
        %s1053 = sand.u32 %s46, 1
        %s1054 = scalar_lea.sflag [#allocation7], %s1053
        %s1055 = sand.u32 %s290, 1
        %s1056 = scalar_lea.vmem [#allocation16], %s1055
        // Predicated region
        $region145: #{tpu_custom_call.1} parent=107 // pred_check
          %p1057 = pneg %p303
        $region146: #{tpu_custom_call.1} parent=107 // pred_check_branch
          %1059 = sbr.rel (%p1057) target = $region148
        $region147: #{tpu_custom_call.1} parent=107 // pred_region
          %1060 = dma.done %s1054, 16
        $region148: #{tpu_custom_call.1} parent=107 // pred_fallthru
          _
        %s1061 = sand.u32 %s46, 1
        %s1062 = scalar_lea.sflag [#allocation4], %s1061
        %s1063 = sand.u32 %s316, 1
        %s1064 = smul.addr %s1063, 16
        %s1065 = scalar_lea.vmem [#allocation17], %s1064
        // Predicated region
        $region149: #{tpu_custom_call.1} parent=107 // pred_check
          %p1066 = pneg %p329
        $region150: #{tpu_custom_call.1} parent=107 // pred_check_branch
          %1068 = sbr.rel (%p1066) target = $region152
        $region151: #{tpu_custom_call.1} parent=107 // pred_region
          %1069 = dma.done %s1062, 256
        $region152: #{tpu_custom_call.1} parent=107 // pred_fallthru
          _
        %s1070 = sand.u32 %s46, 1
        %s1071 = scalar_lea.sflag [#allocation7], %s1070
        %s1072 = sand.u32 %s342, 1
        %s1073 = scalar_lea.vmem [#allocation18], %s1072
        // Predicated region
        $region153: #{tpu_custom_call.1} parent=107 // pred_check
          %p1074 = pneg %p355
        $region154: #{tpu_custom_call.1} parent=107 // pred_check_branch
          %1076 = sbr.rel (%p1074) target = $region156
        $region155: #{tpu_custom_call.1} parent=107 // pred_region
          %1077 = dma.done %s1071, 16
        $region156: #{tpu_custom_call.1} parent=107 // pred_fallthru
          _
        %s1078 = sand.u32 %s46, 1
        %s1079 = scalar_lea.sflag [#allocation4], %s1078
        %s1080 = sand.u32 %s368, 1
        %s1081 = smul.addr %s1080, 32
        %s1082 = scalar_lea.vmem [#allocation19], %s1081
        // Predicated region
        $region157: #{tpu_custom_call.1} parent=107 // pred_check
          %p1083 = pneg %p381
        $region158: #{tpu_custom_call.1} parent=107 // pred_check_branch
          %1085 = sbr.rel (%p1083) target = $region160
        $region159: #{tpu_custom_call.1} parent=107 // pred_region
          %1086 = dma.done %s1079, 512
        $region160: #{tpu_custom_call.1} parent=107 // pred_fallthru
          _
        %s1087 = sand.u32 %s46, 1
        %s1088 = scalar_lea.sflag [#allocation7], %s1087
        %s1089 = sand.u32 %s394, 1
        %s1090 = scalar_lea.vmem [#allocation20], %s1089
        // Predicated region
        $region161: #{tpu_custom_call.1} parent=107 // pred_check
          %p1091 = pneg %p407
        $region162: #{tpu_custom_call.1} parent=107 // pred_check_branch
          %1093 = sbr.rel (%p1091) target = $region164
        $region163: #{tpu_custom_call.1} parent=107 // pred_region
          %1094 = dma.done %s1088, 16
        $region164: #{tpu_custom_call.1} parent=107 // pred_fallthru
          _
        %s1095 = sand.u32 %s46, 1
        %s1096 = scalar_lea.sflag [#allocation4], %s1095
        %s1097 = sand.u32 %s420, 1
        %s1098 = scalar_lea.vmem [#allocation21], %s1097
        // Predicated region
        $region165: #{tpu_custom_call.1} parent=107 // pred_check
          %p1099 = pneg %p433
        $region166: #{tpu_custom_call.1} parent=107 // pred_check_branch
          %1101 = sbr.rel (%p1099) target = $region168
        $region167: #{tpu_custom_call.1} parent=107 // pred_region
          %1102 = dma.done %s1096, 16
        $region168: #{tpu_custom_call.1} parent=107 // pred_fallthru
          _
        %s1103 = sand.u32 %s46, 1
        %s1104 = scalar_lea.sflag [#allocation7], %s1103
        %s1105 = sand.u32 %s446, 1
        %s1106 = scalar_lea.vmem [#allocation22], %s1105
        // Predicated region
        $region169: #{tpu_custom_call.1} parent=107 // pred_check
          %p1107 = pneg %p459
        $region170: #{tpu_custom_call.1} parent=107 // pred_check_branch
          %1109 = sbr.rel (%p1107) target = $region172
        $region171: #{tpu_custom_call.1} parent=107 // pred_region
          %1110 = dma.done %s1104, 16
        $region172: #{tpu_custom_call.1} parent=107 // pred_fallthru
          _
        // Predicated region
        $region173: #{tpu_custom_call.1} parent=107 // pred_check
          %p1111 = pneg %p480
        $region174: #{tpu_custom_call.1} parent=107 // pred_check_branch
          %1113 = sbr.rel (%p1111) target = $region176
        $region175: #{tpu_custom_call.1} parent=107 // pred_region
          %1114 = dma.done [#allocation10], 256
        $region176: #{tpu_custom_call.1} parent=107 // pred_fallthru
          _
        // Predicated region
        $region177: #{tpu_custom_call.1} parent=107 // pred_check
          %p1115 = pneg %p501
        $region178: #{tpu_custom_call.1} parent=107 // pred_check_branch
          %1117 = sbr.rel (%p1115) target = $region180
        $region179: #{tpu_custom_call.1} parent=107 // pred_region
          %1118 = dma.done [#allocation25], 16
        $region180: #{tpu_custom_call.1} parent=107 // pred_fallthru
          _
        // Predicated region
        $region181: #{tpu_custom_call.1} parent=107 // pred_check
          %p1119 = pneg %p522
        $region182: #{tpu_custom_call.1} parent=107 // pred_check_branch
          %1121 = sbr.rel (%p1119) target = $region184
        $region183: #{tpu_custom_call.1} parent=107 // pred_region
          %1122 = dma.done [#allocation25], 1024
        $region184: #{tpu_custom_call.1} parent=107 // pred_fallthru
          _
        // Predicated region
        $region185: #{tpu_custom_call.1} parent=107 // pred_check
          %p1123 = pneg %p543
        $region186: #{tpu_custom_call.1} parent=107 // pred_check_branch
          %1125 = sbr.rel (%p1123) target = $region188
        $region187: #{tpu_custom_call.1} parent=107 // pred_region
          %1126 = dma.done [#allocation28], 64
        $region188: #{tpu_custom_call.1} parent=107 // pred_fallthru
          _
        // Predicated region
        $region189: #{tpu_custom_call.1} parent=107 // pred_check
          %p1127 = pneg %p564
        $region190: #{tpu_custom_call.1} parent=107 // pred_check_branch
          %1129 = sbr.rel (%p1127) target = $region192
        $region191: #{tpu_custom_call.1} parent=107 // pred_region
          %1130 = dma.done [#allocation28], 4096
        $region192: #{tpu_custom_call.1} parent=107 // pred_fallthru
          _
        // Predicated region
        $region193: #{tpu_custom_call.1} parent=107 // pred_check
          %p1131 = pneg %p585
        $region194: #{tpu_custom_call.1} parent=107 // pred_check_branch
          %1133 = sbr.rel (%p1131) target = $region196
        $region195: #{tpu_custom_call.1} parent=107 // pred_region
          %1134 = dma.done [#allocation31], 16
        $region196: #{tpu_custom_call.1} parent=107 // pred_fallthru
          _
        %s1135 = sand.u32 %s46, 1
        %s1136 = scalar_lea.sflag [#allocation4], %s1135
        %s1137 = sand.u32 %s66, 1
        %s1138 = smul.addr %s1137, 8
        %s1139 = scalar_lea.vmem [#allocation3], %s1138
        %p1140 = pneg %p79
        %p1141 = pneg %p76
        %s1142 = sand.u32 %s46, 1
        %s1143 = scalar_lea.sflag [#allocation7], %s1142
        %s1144 = sand.u32 %s92, 1
        %s1145 = scalar_lea.vmem [#allocation6], %s1144
        %p1146 = pneg %p105
        %p1147 = pneg %p102
        %p1148 = pneg %p126
        %p1149 = pneg %p123
        %p1150 = pneg %p147
        %p1151 = pneg %p144
        %s1152 = sand.u32 %s46, 1
        %s1153 = scalar_lea.sflag [#allocation4], %s1152
        %s1154 = sand.u32 %s160, 1
        %s1155 = smul.addr %s1154, 16
        %s1156 = scalar_lea.vmem [#allocation11], %s1155
        %p1157 = pneg %p173
        %p1158 = pneg %p170
        %s1159 = sand.u32 %s46, 1
        %s1160 = scalar_lea.sflag [#allocation7], %s1159
        %s1161 = sand.u32 %s186, 1
        %s1162 = scalar_lea.vmem [#allocation12], %s1161
        %p1163 = pneg %p199
        %p1164 = pneg %p196
        %s1165 = sand.u32 %s46, 1
        %s1166 = scalar_lea.sflag [#allocation4], %s1165
        %s1167 = sand.u32 %s212, 1
        %s1168 = smul.addr %s1167, 16
        %s1169 = scalar_lea.vmem [#allocation13], %s1168
        %p1170 = pneg %p225
        %p1171 = pneg %p222
        %s1172 = sand.u32 %s46, 1
        %s1173 = scalar_lea.sflag [#allocation7], %s1172
        %s1174 = sand.u32 %s238, 1
        %s1175 = scalar_lea.vmem [#allocation14], %s1174
        %p1176 = pneg %p251
        %p1177 = pneg %p248
        %s1178 = sand.u32 %s46, 1
        %s1179 = scalar_lea.sflag [#allocation4], %s1178
        %s1180 = sand.u32 %s264, 1
        %s1181 = scalar_lea.vmem [#allocation15], %s1180
        %p1182 = pneg %p277
        %p1183 = pneg %p274
        %s1184 = sand.u32 %s46, 1
        %s1185 = scalar_lea.sflag [#allocation7], %s1184
        %s1186 = sand.u32 %s290, 1
        %s1187 = scalar_lea.vmem [#allocation16], %s1186
        %p1188 = pneg %p303
        %p1189 = pneg %p300
        %s1190 = sand.u32 %s46, 1
        %s1191 = scalar_lea.sflag [#allocation4], %s1190
        %s1192 = sand.u32 %s316, 1
        %s1193 = smul.addr %s1192, 16
        %s1194 = scalar_lea.vmem [#allocation17], %s1193
        %p1195 = pneg %p329
        %p1196 = pneg %p326
        %s1197 = sand.u32 %s46, 1
        %s1198 = scalar_lea.sflag [#allocation7], %s1197
        %s1199 = sand.u32 %s342, 1
        %s1200 = scalar_lea.vmem [#allocation18], %s1199
        %p1201 = pneg %p355
        %p1202 = pneg %p352
        %s1203 = sand.u32 %s46, 1
        %s1204 = scalar_lea.sflag [#allocation4], %s1203
        %s1205 = sand.u32 %s368, 1
        %s1206 = smul.addr %s1205, 32
        %s1207 = scalar_lea.vmem [#allocation19], %s1206
        %p1208 = pneg %p381
        %p1209 = pneg %p378
        %s1210 = sand.u32 %s46, 1
        %s1211 = scalar_lea.sflag [#allocation7], %s1210
        %s1212 = sand.u32 %s394, 1
        %s1213 = scalar_lea.vmem [#allocation20], %s1212
        %p1214 = pneg %p407
        %p1215 = pneg %p404
        %s1216 = sand.u32 %s46, 1
        %s1217 = scalar_lea.sflag [#allocation4], %s1216
        %s1218 = sand.u32 %s420, 1
        %s1219 = scalar_lea.vmem [#allocation21], %s1218
        %p1220 = pneg %p433
        %p1221 = pneg %p430
        %s1222 = sand.u32 %s46, 1
        %s1223 = scalar_lea.sflag [#allocation7], %s1222
        %s1224 = sand.u32 %s446, 1
        %s1225 = scalar_lea.vmem [#allocation22], %s1224
        %p1226 = pneg %p459
        %p1227 = pneg %p456
        %p1228 = pneg %p480
        %p1229 = pneg %p477
        %p1230 = pneg %p501
        %p1231 = pneg %p498
        %p1232 = pneg %p522
        %p1233 = pneg %p519
        %p1234 = pneg %p543
        %p1235 = pneg %p540
        %p1236 = pneg %p564
        %p1237 = pneg %p561
        %p1238 = pneg %p585
        %p1239 = pneg %p582
        %p1240 = pneg %p611
        %p1241 = pneg %p608
        %s1242 = sand.u32 %s598, 1
        %s1243 = scalar_lea.sflag [#allocation5], %s1242
        %s1244 = sand.u32 %s598, 1
        %s1245 = scalar_lea.vmem [#allocation32], %s1244
        %p1247 = scmp.eq.s32.totalorder %s51, 0
        // Predicated region
        $region197: #{tpu_custom_call.1} parent=107 // pred_check
          %p1248 = pneg %p1247
        $region198: #{tpu_custom_call.1} parent=107 // pred_check_branch
          %1250 = sbr.rel (%p1248) target = $region200
        $region199: #{tpu_custom_call.1} parent=107 // pred_region
          %v1251 = vld [vmem:[%s990] sm:$0xff]
          %v1252 = vld [vmem:[#allocation8] sm:$0x1]
          %v1253 = vld [vmem:[#allocation9] sm:$0x1]
          %vm1254 = vcmask 261120
          %v1255 = vsel %vm1254, %v1251, 0.0
          %1256 = vadd.xlane.f32.xlu0 %v1255
          %v1257 = vpop.xlane.xlu0 %1256
          %v1258 = vrcp.pop 32.0
          %v1259 = vmul.f32 %v1257, %v1258
          %v1260 = vsub.f32 %v1251, %v1259
          %v1261 = vmul.f32 %v1260, %v1260
          %v1262 = vsel %vm1254, %v1261, 0.0
          %1263 = vadd.xlane.f32.xlu0 %v1262
          %v1264 = vpop.xlane.xlu0 %1263
          %v1265 = vmul.f32 %v1264, %v1258
          %v1266 = vadd.f32 %v1265, 1e-12
          %v1267 = vrsqrt.pop %v1266
          %v1268 = vmul.f32 %v1260, %v1267
          %v1270 = vlaneseq
          %v1271 = vshrl.u32 %v1270, 7
          %v1272 = vsub.s32 0, %v1271
          %v1273 = vrot.slane %v1252, %v1272
          %v1275 = vmul.f32 %v1268, %v1273
          %v1277 = vlaneseq
          %v1278 = vshrl.u32 %v1277, 7
          %v1279 = vsub.s32 0, %v1278
          %v1280 = vrot.slane %v1253, %v1279
          %v1282 = vadd.f32 %v1275, %v1280
          %1283 = vst.msk [vmem:[#allocation2] sm:$0xff] %vm1254, %v1282
        $region200: #{tpu_custom_call.1} parent=107 // pred_fallthru
          _
        %v1284 = vld [vmem:[#allocation2] sm:$0xff]
        %v1285 = vpack.c.bf16 %v1284, %v1284
        %v1286 = vld [vmem:[%s1015] sm:$0xf]
        %v1287 = vld [vmem:[%s1015 + $0x4] sm:$0xf]
        %v1288 = vld [vmem:[%s1015 + $0x8] sm:$0xf]
        %v1289 = vld [vmem:[%s1015 + $0xc] sm:$0xf]
        %v1290 = vld [vmem:[%s1023] sm:$0x1]
        %v1292 = vlaneseq
        %v1293 = vshrl.u32 %v1292, 7
        %v1294 = vsub.s32 0, %v1293
        %v1295 = vrot.slane %v1290, %v1294
        %v1301 = vunpack.c.l.b16 %v1286
        %v1302 = vunpack.c.l.b16 %v1287
        %v1303 = vunpack.c.l.b16 %v1288
        %v1304 = vunpack.c.l.b16 %v1289
        %v1305 = vpack.c.b16 %v1302, %v1301
        %v1306 = vpack.c.b16 %v1304, %v1303
        %vm1309 = vcmask 261120
        %v1311 = vsel %vm1309, %v1285, 0
        %1313 = vmatprep.subr.bf16.mxu0 0
        %1314 = vmatpush1.bf16.msra.mxu0 %v1305
        %1315 = vmatprep.subr.bf16.mxu0 0
        %1316 = vmatpush1.bf16.msra.mxu0 %v1306
        %1317 = vmatprep.subr.bf16.mxu0 0
        %1318 = vmatpush1.bf16.msra.mxu0 0
        %1319 = vmatprep.subr.bf16.mxu0 0
        %1320 = vmatpush1.bf16.msra.mxu0 0
        %1321 = vmatprep.subr.bf16.mxu0 0
        %1322 = vmatpush1.bf16.msra.mxu0 0
        %1323 = vmatprep.subr.bf16.mxu0 0
        %1324 = vmatpush1.bf16.msra.mxu0 0
        %1325 = vmatprep.subr.bf16.mxu0 0
        %1326 = vmatpush1.bf16.msra.mxu0 0
        %1327 = vmatprep.subr.bf16.mxu0 0
        %1328 = vmatpush1.bf16.msra.mxu0 0
        %1329 = vmatprep.subr.bf16.mxu0 0
        %1330 = vmatpush1.bf16.msra.mxu0 0
        %1331 = vmatprep.subr.bf16.mxu0 0
        %1332 = vmatpush1.bf16.msra.mxu0 0
        %1333 = vmatprep.subr.bf16.mxu0 0
        %1334 = vmatpush1.bf16.msra.mxu0 0
        %1335 = vmatprep.subr.bf16.mxu0 0
        %1336 = vmatpush1.bf16.msra.mxu0 0
        %1337 = vmatprep.subr.bf16.mxu0 0
        %1338 = vmatpush1.bf16.msra.mxu0 0
        %1339 = vmatprep.subr.bf16.mxu0 0
        %1340 = vmatpush1.bf16.msra.mxu0 0
        %1341 = vmatprep.subr.bf16.mxu0 0
        %1342 = vmatpush1.bf16.msra.mxu0 0
        %1343 = vmatprep.subr.bf16.mxu0 0
        %1344 = vmatpush1.bf16.msra.mxu0 0
        %1345 = vmatprep.mubr.bf16.mxu0 0
        %1346 = vmatmul.mubr.bf16.gmra.mrb[0].mxu0 %v1311
        %v1347 = vpop.f32.mrb[0].mxu0
        %v1348 = vadd.f32 %v1295, %v1347
        %v1349 = vpop.f32.mrb[0].mxu0
        %v1350 = vpop.f32.mrb[0].mxu0
        %v1351 = vpop.f32.mrb[0].mxu0
        %1352 = vdwg.mxu0
        %1354 = vrot.lane.b32.xlu0 %v1348, 112
        %v1355 = vpop.permute.xlu0 %1354
        %v1357 = vcombine.high %v1348, 0.0
        %v1359 = vunpack.c.l.s4 1983009808
        %v1360 = vunpack.c.0.s8 %v1359
        %v1361 = vlaneseq
        %v1362 = vshrl.u32 %v1361, 7
        %v1363 = vsub.s32 %v1360, %v1362
        %v1364 = vrot.slane %v1348, %v1363
        %v1366 = vunpack.c.l.s4 1983009808
        %v1367 = vunpack.c.0.s8 %v1366
        %v1368 = vlaneseq
        %v1369 = vshrl.u32 %v1368, 7
        %v1370 = vsub.s32 %v1367, %v1369
        %v1371 = vrot.slane %v1357, %v1370
        %v1372 = vcombine.high %v1355, 0.0
        %v1374 = vunpack.c.l.s4 1983009808
        %v1375 = vunpack.c.0.s8 %v1374
        %v1376 = vlaneseq
        %v1377 = vshrl.u32 %v1376, 7
        %v1378 = vsub.s32 %v1375, %v1377
        %v1379 = vrot.slane %v1355, %v1378
        %v1381 = vunpack.c.l.s4 1983009808
        %v1382 = vunpack.c.0.s8 %v1381
        %v1383 = vlaneseq
        %v1384 = vshrl.u32 %v1383, 7
        %v1385 = vsub.s32 %v1382, %v1384
        %v1386 = vrot.slane %v1372, %v1385
        %v1387 = vcombine.low %v1364, %v1379
        %v1388 = vcombine.high %v1364, %v1379
        %v1390 = vunpack.c.l.s4 1934713408
        %v1391 = vunpack.c.0.s8 %v1390
        %v1392 = vlaneseq
        %v1393 = vshrl.u32 %v1392, 7
        %v1394 = vsub.s32 %v1391, %v1393
        %v1395 = vrot.slane %v1387, %v1394
        %v1397 = vunpack.c.l.s4 1934713408
        %v1398 = vunpack.c.0.s8 %v1397
        %v1399 = vlaneseq
        %v1400 = vshrl.u32 %v1399, 7
        %v1401 = vsub.s32 %v1398, %v1400
        %v1402 = vrot.slane %v1388, %v1401
        %v1403 = vcombine.low %v1371, %v1386
        %v1404 = vcombine.high %v1371, %v1386
        %v1406 = vunpack.c.l.s4 1934713408
        %v1407 = vunpack.c.0.s8 %v1406
        %v1408 = vlaneseq
        %v1409 = vshrl.u32 %v1408, 7
        %v1410 = vsub.s32 %v1407, %v1409
        %v1411 = vrot.slane %v1403, %v1410
        %v1413 = vunpack.c.l.s4 1934713408
        %v1414 = vunpack.c.0.s8 %v1413
        %v1415 = vlaneseq
        %v1416 = vshrl.u32 %v1415, 7
        %v1417 = vsub.s32 %v1414, %v1416
        %v1418 = vrot.slane %v1404, %v1417
        %v1419 = vcombine.high %v1395, 0.0
        %v1420 = vcombine.high %v1402, 0.0
        %v1421 = vcombine.high %v1411, 0.0
        %v1422 = vcombine.high %v1418, 0.0
        %v1423 = vpack.c.bf16 %v1395, %v1395
        %v1424 = vpack.c.bf16 %v1419, %v1419
        %v1425 = vpack.c.bf16 %v1402, %v1402
        %v1426 = vpack.c.bf16 %v1420, %v1420
        %v1427 = vpack.c.bf16 %v1411, %v1411
        %v1428 = vpack.c.bf16 %v1421, %v1421
        %v1429 = vpack.c.bf16 %v1418, %v1418
        %v1430 = vpack.c.bf16 %v1422, %v1422
        %1431 = vrot.lane.b32.xlu0 %v1348, 96
        %v1432 = vpop.permute.xlu0 %1431
        %1433 = vrot.lane.b32.xlu0 %v1355, 96
        %v1434 = vpop.permute.xlu0 %1433
        %v1437 = vcombine.high %v1432, 0.0
        %v1439 = vunpack.c.l.s4 1983009808
        %v1440 = vunpack.c.0.s8 %v1439
        %v1441 = vlaneseq
        %v1442 = vshrl.u32 %v1441, 7
        %v1443 = vsub.s32 %v1440, %v1442
        %v1444 = vrot.slane %v1432, %v1443
        %v1446 = vunpack.c.l.s4 1983009808
        %v1447 = vunpack.c.0.s8 %v1446
        %v1448 = vlaneseq
        %v1449 = vshrl.u32 %v1448, 7
        %v1450 = vsub.s32 %v1447, %v1449
        %v1451 = vrot.slane %v1437, %v1450
        %v1452 = vcombine.high %v1434, 0.0
        %v1454 = vunpack.c.l.s4 1983009808
        %v1455 = vunpack.c.0.s8 %v1454
        %v1456 = vlaneseq
        %v1457 = vshrl.u32 %v1456, 7
        %v1458 = vsub.s32 %v1455, %v1457
        %v1459 = vrot.slane %v1434, %v1458
        %v1461 = vunpack.c.l.s4 1983009808
        %v1462 = vunpack.c.0.s8 %v1461
        %v1463 = vlaneseq
        %v1464 = vshrl.u32 %v1463, 7
        %v1465 = vsub.s32 %v1462, %v1464
        %v1466 = vrot.slane %v1452, %v1465
        %v1467 = vcombine.low %v1444, %v1459
        %v1468 = vcombine.high %v1444, %v1459
        %v1470 = vunpack.c.l.s4 1934713408
        %v1471 = vunpack.c.0.s8 %v1470
        %v1472 = vlaneseq
        %v1473 = vshrl.u32 %v1472, 7
        %v1474 = vsub.s32 %v1471, %v1473
        %v1475 = vrot.slane %v1467, %v1474
        %v1477 = vunpack.c.l.s4 1934713408
        %v1478 = vunpack.c.0.s8 %v1477
        %v1479 = vlaneseq
        %v1480 = vshrl.u32 %v1479, 7
        %v1481 = vsub.s32 %v1478, %v1480
        %v1482 = vrot.slane %v1468, %v1481
        %v1483 = vcombine.low %v1451, %v1466
        %v1484 = vcombine.high %v1451, %v1466
        %v1486 = vunpack.c.l.s4 1934713408
        %v1487 = vunpack.c.0.s8 %v1486
        %v1488 = vlaneseq
        %v1489 = vshrl.u32 %v1488, 7
        %v1490 = vsub.s32 %v1487, %v1489
        %v1491 = vrot.slane %v1483, %v1490
        %v1493 = vunpack.c.l.s4 1934713408
        %v1494 = vunpack.c.0.s8 %v1493
        %v1495 = vlaneseq
        %v1496 = vshrl.u32 %v1495, 7
        %v1497 = vsub.s32 %v1494, %v1496
        %v1498 = vrot.slane %v1484, %v1497
        %v1499 = vcombine.high %v1475, 0.0
        %v1500 = vcombine.high %v1482, 0.0
        %v1501 = vcombine.high %v1491, 0.0
        %v1502 = vcombine.high %v1498, 0.0
        %v1503 = vpack.c.bf16 %v1475, %v1475
        %v1504 = vpack.c.bf16 %v1499, %v1499
        %v1505 = vpack.c.bf16 %v1482, %v1482
        %v1506 = vpack.c.bf16 %v1500, %v1500
        %v1507 = vpack.c.bf16 %v1491, %v1491
        %v1508 = vpack.c.bf16 %v1501, %v1501
        %v1509 = vpack.c.bf16 %v1498, %v1498
        %v1510 = vpack.c.bf16 %v1502, %v1502
        %1511 = vrot.lane.b32.xlu0 %v1348, 64
        %v1512 = vpop.permute.xlu0 %1511
        %1513 = vrot.lane.b32.xlu0 %v1355, 64
        %v1514 = vpop.permute.xlu0 %1513
        %v1517 = vcombine.high %v1512, 0.0
        %v1519 = vunpack.c.l.s4 1983009808
        %v1520 = vunpack.c.0.s8 %v1519
        %v1521 = vlaneseq
        %v1522 = vshrl.u32 %v1521, 7
        %v1523 = vsub.s32 %v1520, %v1522
        %v1524 = vrot.slane %v1512, %v1523
        %v1526 = vunpack.c.l.s4 1983009808
        %v1527 = vunpack.c.0.s8 %v1526
        %v1528 = vlaneseq
        %v1529 = vshrl.u32 %v1528, 7
        %v1530 = vsub.s32 %v1527, %v1529
        %v1531 = vrot.slane %v1517, %v1530
        %v1532 = vcombine.high %v1514, 0.0
        %v1534 = vunpack.c.l.s4 1983009808
        %v1535 = vunpack.c.0.s8 %v1534
        %v1536 = vlaneseq
        %v1537 = vshrl.u32 %v1536, 7
        %v1538 = vsub.s32 %v1535, %v1537
        %v1539 = vrot.slane %v1514, %v1538
        %v1541 = vunpack.c.l.s4 1983009808
        %v1542 = vunpack.c.0.s8 %v1541
        %v1543 = vlaneseq
        %v1544 = vshrl.u32 %v1543, 7
        %v1545 = vsub.s32 %v1542, %v1544
        %v1546 = vrot.slane %v1532, %v1545
        %v1547 = vcombine.low %v1524, %v1539
        %v1548 = vcombine.high %v1524, %v1539
        %v1550 = vunpack.c.l.s4 1934713408
        %v1551 = vunpack.c.0.s8 %v1550
        %v1552 = vlaneseq
        %v1553 = vshrl.u32 %v1552, 7
        %v1554 = vsub.s32 %v1551, %v1553
        %v1555 = vrot.slane %v1547, %v1554
        %v1557 = vunpack.c.l.s4 1934713408
        %v1558 = vunpack.c.0.s8 %v1557
        %v1559 = vlaneseq
        %v1560 = vshrl.u32 %v1559, 7
        %v1561 = vsub.s32 %v1558, %v1560
        %v1562 = vrot.slane %v1548, %v1561
        %v1563 = vcombine.low %v1531, %v1546
        %v1564 = vcombine.high %v1531, %v1546
        %v1566 = vunpack.c.l.s4 1934713408
        %v1567 = vunpack.c.0.s8 %v1566
        %v1568 = vlaneseq
        %v1569 = vshrl.u32 %v1568, 7
        %v1570 = vsub.s32 %v1567, %v1569
        %v1571 = vrot.slane %v1563, %v1570
        %v1573 = vunpack.c.l.s4 1934713408
        %v1574 = vunpack.c.0.s8 %v1573
        %v1575 = vlaneseq
        %v1576 = vshrl.u32 %v1575, 7
        %v1577 = vsub.s32 %v1574, %v1576
        %v1578 = vrot.slane %v1564, %v1577
        %v1579 = vcombine.high %v1555, 0.0
        %v1580 = vcombine.high %v1562, 0.0
        %v1581 = vcombine.high %v1571, 0.0
        %v1582 = vcombine.high %v1578, 0.0
        %v1583 = vpack.c.bf16 %v1555, %v1555
        %v1584 = vpack.c.bf16 %v1579, %v1579
        %v1585 = vpack.c.bf16 %v1562, %v1562
        %v1586 = vpack.c.bf16 %v1580, %v1580
        %v1587 = vpack.c.bf16 %v1571, %v1571
        %v1588 = vpack.c.bf16 %v1581, %v1581
        %v1589 = vpack.c.bf16 %v1578, %v1578
        %v1590 = vpack.c.bf16 %v1582, %v1582
        %v1591 = vld [vmem:[%s998] sm:$0x1]
        %v1593 = vlaneseq
        %v1594 = vshrl.u32 %v1593, 7
        %v1595 = vsub.s32 0, %v1594
        %v1596 = vrot.slane %v1591, %v1595
        %v1598 = vcombine.low %v1423, %v1427
        %v1600 = vunpack.c.l.s4 1983009808
        %v1601 = vunpack.c.0.s8 %v1600
        %v1602 = vlaneseq
        %v1603 = vshrl.u32 %v1602, 7
        %v1604 = vsub.s32 %v1601, %v1603
        %v1605 = vrot.slane %v1598, %v1604
        %v1606 = vcombine.low %v1425, %v1429
        %v1608 = vunpack.c.l.s4 1983009808
        %v1609 = vunpack.c.0.s8 %v1608
        %v1610 = vlaneseq
        %v1611 = vshrl.u32 %v1610, 7
        %v1612 = vsub.s32 %v1609, %v1611
        %v1613 = vrot.slane %v1606, %v1612
        %v1614 = vcombine.low %v1605, %v1613
        %v1616 = vunpack.c.l.s4 1934713408
        %v1617 = vunpack.c.0.s8 %v1616
        %v1618 = vlaneseq
        %v1619 = vshrl.u32 %v1618, 7
        %v1620 = vsub.s32 %v1617, %v1619
        %v1621 = vrot.slane %v1614, %v1620
        %v1622 = vcombine.low %v1424, %v1428
        %v1624 = vunpack.c.l.s4 1983009808
        %v1625 = vunpack.c.0.s8 %v1624
        %v1626 = vlaneseq
        %v1627 = vshrl.u32 %v1626, 7
        %v1628 = vsub.s32 %v1625, %v1627
        %v1629 = vrot.slane %v1622, %v1628
        %v1630 = vcombine.low %v1426, %v1430
        %v1632 = vunpack.c.l.s4 1983009808
        %v1633 = vunpack.c.0.s8 %v1632
        %v1634 = vlaneseq
        %v1635 = vshrl.u32 %v1634, 7
        %v1636 = vsub.s32 %v1633, %v1635
        %v1637 = vrot.slane %v1630, %v1636
        %v1638 = vcombine.low %v1629, %v1637
        %v1640 = vunpack.c.l.s4 1934713408
        %v1641 = vunpack.c.0.s8 %v1640
        %v1642 = vlaneseq
        %v1643 = vshrl.u32 %v1642, 7
        %v1644 = vsub.s32 %v1641, %v1643
        %v1645 = vrot.slane %v1638, %v1644
        %v1648 = vpack.i.b16 %v1645, %v1621
        %v1649 = vshrl.u32 %v1621, 16
        %v1650 = vshrl.u32 %v1645, 16
        %v1651 = vpack.i.b16 %v1650, %v1649
        %1652 = vxpose.xlu0.c.b16.start [1/8] %v1503, 128
        %1653 = vxpose.xlu0.c.b16.cont [2/8] 0, 128
        %1654 = vxpose.xlu0.c.b16.cont [3/8] 0, 128
        %1655 = vxpose.xlu0.c.b16.cont [4/8] 0, 128
        %1656 = vxpose.xlu0.c.b16.cont [5/8] 0, 128
        %1657 = vxpose.xlu0.c.b16.cont [6/8] 0, 128
        %1658 = vxpose.xlu0.c.b16.cont [7/8] 0, 128
        %1659 = vxpose.xlu0.c.b16.end [8/8] 0, 128
        %v1660 = vpop.trf.xlu0
        %v1661 = vpop.trf.xlu0
        %v1662 = vpop.trf.xlu0
        %v1663 = vpop.trf.xlu0
        %v1664 = vpop.trf.xlu0
        %v1665 = vpop.trf.xlu0
        %v1666 = vpop.trf.xlu0
        %v1667 = vpop.trf.xlu0
        %1668 = vxpose.xlu0.c.b16.start [1/8] %v1504, 128
        %1669 = vxpose.xlu0.c.b16.cont [2/8] 0, 128
        %1670 = vxpose.xlu0.c.b16.cont [3/8] 0, 128
        %1671 = vxpose.xlu0.c.b16.cont [4/8] 0, 128
        %1672 = vxpose.xlu0.c.b16.cont [5/8] 0, 128
        %1673 = vxpose.xlu0.c.b16.cont [6/8] 0, 128
        %1674 = vxpose.xlu0.c.b16.cont [7/8] 0, 128
        %1675 = vxpose.xlu0.c.b16.end [8/8] 0, 128
        %v1676 = vpop.trf.xlu0
        %v1677 = vpop.trf.xlu0
        %v1678 = vpop.trf.xlu0
        %v1679 = vpop.trf.xlu0
        %v1680 = vpop.trf.xlu0
        %v1681 = vpop.trf.xlu0
        %v1682 = vpop.trf.xlu0
        %v1683 = vpop.trf.xlu0
        %1684 = vxpose.xlu0.c.b16.start [1/8] %v1505, 128
        %1685 = vxpose.xlu0.c.b16.cont [2/8] 0, 128
        %1686 = vxpose.xlu0.c.b16.cont [3/8] 0, 128
        %1687 = vxpose.xlu0.c.b16.cont [4/8] 0, 128
        %1688 = vxpose.xlu0.c.b16.cont [5/8] 0, 128
        %1689 = vxpose.xlu0.c.b16.cont [6/8] 0, 128
        %1690 = vxpose.xlu0.c.b16.cont [7/8] 0, 128
        %1691 = vxpose.xlu0.c.b16.end [8/8] 0, 128
        %v1692 = vpop.trf.xlu0
        %v1693 = vpop.trf.xlu0
        %v1694 = vpop.trf.xlu0
        %v1695 = vpop.trf.xlu0
        %v1696 = vpop.trf.xlu0
        %v1697 = vpop.trf.xlu0
        %v1698 = vpop.trf.xlu0
        %v1699 = vpop.trf.xlu0
        %1700 = vxpose.xlu0.c.b16.start [1/8] %v1506, 128
        %1701 = vxpose.xlu0.c.b16.cont [2/8] 0, 128
        %1702 = vxpose.xlu0.c.b16.cont [3/8] 0, 128
        %1703 = vxpose.xlu0.c.b16.cont [4/8] 0, 128
        %1704 = vxpose.xlu0.c.b16.cont [5/8] 0, 128
        %1705 = vxpose.xlu0.c.b16.cont [6/8] 0, 128
        %1706 = vxpose.xlu0.c.b16.cont [7/8] 0, 128
        %1707 = vxpose.xlu0.c.b16.end [8/8] 0, 128
        %v1708 = vpop.trf.xlu0
        %v1709 = vpop.trf.xlu0
        %v1710 = vpop.trf.xlu0
        %v1711 = vpop.trf.xlu0
        %v1712 = vpop.trf.xlu0
        %v1713 = vpop.trf.xlu0
        %v1714 = vpop.trf.xlu0
        %v1715 = vpop.trf.xlu0
        %1716 = vxpose.xlu0.c.b16.start [1/8] %v1507, 128
        %1717 = vxpose.xlu0.c.b16.cont [2/8] 0, 128
        %1718 = vxpose.xlu0.c.b16.cont [3/8] 0, 128
        %1719 = vxpose.xlu0.c.b16.cont [4/8] 0, 128
        %1720 = vxpose.xlu0.c.b16.cont [5/8] 0, 128
        %1721 = vxpose.xlu0.c.b16.cont [6/8] 0, 128
        %1722 = vxpose.xlu0.c.b16.cont [7/8] 0, 128
        %1723 = vxpose.xlu0.c.b16.end [8/8] 0, 128
        %v1724 = vpop.trf.xlu0
        %v1725 = vpop.trf.xlu0
        %v1726 = vpop.trf.xlu0
        %v1727 = vpop.trf.xlu0
        %v1728 = vpop.trf.xlu0
        %v1729 = vpop.trf.xlu0
        %v1730 = vpop.trf.xlu0
        %v1731 = vpop.trf.xlu0
        %1732 = vxpose.xlu0.c.b16.start [1/8] %v1508, 128
        %1733 = vxpose.xlu0.c.b16.cont [2/8] 0, 128
        %1734 = vxpose.xlu0.c.b16.cont [3/8] 0, 128
        %1735 = vxpose.xlu0.c.b16.cont [4/8] 0, 128
        %1736 = vxpose.xlu0.c.b16.cont [5/8] 0, 128
        %1737 = vxpose.xlu0.c.b16.cont [6/8] 0, 128
        %1738 = vxpose.xlu0.c.b16.cont [7/8] 0, 128
        %1739 = vxpose.xlu0.c.b16.end [8/8] 0, 128
        %v1740 = vpop.trf.xlu0
        %v1741 = vpop.trf.xlu0
        %v1742 = vpop.trf.xlu0
        %v1743 = vpop.trf.xlu0
        %v1744 = vpop.trf.xlu0
        %v1745 = vpop.trf.xlu0
        %v1746 = vpop.trf.xlu0
        %v1747 = vpop.trf.xlu0
        %1748 = vxpose.xlu0.c.b16.start [1/8] %v1509, 128
        %1749 = vxpose.xlu0.c.b16.cont [2/8] 0, 128
        %1750 = vxpose.xlu0.c.b16.cont [3/8] 0, 128
        %1751 = vxpose.xlu0.c.b16.cont [4/8] 0, 128
        %1752 = vxpose.xlu0.c.b16.cont [5/8] 0, 128
        %1753 = vxpose.xlu0.c.b16.cont [6/8] 0, 128
        %1754 = vxpose.xlu0.c.b16.cont [7/8] 0, 128
        %1755 = vxpose.xlu0.c.b16.end [8/8] 0, 128
        %v1756 = vpop.trf.xlu0
        %v1757 = vpop.trf.xlu0
        %v1758 = vpop.trf.xlu0
        %v1759 = vpop.trf.xlu0
        %v1760 = vpop.trf.xlu0
        %v1761 = vpop.trf.xlu0
        %v1762 = vpop.trf.xlu0
        %v1763 = vpop.trf.xlu0
        %1764 = vxpose.xlu0.c.b16.start [1/8] %v1510, 128
        %1765 = vxpose.xlu0.c.b16.cont [2/8] 0, 128
        %1766 = vxpose.xlu0.c.b16.cont [3/8] 0, 128
        %1767 = vxpose.xlu0.c.b16.cont [4/8] 0, 128
        %1768 = vxpose.xlu0.c.b16.cont [5/8] 0, 128
        %1769 = vxpose.xlu0.c.b16.cont [6/8] 0, 128
        %1770 = vxpose.xlu0.c.b16.cont [7/8] 0, 128
        %1771 = vxpose.xlu0.c.b16.end [8/8] 0, 128
        %v1772 = vpop.trf.xlu0
        %v1773 = vpop.trf.xlu0
        %v1774 = vpop.trf.xlu0
        %v1775 = vpop.trf.xlu0
        %v1776 = vpop.trf.xlu0
        %v1777 = vpop.trf.xlu0
        %v1778 = vpop.trf.xlu0
        %v1779 = vpop.trf.xlu0
        %v1782 = vpack.i.b16 %v1676, %v1660
        %v1784 = vshrl.u32 %v1660, 16
        %v1785 = vshrl.u32 %v1676, 16
        %v1786 = vpack.i.b16 %v1785, %v1784
        %v1790 = vpack.i.b16 %v1708, %v1692
        %v1792 = vshrl.u32 %v1692, 16
        %v1793 = vshrl.u32 %v1708, 16
        %v1794 = vpack.i.b16 %v1793, %v1792
        %v1798 = vpack.i.b16 %v1740, %v1724
        %v1800 = vshrl.u32 %v1724, 16
        %v1801 = vshrl.u32 %v1740, 16
        %v1802 = vpack.i.b16 %v1801, %v1800
        %v1806 = vpack.i.b16 %v1772, %v1756
        %v1808 = vshrl.u32 %v1756, 16
        %v1809 = vshrl.u32 %v1772, 16
        %v1810 = vpack.i.b16 %v1809, %v1808
        %v1812 = vcombine.low %v1782, %v1798
        %v1813 = vcombine.high %v1782, %v1798
        %v1815 = vunpack.c.l.s4 1983009808
        %v1816 = vunpack.c.0.s8 %v1815
        %v1817 = vlaneseq
        %v1818 = vshrl.u32 %v1817, 7
        %v1819 = vsub.s32 %v1816, %v1818
        %v1820 = vrot.slane %v1812, %v1819
        %v1822 = vunpack.c.l.s4 1983009808
        %v1823 = vunpack.c.0.s8 %v1822
        %v1824 = vlaneseq
        %v1825 = vshrl.u32 %v1824, 7
        %v1826 = vsub.s32 %v1823, %v1825
        %v1827 = vrot.slane %v1813, %v1826
        %v1828 = vcombine.low %v1790, %v1806
        %v1829 = vcombine.high %v1790, %v1806
        %v1831 = vunpack.c.l.s4 1983009808
        %v1832 = vunpack.c.0.s8 %v1831
        %v1833 = vlaneseq
        %v1834 = vshrl.u32 %v1833, 7
        %v1835 = vsub.s32 %v1832, %v1834
        %v1836 = vrot.slane %v1828, %v1835
        %v1838 = vunpack.c.l.s4 1983009808
        %v1839 = vunpack.c.0.s8 %v1838
        %v1840 = vlaneseq
        %v1841 = vshrl.u32 %v1840, 7
        %v1842 = vsub.s32 %v1839, %v1841
        %v1843 = vrot.slane %v1829, %v1842
        %v1844 = vcombine.low %v1820, %v1836
        %v1845 = vcombine.high %v1820, %v1836
        %v1847 = vunpack.c.l.s4 1934713408
        %v1848 = vunpack.c.0.s8 %v1847
        %v1849 = vlaneseq
        %v1850 = vshrl.u32 %v1849, 7
        %v1851 = vsub.s32 %v1848, %v1850
        %v1852 = vrot.slane %v1844, %v1851
        %v1854 = vunpack.c.l.s4 1934713408
        %v1855 = vunpack.c.0.s8 %v1854
        %v1856 = vlaneseq
        %v1857 = vshrl.u32 %v1856, 7
        %v1858 = vsub.s32 %v1855, %v1857
        %v1859 = vrot.slane %v1845, %v1858
        %v1860 = vcombine.low %v1827, %v1843
        %v1861 = vcombine.high %v1827, %v1843
        %v1863 = vunpack.c.l.s4 1934713408
        %v1864 = vunpack.c.0.s8 %v1863
        %v1865 = vlaneseq
        %v1866 = vshrl.u32 %v1865, 7
        %v1867 = vsub.s32 %v1864, %v1866
        %v1868 = vrot.slane %v1860, %v1867
        %v1870 = vunpack.c.l.s4 1934713408
        %v1871 = vunpack.c.0.s8 %v1870
        %v1872 = vlaneseq
        %v1873 = vshrl.u32 %v1872, 7
        %v1874 = vsub.s32 %v1871, %v1873
        %v1875 = vrot.slane %v1861, %v1874
        %v1876 = vcombine.high %v1852, 0
        %v1877 = vcombine.high %v1859, 0
        %v1878 = vcombine.high %v1868, 0
        %v1879 = vcombine.high %v1875, 0
        %v1880 = vcombine.low %v1786, %v1802
        %v1881 = vcombine.high %v1786, %v1802
        %v1883 = vunpack.c.l.s4 1983009808
        %v1884 = vunpack.c.0.s8 %v1883
        %v1885 = vlaneseq
        %v1886 = vshrl.u32 %v1885, 7
        %v1887 = vsub.s32 %v1884, %v1886
        %v1888 = vrot.slane %v1880, %v1887
        %v1890 = vunpack.c.l.s4 1983009808
        %v1891 = vunpack.c.0.s8 %v1890
        %v1892 = vlaneseq
        %v1893 = vshrl.u32 %v1892, 7
        %v1894 = vsub.s32 %v1891, %v1893
        %v1895 = vrot.slane %v1881, %v1894
        %v1896 = vcombine.low %v1794, %v1810
        %v1897 = vcombine.high %v1794, %v1810
        %v1899 = vunpack.c.l.s4 1983009808
        %v1900 = vunpack.c.0.s8 %v1899
        %v1901 = vlaneseq
        %v1902 = vshrl.u32 %v1901, 7
        %v1903 = vsub.s32 %v1900, %v1902
        %v1904 = vrot.slane %v1896, %v1903
        %v1906 = vunpack.c.l.s4 1983009808
        %v1907 = vunpack.c.0.s8 %v1906
        %v1908 = vlaneseq
        %v1909 = vshrl.u32 %v1908, 7
        %v1910 = vsub.s32 %v1907, %v1909
        %v1911 = vrot.slane %v1897, %v1910
        %v1912 = vcombine.low %v1888, %v1904
        %v1913 = vcombine.high %v1888, %v1904
        %v1915 = vunpack.c.l.s4 1934713408
        %v1916 = vunpack.c.0.s8 %v1915
        %v1917 = vlaneseq
        %v1918 = vshrl.u32 %v1917, 7
        %v1919 = vsub.s32 %v1916, %v1918
        %v1920 = vrot.slane %v1912, %v1919
        %v1922 = vunpack.c.l.s4 1934713408
        %v1923 = vunpack.c.0.s8 %v1922
        %v1924 = vlaneseq
        %v1925 = vshrl.u32 %v1924, 7
        %v1926 = vsub.s32 %v1923, %v1925
        %v1927 = vrot.slane %v1913, %v1926
        %v1928 = vcombine.low %v1895, %v1911
        %v1929 = vcombine.high %v1895, %v1911
        %v1931 = vunpack.c.l.s4 1934713408
        %v1932 = vunpack.c.0.s8 %v1931
        %v1933 = vlaneseq
        %v1934 = vshrl.u32 %v1933, 7
        %v1935 = vsub.s32 %v1932, %v1934
        %v1936 = vrot.slane %v1928, %v1935
        %v1938 = vunpack.c.l.s4 1934713408
        %v1939 = vunpack.c.0.s8 %v1938
        %v1940 = vlaneseq
        %v1941 = vshrl.u32 %v1940, 7
        %v1942 = vsub.s32 %v1939, %v1941
        %v1943 = vrot.slane %v1929, %v1942
        %v1944 = vcombine.high %v1920, 0
        %v1945 = vcombine.high %v1927, 0
        %v1946 = vcombine.high %v1936, 0
        %v1947 = vcombine.high %v1943, 0
        %1948 = vxpose.xlu0.c.b16.start [1/8] %v1852, 128
        %1949 = vxpose.xlu0.c.b16.cont [2/8] 0, 128
        %1950 = vxpose.xlu0.c.b16.cont [3/8] 0, 128
        %1951 = vxpose.xlu0.c.b16.cont [4/8] 0, 128
        %1952 = vxpose.xlu0.c.b16.cont [5/8] 0, 128
        %1953 = vxpose.xlu0.c.b16.cont [6/8] 0, 128
        %1954 = vxpose.xlu0.c.b16.cont [7/8] 0, 128
        %1955 = vxpose.xlu0.c.b16.end [8/8] 0, 128
        %v1956 = vpop.trf.xlu0
        %v1957 = vpop.trf.xlu0
        %v1958 = vpop.trf.xlu0
        %v1959 = vpop.trf.xlu0
        %v1960 = vpop.trf.xlu0
        %v1961 = vpop.trf.xlu0
        %v1962 = vpop.trf.xlu0
        %v1963 = vpop.trf.xlu0
        %1964 = vxpose.xlu0.c.b16.start [1/8] %v1920, 128
        %1965 = vxpose.xlu0.c.b16.cont [2/8] 0, 128
        %1966 = vxpose.xlu0.c.b16.cont [3/8] 0, 128
        %1967 = vxpose.xlu0.c.b16.cont [4/8] 0, 128
        %1968 = vxpose.xlu0.c.b16.cont [5/8] 0, 128
        %1969 = vxpose.xlu0.c.b16.cont [6/8] 0, 128
        %1970 = vxpose.xlu0.c.b16.cont [7/8] 0, 128
        %1971 = vxpose.xlu0.c.b16.end [8/8] 0, 128
        %v1972 = vpop.trf.xlu0
        %v1973 = vpop.trf.xlu0
        %v1974 = vpop.trf.xlu0
        %v1975 = vpop.trf.xlu0
        %v1976 = vpop.trf.xlu0
        %v1977 = vpop.trf.xlu0
        %v1978 = vpop.trf.xlu0
        %v1979 = vpop.trf.xlu0
        %1980 = vxpose.xlu0.c.b16.start [1/8] %v1876, 128
        %1981 = vxpose.xlu0.c.b16.cont [2/8] 0, 128
        %1982 = vxpose.xlu0.c.b16.cont [3/8] 0, 128
        %1983 = vxpose.xlu0.c.b16.cont [4/8] 0, 128
        %1984 = vxpose.xlu0.c.b16.cont [5/8] 0, 128
        %1985 = vxpose.xlu0.c.b16.cont [6/8] 0, 128
        %1986 = vxpose.xlu0.c.b16.cont [7/8] 0, 128
        %1987 = vxpose.xlu0.c.b16.end [8/8] 0, 128
        %v1988 = vpop.trf.xlu0
        %v1989 = vpop.trf.xlu0
        %v1990 = vpop.trf.xlu0
        %v1991 = vpop.trf.xlu0
        %v1992 = vpop.trf.xlu0
        %v1993 = vpop.trf.xlu0
        %v1994 = vpop.trf.xlu0
        %v1995 = vpop.trf.xlu0
        %1996 = vxpose.xlu0.c.b16.start [1/8] %v1944, 128
        %1997 = vxpose.xlu0.c.b16.cont [2/8] 0, 128
        %1998 = vxpose.xlu0.c.b16.cont [3/8] 0, 128
        %1999 = vxpose.xlu0.c.b16.cont [4/8] 0, 128
        %2000 = vxpose.xlu0.c.b16.cont [5/8] 0, 128
        %2001 = vxpose.xlu0.c.b16.cont [6/8] 0, 128
        %2002 = vxpose.xlu0.c.b16.cont [7/8] 0, 128
        %2003 = vxpose.xlu0.c.b16.end [8/8] 0, 128
        %v2004 = vpop.trf.xlu0
        %v2005 = vpop.trf.xlu0
        %v2006 = vpop.trf.xlu0
        %v2007 = vpop.trf.xlu0
        %v2008 = vpop.trf.xlu0
        %v2009 = vpop.trf.xlu0
        %v2010 = vpop.trf.xlu0
        %v2011 = vpop.trf.xlu0
        %2012 = vxpose.xlu0.c.b16.start [1/8] %v1859, 128
        %2013 = vxpose.xlu0.c.b16.cont [2/8] 0, 128
        %2014 = vxpose.xlu0.c.b16.cont [3/8] 0, 128
        %2015 = vxpose.xlu0.c.b16.cont [4/8] 0, 128
        %2016 = vxpose.xlu0.c.b16.cont [5/8] 0, 128
        %2017 = vxpose.xlu0.c.b16.cont [6/8] 0, 128
        %2018 = vxpose.xlu0.c.b16.cont [7/8] 0, 128
        %2019 = vxpose.xlu0.c.b16.end [8/8] 0, 128
        %v2020 = vpop.trf.xlu0
        %v2021 = vpop.trf.xlu0
        %v2022 = vpop.trf.xlu0
        %v2023 = vpop.trf.xlu0
        %v2024 = vpop.trf.xlu0
        %v2025 = vpop.trf.xlu0
        %v2026 = vpop.trf.xlu0
        %v2027 = vpop.trf.xlu0
        %2028 = vxpose.xlu0.c.b16.start [1/8] %v1927, 128
        %2029 = vxpose.xlu0.c.b16.cont [2/8] 0, 128
        %2030 = vxpose.xlu0.c.b16.cont [3/8] 0, 128
        %2031 = vxpose.xlu0.c.b16.cont [4/8] 0, 128
        %2032 = vxpose.xlu0.c.b16.cont [5/8] 0, 128
        %2033 = vxpose.xlu0.c.b16.cont [6/8] 0, 128
        %2034 = vxpose.xlu0.c.b16.cont [7/8] 0, 128
        %2035 = vxpose.xlu0.c.b16.end [8/8] 0, 128
        %v2036 = vpop.trf.xlu0
        %v2037 = vpop.trf.xlu0
        %v2038 = vpop.trf.xlu0
        %v2039 = vpop.trf.xlu0
        %v2040 = vpop.trf.xlu0
        %v2041 = vpop.trf.xlu0
        %v2042 = vpop.trf.xlu0
        %v2043 = vpop.trf.xlu0
        %2044 = vxpose.xlu0.c.b16.start [1/8] %v1877, 128
        %2045 = vxpose.xlu0.c.b16.cont [2/8] 0, 128
        %2046 = vxpose.xlu0.c.b16.cont [3/8] 0, 128
        %2047 = vxpose.xlu0.c.b16.cont [4/8] 0, 128
        %2048 = vxpose.xlu0.c.b16.cont [5/8] 0, 128
        %2049 = vxpose.xlu0.c.b16.cont [6/8] 0, 128
        %2050 = vxpose.xlu0.c.b16.cont [7/8] 0, 128
        %2051 = vxpose.xlu0.c.b16.end [8/8] 0, 128
        %v2052 = vpop.trf.xlu0
        %v2053 = vpop.trf.xlu0
        %v2054 = vpop.trf.xlu0
        %v2055 = vpop.trf.xlu0
        %v2056 = vpop.trf.xlu0
        %v2057 = vpop.trf.xlu0
        %v2058 = vpop.trf.xlu0
        %v2059 = vpop.trf.xlu0
        %2060 = vxpose.xlu0.c.b16.start [1/8] %v1945, 128
        %2061 = vxpose.xlu0.c.b16.cont [2/8] 0, 128
        %2062 = vxpose.xlu0.c.b16.cont [3/8] 0, 128
        %2063 = vxpose.xlu0.c.b16.cont [4/8] 0, 128
        %2064 = vxpose.xlu0.c.b16.cont [5/8] 0, 128
        %2065 = vxpose.xlu0.c.b16.cont [6/8] 0, 128
        %2066 = vxpose.xlu0.c.b16.cont [7/8] 0, 128
        %2067 = vxpose.xlu0.c.b16.end [8/8] 0, 128
        %v2068 = vpop.trf.xlu0
        %v2069 = vpop.trf.xlu0
        %v2070 = vpop.trf.xlu0
        %v2071 = vpop.trf.xlu0
        %v2072 = vpop.trf.xlu0
        %v2073 = vpop.trf.xlu0
        %v2074 = vpop.trf.xlu0
        %v2075 = vpop.trf.xlu0
        %2076 = vxpose.xlu0.c.b16.start [1/8] %v1868, 128
        %2077 = vxpose.xlu0.c.b16.cont [2/8] 0, 128
        %2078 = vxpose.xlu0.c.b16.cont [3/8] 0, 128
        %2079 = vxpose.xlu0.c.b16.cont [4/8] 0, 128
        %2080 = vxpose.xlu0.c.b16.cont [5/8] 0, 128
        %2081 = vxpose.xlu0.c.b16.cont [6/8] 0, 128
        %2082 = vxpose.xlu0.c.b16.cont [7/8] 0, 128
        %2083 = vxpose.xlu0.c.b16.end [8/8] 0, 128
        %v2084 = vpop.trf.xlu0
        %v2085 = vpop.trf.xlu0
        %v2086 = vpop.trf.xlu0
        %v2087 = vpop.trf.xlu0
        %v2088 = vpop.trf.xlu0
        %v2089 = vpop.trf.xlu0
        %v2090 = vpop.trf.xlu0
        %v2091 = vpop.trf.xlu0
        %2092 = vxpose.xlu0.c.b16.start [1/8] %v1936, 128
        %2093 = vxpose.xlu0.c.b16.cont [2/8] 0, 128
        %2094 = vxpose.xlu0.c.b16.cont [3/8] 0, 128
        %2095 = vxpose.xlu0.c.b16.cont [4/8] 0, 128
        %2096 = vxpose.xlu0.c.b16.cont [5/8] 0, 128
        %2097 = vxpose.xlu0.c.b16.cont [6/8] 0, 128
        %2098 = vxpose.xlu0.c.b16.cont [7/8] 0, 128
        %2099 = vxpose.xlu0.c.b16.end [8/8] 0, 128
        %v2100 = vpop.trf.xlu0
        %v2101 = vpop.trf.xlu0
        %v2102 = vpop.trf.xlu0
        %v2103 = vpop.trf.xlu0
        %v2104 = vpop.trf.xlu0
        %v2105 = vpop.trf.xlu0
        %v2106 = vpop.trf.xlu0
        %v2107 = vpop.trf.xlu0
        %2108 = vxpose.xlu0.c.b16.start [1/8] %v1878, 128
        %2109 = vxpose.xlu0.c.b16.cont [2/8] 0, 128
        %2110 = vxpose.xlu0.c.b16.cont [3/8] 0, 128
        %2111 = vxpose.xlu0.c.b16.cont [4/8] 0, 128
        %2112 = vxpose.xlu0.c.b16.cont [5/8] 0, 128
        %2113 = vxpose.xlu0.c.b16.cont [6/8] 0, 128
        %2114 = vxpose.xlu0.c.b16.cont [7/8] 0, 128
        %2115 = vxpose.xlu0.c.b16.end [8/8] 0, 128
        %v2116 = vpop.trf.xlu0
        %v2117 = vpop.trf.xlu0
        %v2118 = vpop.trf.xlu0
        %v2119 = vpop.trf.xlu0
        %v2120 = vpop.trf.xlu0
        %v2121 = vpop.trf.xlu0
        %v2122 = vpop.trf.xlu0
        %v2123 = vpop.trf.xlu0
        %2124 = vxpose.xlu0.c.b16.start [1/8] %v1946, 128
        %2125 = vxpose.xlu0.c.b16.cont [2/8] 0, 128
        %2126 = vxpose.xlu0.c.b16.cont [3/8] 0, 128
        %2127 = vxpose.xlu0.c.b16.cont [4/8] 0, 128
        %2128 = vxpose.xlu0.c.b16.cont [5/8] 0, 128
        %2129 = vxpose.xlu0.c.b16.cont [6/8] 0, 128
        %2130 = vxpose.xlu0.c.b16.cont [7/8] 0, 128
        %2131 = vxpose.xlu0.c.b16.end [8/8] 0, 128
        %v2132 = vpop.trf.xlu0
        %v2133 = vpop.trf.xlu0
        %v2134 = vpop.trf.xlu0
        %v2135 = vpop.trf.xlu0
        %v2136 = vpop.trf.xlu0
        %v2137 = vpop.trf.xlu0
        %v2138 = vpop.trf.xlu0
        %v2139 = vpop.trf.xlu0
        %2140 = vxpose.xlu0.c.b16.start [1/8] %v1875, 128
        %2141 = vxpose.xlu0.c.b16.cont [2/8] 0, 128
        %2142 = vxpose.xlu0.c.b16.cont [3/8] 0, 128
        %2143 = vxpose.xlu0.c.b16.cont [4/8] 0, 128
        %2144 = vxpose.xlu0.c.b16.cont [5/8] 0, 128
        %2145 = vxpose.xlu0.c.b16.cont [6/8] 0, 128
        %2146 = vxpose.xlu0.c.b16.cont [7/8] 0, 128
        %2147 = vxpose.xlu0.c.b16.end [8/8] 0, 128
        %v2148 = vpop.trf.xlu0
        %v2149 = vpop.trf.xlu0
        %v2150 = vpop.trf.xlu0
        %v2151 = vpop.trf.xlu0
        %v2152 = vpop.trf.xlu0
        %v2153 = vpop.trf.xlu0
        %v2154 = vpop.trf.xlu0
        %v2155 = vpop.trf.xlu0
        %2156 = vxpose.xlu0.c.b16.start [1/8] %v1943, 128
        %2157 = vxpose.xlu0.c.b16.cont [2/8] 0, 128
        %2158 = vxpose.xlu0.c.b16.cont [3/8] 0, 128
        %2159 = vxpose.xlu0.c.b16.cont [4/8] 0, 128
        %2160 = vxpose.xlu0.c.b16.cont [5/8] 0, 128
        %2161 = vxpose.xlu0.c.b16.cont [6/8] 0, 128
        %2162 = vxpose.xlu0.c.b16.cont [7/8] 0, 128
        %2163 = vxpose.xlu0.c.b16.end [8/8] 0, 128
        %v2164 = vpop.trf.xlu0
        %v2165 = vpop.trf.xlu0
        %v2166 = vpop.trf.xlu0
        %v2167 = vpop.trf.xlu0
        %v2168 = vpop.trf.xlu0
        %v2169 = vpop.trf.xlu0
        %v2170 = vpop.trf.xlu0
        %v2171 = vpop.trf.xlu0
        %2172 = vxpose.xlu0.c.b16.start [1/8] %v1879, 128
        %2173 = vxpose.xlu0.c.b16.cont [2/8] 0, 128
        %2174 = vxpose.xlu0.c.b16.cont [3/8] 0, 128
        %2175 = vxpose.xlu0.c.b16.cont [4/8] 0, 128
        %2176 = vxpose.xlu0.c.b16.cont [5/8] 0, 128
        %2177 = vxpose.xlu0.c.b16.cont [6/8] 0, 128
        %2178 = vxpose.xlu0.c.b16.cont [7/8] 0, 128
        %2179 = vxpose.xlu0.c.b16.end [8/8] 0, 128
        %v2180 = vpop.trf.xlu0
        %v2181 = vpop.trf.xlu0
        %v2182 = vpop.trf.xlu0
        %v2183 = vpop.trf.xlu0
        %v2184 = vpop.trf.xlu0
        %v2185 = vpop.trf.xlu0
        %v2186 = vpop.trf.xlu0
        %v2187 = vpop.trf.xlu0
        %2188 = vxpose.xlu0.c.b16.start [1/8] %v1947, 128
        %2189 = vxpose.xlu0.c.b16.cont [2/8] 0, 128
        %2190 = vxpose.xlu0.c.b16.cont [3/8] 0, 128
        %2191 = vxpose.xlu0.c.b16.cont [4/8] 0, 128
        %2192 = vxpose.xlu0.c.b16.cont [5/8] 0, 128
        %2193 = vxpose.xlu0.c.b16.cont [6/8] 0, 128
        %2194 = vxpose.xlu0.c.b16.cont [7/8] 0, 128
        %2195 = vxpose.xlu0.c.b16.end [8/8] 0, 128
        %v2196 = vpop.trf.xlu0
        %v2197 = vpop.trf.xlu0
        %v2198 = vpop.trf.xlu0
        %v2199 = vpop.trf.xlu0
        %v2200 = vpop.trf.xlu0
        %v2201 = vpop.trf.xlu0
        %v2202 = vpop.trf.xlu0
        %v2203 = vpop.trf.xlu0
        %v2204 = vcombine.low %v1956, %v2020
        %v2206 = vunpack.c.l.s4 1983009808
        %v2207 = vunpack.c.0.s8 %v2206
        %v2208 = vlaneseq
        %v2209 = vshrl.u32 %v2208, 7
        %v2210 = vsub.s32 %v2207, %v2209
        %v2211 = vrot.slane %v2204, %v2210
        %v2212 = vcombine.low %v1988, %v2052
        %v2214 = vunpack.c.l.s4 1983009808
        %v2215 = vunpack.c.0.s8 %v2214
        %v2216 = vlaneseq
        %v2217 = vshrl.u32 %v2216, 7
        %v2218 = vsub.s32 %v2215, %v2217
        %v2219 = vrot.slane %v2212, %v2218
        %v2220 = vcombine.low %v2084, %v2148
        %v2222 = vunpack.c.l.s4 1983009808
        %v2223 = vunpack.c.0.s8 %v2222
        %v2224 = vlaneseq
        %v2225 = vshrl.u32 %v2224, 7
        %v2226 = vsub.s32 %v2223, %v2225
        %v2227 = vrot.slane %v2220, %v2226
        %v2228 = vcombine.low %v2116, %v2180
        %v2230 = vunpack.c.l.s4 1983009808
        %v2231 = vunpack.c.0.s8 %v2230
        %v2232 = vlaneseq
        %v2233 = vshrl.u32 %v2232, 7
        %v2234 = vsub.s32 %v2231, %v2233
        %v2235 = vrot.slane %v2228, %v2234
        %v2236 = vcombine.low %v2211, %v2219
        %v2238 = vunpack.c.l.s4 1934713408
        %v2239 = vunpack.c.0.s8 %v2238
        %v2240 = vlaneseq
        %v2241 = vshrl.u32 %v2240, 7
        %v2242 = vsub.s32 %v2239, %v2241
        %v2243 = vrot.slane %v2236, %v2242
        %v2244 = vcombine.low %v2227, %v2235
        %v2246 = vunpack.c.l.s4 1934713408
        %v2247 = vunpack.c.0.s8 %v2246
        %v2248 = vlaneseq
        %v2249 = vshrl.u32 %v2248, 7
        %v2250 = vsub.s32 %v2247, %v2249
        %v2251 = vrot.slane %v2244, %v2250
        %v2252 = vcombine.low %v2243, %v2251
        %v2253 = vcombine.low %v1972, %v2036
        %v2255 = vunpack.c.l.s4 1983009808
        %v2256 = vunpack.c.0.s8 %v2255
        %v2257 = vlaneseq
        %v2258 = vshrl.u32 %v2257, 7
        %v2259 = vsub.s32 %v2256, %v2258
        %v2260 = vrot.slane %v2253, %v2259
        %v2261 = vcombine.low %v2004, %v2068
        %v2263 = vunpack.c.l.s4 1983009808
        %v2264 = vunpack.c.0.s8 %v2263
        %v2265 = vlaneseq
        %v2266 = vshrl.u32 %v2265, 7
        %v2267 = vsub.s32 %v2264, %v2266
        %v2268 = vrot.slane %v2261, %v2267
        %v2269 = vcombine.low %v2100, %v2164
        %v2271 = vunpack.c.l.s4 1983009808
        %v2272 = vunpack.c.0.s8 %v2271
        %v2273 = vlaneseq
        %v2274 = vshrl.u32 %v2273, 7
        %v2275 = vsub.s32 %v2272, %v2274
        %v2276 = vrot.slane %v2269, %v2275
        %v2277 = vcombine.low %v2132, %v2196
        %v2279 = vunpack.c.l.s4 1983009808
        %v2280 = vunpack.c.0.s8 %v2279
        %v2281 = vlaneseq
        %v2282 = vshrl.u32 %v2281, 7
        %v2283 = vsub.s32 %v2280, %v2282
        %v2284 = vrot.slane %v2277, %v2283
        %v2285 = vcombine.low %v2260, %v2268
        %v2287 = vunpack.c.l.s4 1934713408
        %v2288 = vunpack.c.0.s8 %v2287
        %v2289 = vlaneseq
        %v2290 = vshrl.u32 %v2289, 7
        %v2291 = vsub.s32 %v2288, %v2290
        %v2292 = vrot.slane %v2285, %v2291
        %v2293 = vcombine.low %v2276, %v2284
        %v2295 = vunpack.c.l.s4 1934713408
        %v2296 = vunpack.c.0.s8 %v2295
        %v2297 = vlaneseq
        %v2298 = vshrl.u32 %v2297, 7
        %v2299 = vsub.s32 %v2296, %v2298
        %v2300 = vrot.slane %v2293, %v2299
        %v2301 = vcombine.low %v2292, %v2300
        %v2304 = vpack.i.b16 %v2301, %v2252
        %v2306 = vshrl.u32 %v2252, 16
        %v2307 = vshrl.u32 %v2301, 16
        %v2308 = vpack.i.b16 %v2307, %v2306
        %vm2310 = vcmask 130048
        %v2312 = vsel %vm2310, %v1648, 0
        %2314 = vmatprep.subr.bf16.mxu0 0
        %2315 = vmatpush1.bf16.msra.mxu0 %v2304
        %2316 = vmatprep.subr.bf16.mxu0 0
        %2317 = vmatpush1.bf16.msra.mxu0 0
        %2318 = vmatprep.subr.bf16.mxu0 0
        %2319 = vmatpush1.bf16.msra.mxu0 0
        %2320 = vmatprep.subr.bf16.mxu0 0
        %2321 = vmatpush1.bf16.msra.mxu0 0
        %2322 = vmatprep.subr.bf16.mxu0 0
        %2323 = vmatpush1.bf16.msra.mxu0 0
        %2324 = vmatprep.subr.bf16.mxu0 0
        %2325 = vmatpush1.bf16.msra.mxu0 0
        %2326 = vmatprep.subr.bf16.mxu0 0
        %2327 = vmatpush1.bf16.msra.mxu0 0
        %2328 = vmatprep.subr.bf16.mxu0 0
        %2329 = vmatpush1.bf16.msra.mxu0 0
        %2330 = vmatprep.subr.bf16.mxu0 0
        %2331 = vmatpush1.bf16.msra.mxu0 0
        %2332 = vmatprep.subr.bf16.mxu0 0
        %2333 = vmatpush1.bf16.msra.mxu0 0
        %2334 = vmatprep.subr.bf16.mxu0 0
        %2335 = vmatpush1.bf16.msra.mxu0 0
        %2336 = vmatprep.subr.bf16.mxu0 0
        %2337 = vmatpush1.bf16.msra.mxu0 0
        %2338 = vmatprep.subr.bf16.mxu0 0
        %2339 = vmatpush1.bf16.msra.mxu0 0
        %2340 = vmatprep.subr.bf16.mxu0 0
        %2341 = vmatpush1.bf16.msra.mxu0 0
        %2342 = vmatprep.subr.bf16.mxu0 0
        %2343 = vmatpush1.bf16.msra.mxu0 0
        %2344 = vmatprep.subr.bf16.mxu0 0
        %2345 = vmatpush1.bf16.msra.mxu0 0
        %2346 = vmatprep.mubr.bf16.mxu0 0
        %2347 = vmatmul.mubr.bf16.gmra.mrb[0].mxu0 %v2312
        %v2348 = vpop.f32.mrb[0].mxu0
        %v2349 = vadd.f32 %v1596, %v2348
        %v2350 = vpop.f32.mrb[0].mxu0
        %v2351 = vpop.f32.mrb[0].mxu0
        %v2352 = vpop.f32.mrb[0].mxu0
        %2353 = vdwg.mxu0
        %v2355 = vsel %vm2310, %v1651, 0
        %2357 = vmatprep.subr.bf16.mxu0 0
        %2358 = vmatpush1.bf16.msra.mxu0 %v2308
        %2359 = vmatprep.subr.bf16.mxu0 0
        %2360 = vmatpush1.bf16.msra.mxu0 0
        %2361 = vmatprep.subr.bf16.mxu0 0
        %2362 = vmatpush1.bf16.msra.mxu0 0
        %2363 = vmatprep.subr.bf16.mxu0 0
        %2364 = vmatpush1.bf16.msra.mxu0 0
        %2365 = vmatprep.subr.bf16.mxu0 0
        %2366 = vmatpush1.bf16.msra.mxu0 0
        %2367 = vmatprep.subr.bf16.mxu0 0
        %2368 = vmatpush1.bf16.msra.mxu0 0
        %2369 = vmatprep.subr.bf16.mxu0 0
        %2370 = vmatpush1.bf16.msra.mxu0 0
        %2371 = vmatprep.subr.bf16.mxu0 0
        %2372 = vmatpush1.bf16.msra.mxu0 0
        %2373 = vmatprep.subr.bf16.mxu0 0
        %2374 = vmatpush1.bf16.msra.mxu0 0
        %2375 = vmatprep.subr.bf16.mxu0 0
        %2376 = vmatpush1.bf16.msra.mxu0 0
        %2377 = vmatprep.subr.bf16.mxu0 0
        %2378 = vmatpush1.bf16.msra.mxu0 0
        %2379 = vmatprep.subr.bf16.mxu0 0
        %2380 = vmatpush1.bf16.msra.mxu0 0
        %2381 = vmatprep.subr.bf16.mxu0 0
        %2382 = vmatpush1.bf16.msra.mxu0 0
        %2383 = vmatprep.subr.bf16.mxu0 0
        %2384 = vmatpush1.bf16.msra.mxu0 0
        %2385 = vmatprep.subr.bf16.mxu0 0
        %2386 = vmatpush1.bf16.msra.mxu0 0
        %2387 = vmatprep.subr.bf16.mxu0 0
        %2388 = vmatpush1.bf16.msra.mxu0 0
        %2389 = vmatprep.mubr.bf16.mxu0 0
        %2390 = vmatmul.mubr.bf16.gmra.mrb[0].mxu0 %v2355
        %v2391 = vpop.f32.mrb[0].mxu0
        %v2392 = vadd.f32 %v1596, %v2391
        %v2393 = vpop.f32.mrb[0].mxu0
        %v2394 = vpop.f32.mrb[0].mxu0
        %v2395 = vpop.f32.mrb[0].mxu0
        %2396 = vdwg.mxu0
        %vm2397 = vcmask 64512
        %v2398 = vsel %vm2397, %v2349, -inf
        %2399 = vmax.xlane.f32.xlu0 %v2398
        %v2400 = vpop.xlane.xlu0 %2399
        %v2401 = vsel %vm2397, %v2392, -inf
        %2402 = vmax.xlane.f32.xlu0 %v2401
        %v2403 = vpop.xlane.xlu0 %2402
        %v2404 = vsub.f32 %v2349, %v2400
        %v2405 = vsub.f32 %v2392, %v2403
        %v2406 = vmul.f32 %v2404, 1.442695
        %v2407 = vpow.pop %v2406
        %v2408 = vmul.f32 %v2405, 1.442695
        %v2409 = vpow.pop %v2408
        %v2410 = vsel %vm2397, %v2407, 0.0
        %2411 = vadd.xlane.f32.xlu0 %v2410
        %v2412 = vpop.xlane.xlu0 %2411
        %v2413 = vsel %vm2397, %v2409, 0.0
        %2414 = vadd.xlane.f32.xlu0 %v2413
        %v2415 = vpop.xlane.xlu0 %2414
        %v2416 = vrcp.pop %v2412
        %v2417 = vrcp.pop %v2415
        %v2418 = vmul.f32 %v2407, %v2416
        %v2419 = vmul.f32 %v2409, %v2417
        %v2420 = vpack.c.bf16 %v2418, %v2418
        %v2421 = vpack.c.bf16 %v2419, %v2419
        %2422 = vxpose.xlu0.c.b16.start [1/8] %v1583, 128
        %2423 = vxpose.xlu0.c.b16.cont [2/8] 0, 128
        %2424 = vxpose.xlu0.c.b16.cont [3/8] 0, 128
        %2425 = vxpose.xlu0.c.b16.cont [4/8] 0, 128
        %2426 = vxpose.xlu0.c.b16.cont [5/8] 0, 128
        %2427 = vxpose.xlu0.c.b16.cont [6/8] 0, 128
        %2428 = vxpose.xlu0.c.b16.cont [7/8] 0, 128
        %2429 = vxpose.xlu0.c.b16.end [8/8] 0, 128
        %v2430 = vpop.trf.xlu0
        %v2431 = vpop.trf.xlu0
        %v2432 = vpop.trf.xlu0
        %v2433 = vpop.trf.xlu0
        %v2434 = vpop.trf.xlu0
        %v2435 = vpop.trf.xlu0
        %v2436 = vpop.trf.xlu0
        %v2437 = vpop.trf.xlu0
        %2438 = vxpose.xlu0.c.b16.start [1/8] %v1584, 128
        %2439 = vxpose.xlu0.c.b16.cont [2/8] 0, 128
        %2440 = vxpose.xlu0.c.b16.cont [3/8] 0, 128
        %2441 = vxpose.xlu0.c.b16.cont [4/8] 0, 128
        %2442 = vxpose.xlu0.c.b16.cont [5/8] 0, 128
        %2443 = vxpose.xlu0.c.b16.cont [6/8] 0, 128
        %2444 = vxpose.xlu0.c.b16.cont [7/8] 0, 128
        %2445 = vxpose.xlu0.c.b16.end [8/8] 0, 128
        %v2446 = vpop.trf.xlu0
        %v2447 = vpop.trf.xlu0
        %v2448 = vpop.trf.xlu0
        %v2449 = vpop.trf.xlu0
        %v2450 = vpop.trf.xlu0
        %v2451 = vpop.trf.xlu0
        %v2452 = vpop.trf.xlu0
        %v2453 = vpop.trf.xlu0
        %2454 = vxpose.xlu0.c.b16.start [1/8] %v1585, 128
        %2455 = vxpose.xlu0.c.b16.cont [2/8] 0, 128
        %2456 = vxpose.xlu0.c.b16.cont [3/8] 0, 128
        %2457 = vxpose.xlu0.c.b16.cont [4/8] 0, 128
        %2458 = vxpose.xlu0.c.b16.cont [5/8] 0, 128
        %2459 = vxpose.xlu0.c.b16.cont [6/8] 0, 128
        %2460 = vxpose.xlu0.c.b16.cont [7/8] 0, 128
        %2461 = vxpose.xlu0.c.b16.end [8/8] 0, 128
        %v2462 = vpop.trf.xlu0
        %v2463 = vpop.trf.xlu0
        %v2464 = vpop.trf.xlu0
        %v2465 = vpop.trf.xlu0
        %v2466 = vpop.trf.xlu0
        %v2467 = vpop.trf.xlu0
        %v2468 = vpop.trf.xlu0
        %v2469 = vpop.trf.xlu0
        %2470 = vxpose.xlu0.c.b16.start [1/8] %v1586, 128
        %2471 = vxpose.xlu0.c.b16.cont [2/8] 0, 128
        %2472 = vxpose.xlu0.c.b16.cont [3/8] 0, 128
        %2473 = vxpose.xlu0.c.b16.cont [4/8] 0, 128
        %2474 = vxpose.xlu0.c.b16.cont [5/8] 0, 128
        %2475 = vxpose.xlu0.c.b16.cont [6/8] 0, 128
        %2476 = vxpose.xlu0.c.b16.cont [7/8] 0, 128
        %2477 = vxpose.xlu0.c.b16.end [8/8] 0, 128
        %v2478 = vpop.trf.xlu0
        %v2479 = vpop.trf.xlu0
        %v2480 = vpop.trf.xlu0
        %v2481 = vpop.trf.xlu0
        %v2482 = vpop.trf.xlu0
        %v2483 = vpop.trf.xlu0
        %v2484 = vpop.trf.xlu0
        %v2485 = vpop.trf.xlu0
        %2486 = vxpose.xlu0.c.b16.start [1/8] %v1587, 128
        %2487 = vxpose.xlu0.c.b16.cont [2/8] 0, 128
        %2488 = vxpose.xlu0.c.b16.cont [3/8] 0, 128
        %2489 = vxpose.xlu0.c.b16.cont [4/8] 0, 128
        %2490 = vxpose.xlu0.c.b16.cont [5/8] 0, 128
        %2491 = vxpose.xlu0.c.b16.cont [6/8] 0, 128
        %2492 = vxpose.xlu0.c.b16.cont [7/8] 0, 128
        %2493 = vxpose.xlu0.c.b16.end [8/8] 0, 128
        %v2494 = vpop.trf.xlu0
        %v2495 = vpop.trf.xlu0
        %v2496 = vpop.trf.xlu0
        %v2497 = vpop.trf.xlu0
        %v2498 = vpop.trf.xlu0
        %v2499 = vpop.trf.xlu0
        %v2500 = vpop.trf.xlu0
        %v2501 = vpop.trf.xlu0
        %2502 = vxpose.xlu0.c.b16.start [1/8] %v1588, 128
        %2503 = vxpose.xlu0.c.b16.cont [2/8] 0, 128
        %2504 = vxpose.xlu0.c.b16.cont [3/8] 0, 128
        %2505 = vxpose.xlu0.c.b16.cont [4/8] 0, 128
        %2506 = vxpose.xlu0.c.b16.cont [5/8] 0, 128
        %2507 = vxpose.xlu0.c.b16.cont [6/8] 0, 128
        %2508 = vxpose.xlu0.c.b16.cont [7/8] 0, 128
        %2509 = vxpose.xlu0.c.b16.end [8/8] 0, 128
        %v2510 = vpop.trf.xlu0
        %v2511 = vpop.trf.xlu0
        %v2512 = vpop.trf.xlu0
        %v2513 = vpop.trf.xlu0
        %v2514 = vpop.trf.xlu0
        %v2515 = vpop.trf.xlu0
        %v2516 = vpop.trf.xlu0
        %v2517 = vpop.trf.xlu0
        %2518 = vxpose.xlu0.c.b16.start [1/8] %v1589, 128
        %2519 = vxpose.xlu0.c.b16.cont [2/8] 0, 128
        %2520 = vxpose.xlu0.c.b16.cont [3/8] 0, 128
        %2521 = vxpose.xlu0.c.b16.cont [4/8] 0, 128
        %2522 = vxpose.xlu0.c.b16.cont [5/8] 0, 128
        %2523 = vxpose.xlu0.c.b16.cont [6/8] 0, 128
        %2524 = vxpose.xlu0.c.b16.cont [7/8] 0, 128
        %2525 = vxpose.xlu0.c.b16.end [8/8] 0, 128
        %v2526 = vpop.trf.xlu0
        %v2527 = vpop.trf.xlu0
        %v2528 = vpop.trf.xlu0
        %v2529 = vpop.trf.xlu0
        %v2530 = vpop.trf.xlu0
        %v2531 = vpop.trf.xlu0
        %v2532 = vpop.trf.xlu0
        %v2533 = vpop.trf.xlu0
        %2534 = vxpose.xlu0.c.b16.start [1/8] %v1590, 128
        %2535 = vxpose.xlu0.c.b16.cont [2/8] 0, 128
        %2536 = vxpose.xlu0.c.b16.cont [3/8] 0, 128
        %2537 = vxpose.xlu0.c.b16.cont [4/8] 0, 128
        %2538 = vxpose.xlu0.c.b16.cont [5/8] 0, 128
        %2539 = vxpose.xlu0.c.b16.cont [6/8] 0, 128
        %2540 = vxpose.xlu0.c.b16.cont [7/8] 0, 128
        %2541 = vxpose.xlu0.c.b16.end [8/8] 0, 128
        %v2542 = vpop.trf.xlu0
        %v2543 = vpop.trf.xlu0
        %v2544 = vpop.trf.xlu0
        %v2545 = vpop.trf.xlu0
        %v2546 = vpop.trf.xlu0
        %v2547 = vpop.trf.xlu0
        %v2548 = vpop.trf.xlu0
        %v2549 = vpop.trf.xlu0
        %v2552 = vpack.i.b16 %v2446, %v2430
        %v2554 = vshrl.u32 %v2430, 16
        %v2555 = vshrl.u32 %v2446, 16
        %v2556 = vpack.i.b16 %v2555, %v2554
        %v2560 = vpack.i.b16 %v2478, %v2462
        %v2562 = vshrl.u32 %v2462, 16
        %v2563 = vshrl.u32 %v2478, 16
        %v2564 = vpack.i.b16 %v2563, %v2562
        %v2568 = vpack.i.b16 %v2510, %v2494
        %v2570 = vshrl.u32 %v2494, 16
        %v2571 = vshrl.u32 %v2510, 16
        %v2572 = vpack.i.b16 %v2571, %v2570
        %v2576 = vpack.i.b16 %v2542, %v2526
        %v2578 = vshrl.u32 %v2526, 16
        %v2579 = vshrl.u32 %v2542, 16
        %v2580 = vpack.i.b16 %v2579, %v2578
        %v2582 = vcombine.low %v2552, %v2568
        %v2583 = vcombine.high %v2552, %v2568
        %v2585 = vunpack.c.l.s4 1983009808
        %v2586 = vunpack.c.0.s8 %v2585
        %v2587 = vlaneseq
        %v2588 = vshrl.u32 %v2587, 7
        %v2589 = vsub.s32 %v2586, %v2588
        %v2590 = vrot.slane %v2582, %v2589
        %v2592 = vunpack.c.l.s4 1983009808
        %v2593 = vunpack.c.0.s8 %v2592
        %v2594 = vlaneseq
        %v2595 = vshrl.u32 %v2594, 7
        %v2596 = vsub.s32 %v2593, %v2595
        %v2597 = vrot.slane %v2583, %v2596
        %v2598 = vcombine.low %v2560, %v2576
        %v2599 = vcombine.high %v2560, %v2576
        %v2601 = vunpack.c.l.s4 1983009808
        %v2602 = vunpack.c.0.s8 %v2601
        %v2603 = vlaneseq
        %v2604 = vshrl.u32 %v2603, 7
        %v2605 = vsub.s32 %v2602, %v2604
        %v2606 = vrot.slane %v2598, %v2605
        %v2608 = vunpack.c.l.s4 1983009808
        %v2609 = vunpack.c.0.s8 %v2608
        %v2610 = vlaneseq
        %v2611 = vshrl.u32 %v2610, 7
        %v2612 = vsub.s32 %v2609, %v2611
        %v2613 = vrot.slane %v2599, %v2612
        %v2614 = vcombine.low %v2590, %v2606
        %v2615 = vcombine.high %v2590, %v2606
        %v2617 = vunpack.c.l.s4 1934713408
        %v2618 = vunpack.c.0.s8 %v2617
        %v2619 = vlaneseq
        %v2620 = vshrl.u32 %v2619, 7
        %v2621 = vsub.s32 %v2618, %v2620
        %v2622 = vrot.slane %v2614, %v2621
        %v2624 = vunpack.c.l.s4 1934713408
        %v2625 = vunpack.c.0.s8 %v2624
        %v2626 = vlaneseq
        %v2627 = vshrl.u32 %v2626, 7
        %v2628 = vsub.s32 %v2625, %v2627
        %v2629 = vrot.slane %v2615, %v2628
        %v2630 = vcombine.low %v2597, %v2613
        %v2631 = vcombine.high %v2597, %v2613
        %v2633 = vunpack.c.l.s4 1934713408
        %v2634 = vunpack.c.0.s8 %v2633
        %v2635 = vlaneseq
        %v2636 = vshrl.u32 %v2635, 7
        %v2637 = vsub.s32 %v2634, %v2636
        %v2638 = vrot.slane %v2630, %v2637
        %v2640 = vunpack.c.l.s4 1934713408
        %v2641 = vunpack.c.0.s8 %v2640
        %v2642 = vlaneseq
        %v2643 = vshrl.u32 %v2642, 7
        %v2644 = vsub.s32 %v2641, %v2643
        %v2645 = vrot.slane %v2631, %v2644
        %v2646 = vcombine.high %v2622, 0
        %v2647 = vcombine.high %v2629, 0
        %v2648 = vcombine.high %v2638, 0
        %v2649 = vcombine.high %v2645, 0
        %v2650 = vcombine.low %v2556, %v2572
        %v2651 = vcombine.high %v2556, %v2572
        %v2653 = vunpack.c.l.s4 1983009808
        %v2654 = vunpack.c.0.s8 %v2653
        %v2655 = vlaneseq
        %v2656 = vshrl.u32 %v2655, 7
        %v2657 = vsub.s32 %v2654, %v2656
        %v2658 = vrot.slane %v2650, %v2657
        %v2660 = vunpack.c.l.s4 1983009808
        %v2661 = vunpack.c.0.s8 %v2660
        %v2662 = vlaneseq
        %v2663 = vshrl.u32 %v2662, 7
        %v2664 = vsub.s32 %v2661, %v2663
        %v2665 = vrot.slane %v2651, %v2664
        %v2666 = vcombine.low %v2564, %v2580
        %v2667 = vcombine.high %v2564, %v2580
        %v2669 = vunpack.c.l.s4 1983009808
        %v2670 = vunpack.c.0.s8 %v2669
        %v2671 = vlaneseq
        %v2672 = vshrl.u32 %v2671, 7
        %v2673 = vsub.s32 %v2670, %v2672
        %v2674 = vrot.slane %v2666, %v2673
        %v2676 = vunpack.c.l.s4 1983009808
        %v2677 = vunpack.c.0.s8 %v2676
        %v2678 = vlaneseq
        %v2679 = vshrl.u32 %v2678, 7
        %v2680 = vsub.s32 %v2677, %v2679
        %v2681 = vrot.slane %v2667, %v2680
        %v2682 = vcombine.low %v2658, %v2674
        %v2683 = vcombine.high %v2658, %v2674
        %v2685 = vunpack.c.l.s4 1934713408
        %v2686 = vunpack.c.0.s8 %v2685
        %v2687 = vlaneseq
        %v2688 = vshrl.u32 %v2687, 7
        %v2689 = vsub.s32 %v2686, %v2688
        %v2690 = vrot.slane %v2682, %v2689
        %v2692 = vunpack.c.l.s4 1934713408
        %v2693 = vunpack.c.0.s8 %v2692
        %v2694 = vlaneseq
        %v2695 = vshrl.u32 %v2694, 7
        %v2696 = vsub.s32 %v2693, %v2695
        %v2697 = vrot.slane %v2683, %v2696
        %v2698 = vcombine.low %v2665, %v2681
        %v2699 = vcombine.high %v2665, %v2681
        %v2701 = vunpack.c.l.s4 1934713408
        %v2702 = vunpack.c.0.s8 %v2701
        %v2703 = vlaneseq
        %v2704 = vshrl.u32 %v2703, 7
        %v2705 = vsub.s32 %v2702, %v2704
        %v2706 = vrot.slane %v2698, %v2705
        %v2708 = vunpack.c.l.s4 1934713408
        %v2709 = vunpack.c.0.s8 %v2708
        %v2710 = vlaneseq
        %v2711 = vshrl.u32 %v2710, 7
        %v2712 = vsub.s32 %v2709, %v2711
        %v2713 = vrot.slane %v2699, %v2712
        %v2714 = vcombine.high %v2690, 0
        %v2715 = vcombine.high %v2697, 0
        %v2716 = vcombine.high %v2706, 0
        %v2717 = vcombine.high %v2713, 0
        %2718 = vxpose.xlu0.c.b16.start [1/8] %v2622, 128
        %2719 = vxpose.xlu0.c.b16.cont [2/8] 0, 128
        %2720 = vxpose.xlu0.c.b16.cont [3/8] 0, 128
        %2721 = vxpose.xlu0.c.b16.cont [4/8] 0, 128
        %2722 = vxpose.xlu0.c.b16.cont [5/8] 0, 128
        %2723 = vxpose.xlu0.c.b16.cont [6/8] 0, 128
        %2724 = vxpose.xlu0.c.b16.cont [7/8] 0, 128
        %2725 = vxpose.xlu0.c.b16.end [8/8] 0, 128
        %v2726 = vpop.trf.xlu0
        %v2727 = vpop.trf.xlu0
        %v2728 = vpop.trf.xlu0
        %v2729 = vpop.trf.xlu0
        %v2730 = vpop.trf.xlu0
        %v2731 = vpop.trf.xlu0
        %v2732 = vpop.trf.xlu0
        %v2733 = vpop.trf.xlu0
        %2734 = vxpose.xlu0.c.b16.start [1/8] %v2690, 128
        %2735 = vxpose.xlu0.c.b16.cont [2/8] 0, 128
        %2736 = vxpose.xlu0.c.b16.cont [3/8] 0, 128
        %2737 = vxpose.xlu0.c.b16.cont [4/8] 0, 128
        %2738 = vxpose.xlu0.c.b16.cont [5/8] 0, 128
        %2739 = vxpose.xlu0.c.b16.cont [6/8] 0, 128
        %2740 = vxpose.xlu0.c.b16.cont [7/8] 0, 128
        %2741 = vxpose.xlu0.c.b16.end [8/8] 0, 128
        %v2742 = vpop.trf.xlu0
        %v2743 = vpop.trf.xlu0
        %v2744 = vpop.trf.xlu0
        %v2745 = vpop.trf.xlu0
        %v2746 = vpop.trf.xlu0
        %v2747 = vpop.trf.xlu0
        %v2748 = vpop.trf.xlu0
        %v2749 = vpop.trf.xlu0
        %2750 = vxpose.xlu0.c.b16.start [1/8] %v2646, 128
        %2751 = vxpose.xlu0.c.b16.cont [2/8] 0, 128
        %2752 = vxpose.xlu0.c.b16.cont [3/8] 0, 128
        %2753 = vxpose.xlu0.c.b16.cont [4/8] 0, 128
        %2754 = vxpose.xlu0.c.b16.cont [5/8] 0, 128
        %2755 = vxpose.xlu0.c.b16.cont [6/8] 0, 128
        %2756 = vxpose.xlu0.c.b16.cont [7/8] 0, 128
        %2757 = vxpose.xlu0.c.b16.end [8/8] 0, 128
        %v2758 = vpop.trf.xlu0
        %v2759 = vpop.trf.xlu0
        %v2760 = vpop.trf.xlu0
        %v2761 = vpop.trf.xlu0
        %v2762 = vpop.trf.xlu0
        %v2763 = vpop.trf.xlu0
        %v2764 = vpop.trf.xlu0
        %v2765 = vpop.trf.xlu0
        %2766 = vxpose.xlu0.c.b16.start [1/8] %v2714, 128
        %2767 = vxpose.xlu0.c.b16.cont [2/8] 0, 128
        %2768 = vxpose.xlu0.c.b16.cont [3/8] 0, 128
        %2769 = vxpose.xlu0.c.b16.cont [4/8] 0, 128
        %2770 = vxpose.xlu0.c.b16.cont [5/8] 0, 128
        %2771 = vxpose.xlu0.c.b16.cont [6/8] 0, 128
        %2772 = vxpose.xlu0.c.b16.cont [7/8] 0, 128
        %2773 = vxpose.xlu0.c.b16.end [8/8] 0, 128
        %v2774 = vpop.trf.xlu0
        %v2775 = vpop.trf.xlu0
        %v2776 = vpop.trf.xlu0
        %v2777 = vpop.trf.xlu0
        %v2778 = vpop.trf.xlu0
        %v2779 = vpop.trf.xlu0
        %v2780 = vpop.trf.xlu0
        %v2781 = vpop.trf.xlu0
        %2782 = vxpose.xlu0.c.b16.start [1/8] %v2629, 128
        %2783 = vxpose.xlu0.c.b16.cont [2/8] 0, 128
        %2784 = vxpose.xlu0.c.b16.cont [3/8] 0, 128
        %2785 = vxpose.xlu0.c.b16.cont [4/8] 0, 128
        %2786 = vxpose.xlu0.c.b16.cont [5/8] 0, 128
        %2787 = vxpose.xlu0.c.b16.cont [6/8] 0, 128
        %2788 = vxpose.xlu0.c.b16.cont [7/8] 0, 128
        %2789 = vxpose.xlu0.c.b16.end [8/8] 0, 128
        %v2790 = vpop.trf.xlu0
        %v2791 = vpop.trf.xlu0
        %v2792 = vpop.trf.xlu0
        %v2793 = vpop.trf.xlu0
        %v2794 = vpop.trf.xlu0
        %v2795 = vpop.trf.xlu0
        %v2796 = vpop.trf.xlu0
        %v2797 = vpop.trf.xlu0
        %2798 = vxpose.xlu0.c.b16.start [1/8] %v2697, 128
        %2799 = vxpose.xlu0.c.b16.cont [2/8] 0, 128
        %2800 = vxpose.xlu0.c.b16.cont [3/8] 0, 128
        %2801 = vxpose.xlu0.c.b16.cont [4/8] 0, 128
        %2802 = vxpose.xlu0.c.b16.cont [5/8] 0, 128
        %2803 = vxpose.xlu0.c.b16.cont [6/8] 0, 128
        %2804 = vxpose.xlu0.c.b16.cont [7/8] 0, 128
        %2805 = vxpose.xlu0.c.b16.end [8/8] 0, 128
        %v2806 = vpop.trf.xlu0
        %v2807 = vpop.trf.xlu0
        %v2808 = vpop.trf.xlu0
        %v2809 = vpop.trf.xlu0
        %v2810 = vpop.trf.xlu0
        %v2811 = vpop.trf.xlu0
        %v2812 = vpop.trf.xlu0
        %v2813 = vpop.trf.xlu0
        %2814 = vxpose.xlu0.c.b16.start [1/8] %v2647, 128
        %2815 = vxpose.xlu0.c.b16.cont [2/8] 0, 128
        %2816 = vxpose.xlu0.c.b16.cont [3/8] 0, 128
        %2817 = vxpose.xlu0.c.b16.cont [4/8] 0, 128
        %2818 = vxpose.xlu0.c.b16.cont [5/8] 0, 128
        %2819 = vxpose.xlu0.c.b16.cont [6/8] 0, 128
        %2820 = vxpose.xlu0.c.b16.cont [7/8] 0, 128
        %2821 = vxpose.xlu0.c.b16.end [8/8] 0, 128
        %v2822 = vpop.trf.xlu0
        %v2823 = vpop.trf.xlu0
        %v2824 = vpop.trf.xlu0
        %v2825 = vpop.trf.xlu0
        %v2826 = vpop.trf.xlu0
        %v2827 = vpop.trf.xlu0
        %v2828 = vpop.trf.xlu0
        %v2829 = vpop.trf.xlu0
        %2830 = vxpose.xlu0.c.b16.start [1/8] %v2715, 128
        %2831 = vxpose.xlu0.c.b16.cont [2/8] 0, 128
        %2832 = vxpose.xlu0.c.b16.cont [3/8] 0, 128
        %2833 = vxpose.xlu0.c.b16.cont [4/8] 0, 128
        %2834 = vxpose.xlu0.c.b16.cont [5/8] 0, 128
        %2835 = vxpose.xlu0.c.b16.cont [6/8] 0, 128
        %2836 = vxpose.xlu0.c.b16.cont [7/8] 0, 128
        %2837 = vxpose.xlu0.c.b16.end [8/8] 0, 128
        %v2838 = vpop.trf.xlu0
        %v2839 = vpop.trf.xlu0
        %v2840 = vpop.trf.xlu0
        %v2841 = vpop.trf.xlu0
        %v2842 = vpop.trf.xlu0
        %v2843 = vpop.trf.xlu0
        %v2844 = vpop.trf.xlu0
        %v2845 = vpop.trf.xlu0
        %2846 = vxpose.xlu0.c.b16.start [1/8] %v2638, 128
        %2847 = vxpose.xlu0.c.b16.cont [2/8] 0, 128
        %2848 = vxpose.xlu0.c.b16.cont [3/8] 0, 128
        %2849 = vxpose.xlu0.c.b16.cont [4/8] 0, 128
        %2850 = vxpose.xlu0.c.b16.cont [5/8] 0, 128
        %2851 = vxpose.xlu0.c.b16.cont [6/8] 0, 128
        %2852 = vxpose.xlu0.c.b16.cont [7/8] 0, 128
        %2853 = vxpose.xlu0.c.b16.end [8/8] 0, 128
        %v2854 = vpop.trf.xlu0
        %v2855 = vpop.trf.xlu0
        %v2856 = vpop.trf.xlu0
        %v2857 = vpop.trf.xlu0
        %v2858 = vpop.trf.xlu0
        %v2859 = vpop.trf.xlu0
        %v2860 = vpop.trf.xlu0
        %v2861 = vpop.trf.xlu0
        %2862 = vxpose.xlu0.c.b16.start [1/8] %v2706, 128
        %2863 = vxpose.xlu0.c.b16.cont [2/8] 0, 128
        %2864 = vxpose.xlu0.c.b16.cont [3/8] 0, 128
        %2865 = vxpose.xlu0.c.b16.cont [4/8] 0, 128
        %2866 = vxpose.xlu0.c.b16.cont [5/8] 0, 128
        %2867 = vxpose.xlu0.c.b16.cont [6/8] 0, 128
        %2868 = vxpose.xlu0.c.b16.cont [7/8] 0, 128
        %2869 = vxpose.xlu0.c.b16.end [8/8] 0, 128
        %v2870 = vpop.trf.xlu0
        %v2871 = vpop.trf.xlu0
        %v2872 = vpop.trf.xlu0
        %v2873 = vpop.trf.xlu0
        %v2874 = vpop.trf.xlu0
        %v2875 = vpop.trf.xlu0
        %v2876 = vpop.trf.xlu0
        %v2877 = vpop.trf.xlu0
        %2878 = vxpose.xlu0.c.b16.start [1/8] %v2648, 128
        %2879 = vxpose.xlu0.c.b16.cont [2/8] 0, 128
        %2880 = vxpose.xlu0.c.b16.cont [3/8] 0, 128
        %2881 = vxpose.xlu0.c.b16.cont [4/8] 0, 128
        %2882 = vxpose.xlu0.c.b16.cont [5/8] 0, 128
        %2883 = vxpose.xlu0.c.b16.cont [6/8] 0, 128
        %2884 = vxpose.xlu0.c.b16.cont [7/8] 0, 128
        %2885 = vxpose.xlu0.c.b16.end [8/8] 0, 128
        %v2886 = vpop.trf.xlu0
        %v2887 = vpop.trf.xlu0
        %v2888 = vpop.trf.xlu0
        %v2889 = vpop.trf.xlu0
        %v2890 = vpop.trf.xlu0
        %v2891 = vpop.trf.xlu0
        %v2892 = vpop.trf.xlu0
        %v2893 = vpop.trf.xlu0
        %2894 = vxpose.xlu0.c.b16.start [1/8] %v2716, 128
        %2895 = vxpose.xlu0.c.b16.cont [2/8] 0, 128
        %2896 = vxpose.xlu0.c.b16.cont [3/8] 0, 128
        %2897 = vxpose.xlu0.c.b16.cont [4/8] 0, 128
        %2898 = vxpose.xlu0.c.b16.cont [5/8] 0, 128
        %2899 = vxpose.xlu0.c.b16.cont [6/8] 0, 128
        %2900 = vxpose.xlu0.c.b16.cont [7/8] 0, 128
        %2901 = vxpose.xlu0.c.b16.end [8/8] 0, 128
        %v2902 = vpop.trf.xlu0
        %v2903 = vpop.trf.xlu0
        %v2904 = vpop.trf.xlu0
        %v2905 = vpop.trf.xlu0
        %v2906 = vpop.trf.xlu0
        %v2907 = vpop.trf.xlu0
        %v2908 = vpop.trf.xlu0
        %v2909 = vpop.trf.xlu0
        %2910 = vxpose.xlu0.c.b16.start [1/8] %v2645, 128
        %2911 = vxpose.xlu0.c.b16.cont [2/8] 0, 128
        %2912 = vxpose.xlu0.c.b16.cont [3/8] 0, 128
        %2913 = vxpose.xlu0.c.b16.cont [4/8] 0, 128
        %2914 = vxpose.xlu0.c.b16.cont [5/8] 0, 128
        %2915 = vxpose.xlu0.c.b16.cont [6/8] 0, 128
        %2916 = vxpose.xlu0.c.b16.cont [7/8] 0, 128
        %2917 = vxpose.xlu0.c.b16.end [8/8] 0, 128
        %v2918 = vpop.trf.xlu0
        %v2919 = vpop.trf.xlu0
        %v2920 = vpop.trf.xlu0
        %v2921 = vpop.trf.xlu0
        %v2922 = vpop.trf.xlu0
        %v2923 = vpop.trf.xlu0
        %v2924 = vpop.trf.xlu0
        %v2925 = vpop.trf.xlu0
        %2926 = vxpose.xlu0.c.b16.start [1/8] %v2713, 128
        %2927 = vxpose.xlu0.c.b16.cont [2/8] 0, 128
        %2928 = vxpose.xlu0.c.b16.cont [3/8] 0, 128
        %2929 = vxpose.xlu0.c.b16.cont [4/8] 0, 128
        %2930 = vxpose.xlu0.c.b16.cont [5/8] 0, 128
        %2931 = vxpose.xlu0.c.b16.cont [6/8] 0, 128
        %2932 = vxpose.xlu0.c.b16.cont [7/8] 0, 128
        %2933 = vxpose.xlu0.c.b16.end [8/8] 0, 128
        %v2934 = vpop.trf.xlu0
        %v2935 = vpop.trf.xlu0
        %v2936 = vpop.trf.xlu0
        %v2937 = vpop.trf.xlu0
        %v2938 = vpop.trf.xlu0
        %v2939 = vpop.trf.xlu0
        %v2940 = vpop.trf.xlu0
        %v2941 = vpop.trf.xlu0
        %2942 = vxpose.xlu0.c.b16.start [1/8] %v2649, 128
        %2943 = vxpose.xlu0.c.b16.cont [2/8] 0, 128
        %2944 = vxpose.xlu0.c.b16.cont [3/8] 0, 128
        %2945 = vxpose.xlu0.c.b16.cont [4/8] 0, 128
        %2946 = vxpose.xlu0.c.b16.cont [5/8] 0, 128
        %2947 = vxpose.xlu0.c.b16.cont [6/8] 0, 128
        %2948 = vxpose.xlu0.c.b16.cont [7/8] 0, 128
        %2949 = vxpose.xlu0.c.b16.end [8/8] 0, 128
        %v2950 = vpop.trf.xlu0
        %v2951 = vpop.trf.xlu0
        %v2952 = vpop.trf.xlu0
        %v2953 = vpop.trf.xlu0
        %v2954 = vpop.trf.xlu0
        %v2955 = vpop.trf.xlu0
        %v2956 = vpop.trf.xlu0
        %v2957 = vpop.trf.xlu0
        %2958 = vxpose.xlu0.c.b16.start [1/8] %v2717, 128
        %2959 = vxpose.xlu0.c.b16.cont [2/8] 0, 128
        %2960 = vxpose.xlu0.c.b16.cont [3/8] 0, 128
        %2961 = vxpose.xlu0.c.b16.cont [4/8] 0, 128
        %2962 = vxpose.xlu0.c.b16.cont [5/8] 0, 128
        %2963 = vxpose.xlu0.c.b16.cont [6/8] 0, 128
        %2964 = vxpose.xlu0.c.b16.cont [7/8] 0, 128
        %2965 = vxpose.xlu0.c.b16.end [8/8] 0, 128
        %v2966 = vpop.trf.xlu0
        %v2967 = vpop.trf.xlu0
        %v2968 = vpop.trf.xlu0
        %v2969 = vpop.trf.xlu0
        %v2970 = vpop.trf.xlu0
        %v2971 = vpop.trf.xlu0
        %v2972 = vpop.trf.xlu0
        %v2973 = vpop.trf.xlu0
        %v2974 = vcombine.low %v2726, %v2790
        %v2976 = vunpack.c.l.s4 1983009808
        %v2977 = vunpack.c.0.s8 %v2976
        %v2978 = vlaneseq
        %v2979 = vshrl.u32 %v2978, 7
        %v2980 = vsub.s32 %v2977, %v2979
        %v2981 = vrot.slane %v2974, %v2980
        %v2982 = vcombine.low %v2758, %v2822
        %v2984 = vunpack.c.l.s4 1983009808
        %v2985 = vunpack.c.0.s8 %v2984
        %v2986 = vlaneseq
        %v2987 = vshrl.u32 %v2986, 7
        %v2988 = vsub.s32 %v2985, %v2987
        %v2989 = vrot.slane %v2982, %v2988
        %v2990 = vcombine.low %v2854, %v2918
        %v2992 = vunpack.c.l.s4 1983009808
        %v2993 = vunpack.c.0.s8 %v2992
        %v2994 = vlaneseq
        %v2995 = vshrl.u32 %v2994, 7
        %v2996 = vsub.s32 %v2993, %v2995
        %v2997 = vrot.slane %v2990, %v2996
        %v2998 = vcombine.low %v2886, %v2950
        %v3000 = vunpack.c.l.s4 1983009808
        %v3001 = vunpack.c.0.s8 %v3000
        %v3002 = vlaneseq
        %v3003 = vshrl.u32 %v3002, 7
        %v3004 = vsub.s32 %v3001, %v3003
        %v3005 = vrot.slane %v2998, %v3004
        %v3006 = vcombine.low %v2981, %v2989
        %v3008 = vunpack.c.l.s4 1934713408
        %v3009 = vunpack.c.0.s8 %v3008
        %v3010 = vlaneseq
        %v3011 = vshrl.u32 %v3010, 7
        %v3012 = vsub.s32 %v3009, %v3011
        %v3013 = vrot.slane %v3006, %v3012
        %v3014 = vcombine.low %v2997, %v3005
        %v3016 = vunpack.c.l.s4 1934713408
        %v3017 = vunpack.c.0.s8 %v3016
        %v3018 = vlaneseq
        %v3019 = vshrl.u32 %v3018, 7
        %v3020 = vsub.s32 %v3017, %v3019
        %v3021 = vrot.slane %v3014, %v3020
        %v3022 = vcombine.low %v3013, %v3021
        %v3023 = vcombine.low %v2742, %v2806
        %v3025 = vunpack.c.l.s4 1983009808
        %v3026 = vunpack.c.0.s8 %v3025
        %v3027 = vlaneseq
        %v3028 = vshrl.u32 %v3027, 7
        %v3029 = vsub.s32 %v3026, %v3028
        %v3030 = vrot.slane %v3023, %v3029
        %v3031 = vcombine.low %v2774, %v2838
        %v3033 = vunpack.c.l.s4 1983009808
        %v3034 = vunpack.c.0.s8 %v3033
        %v3035 = vlaneseq
        %v3036 = vshrl.u32 %v3035, 7
        %v3037 = vsub.s32 %v3034, %v3036
        %v3038 = vrot.slane %v3031, %v3037
        %v3039 = vcombine.low %v2870, %v2934
        %v3041 = vunpack.c.l.s4 1983009808
        %v3042 = vunpack.c.0.s8 %v3041
        %v3043 = vlaneseq
        %v3044 = vshrl.u32 %v3043, 7
        %v3045 = vsub.s32 %v3042, %v3044
        %v3046 = vrot.slane %v3039, %v3045
        %v3047 = vcombine.low %v2902, %v2966
        %v3049 = vunpack.c.l.s4 1983009808
        %v3050 = vunpack.c.0.s8 %v3049
        %v3051 = vlaneseq
        %v3052 = vshrl.u32 %v3051, 7
        %v3053 = vsub.s32 %v3050, %v3052
        %v3054 = vrot.slane %v3047, %v3053
        %v3055 = vcombine.low %v3030, %v3038
        %v3057 = vunpack.c.l.s4 1934713408
        %v3058 = vunpack.c.0.s8 %v3057
        %v3059 = vlaneseq
        %v3060 = vshrl.u32 %v3059, 7
        %v3061 = vsub.s32 %v3058, %v3060
        %v3062 = vrot.slane %v3055, %v3061
        %v3063 = vcombine.low %v3046, %v3054
        %v3065 = vunpack.c.l.s4 1934713408
        %v3066 = vunpack.c.0.s8 %v3065
        %v3067 = vlaneseq
        %v3068 = vshrl.u32 %v3067, 7
        %v3069 = vsub.s32 %v3066, %v3068
        %v3070 = vrot.slane %v3063, %v3069
        %v3071 = vcombine.low %v3062, %v3070
        %v3074 = vpack.i.b16 %v3071, %v3022
        %v3075 = vshrl.u32 %v3022, 16
        %v3076 = vshrl.u32 %v3071, 16
        %v3077 = vpack.i.b16 %v3076, %v3075
        %v3079 = vsel %vm2397, %v3074, 0
        %v3082 = vsel %vm2397, %v2420, 0
        %3084 = vmatprep.subr.bf16.mxu0 0
        %3085 = vmatpush1.bf16.xpose.msra.mxu0 %v3082
        %3086 = vmatprep.subr.bf16.mxu0 0
        %3087 = vmatpush1.bf16.xpose.msra.mxu0 0
        %3088 = vmatprep.subr.bf16.mxu0 0
        %3089 = vmatpush1.bf16.xpose.msra.mxu0 0
        %3090 = vmatprep.subr.bf16.mxu0 0
        %3091 = vmatpush1.bf16.xpose.msra.mxu0 0
        %3092 = vmatprep.subr.bf16.mxu0 0
        %3093 = vmatpush1.bf16.xpose.msra.mxu0 0
        %3094 = vmatprep.subr.bf16.mxu0 0
        %3095 = vmatpush1.bf16.xpose.msra.mxu0 0
        %3096 = vmatprep.subr.bf16.mxu0 0
        %3097 = vmatpush1.bf16.xpose.msra.mxu0 0
        %3098 = vmatprep.subr.bf16.mxu0 0
        %3099 = vmatpush1.bf16.xpose.msra.mxu0 0
        %3100 = vmatprep.subr.bf16.mxu0 0
        %3101 = vmatpush1.bf16.xpose.msra.mxu0 0
        %3102 = vmatprep.subr.bf16.mxu0 0
        %3103 = vmatpush1.bf16.xpose.msra.mxu0 0
        %3104 = vmatprep.subr.bf16.mxu0 0
        %3105 = vmatpush1.bf16.xpose.msra.mxu0 0
        %3106 = vmatprep.subr.bf16.mxu0 0
        %3107 = vmatpush1.bf16.xpose.msra.mxu0 0
        %3108 = vmatprep.subr.bf16.mxu0 0
        %3109 = vmatpush1.bf16.xpose.msra.mxu0 0
        %3110 = vmatprep.subr.bf16.mxu0 0
        %3111 = vmatpush1.bf16.xpose.msra.mxu0 0
        %3112 = vmatprep.subr.bf16.mxu0 0
        %3113 = vmatpush1.bf16.xpose.msra.mxu0 0
        %3114 = vmatprep.subr.bf16.mxu0 0
        %3115 = vmatpush1.bf16.xpose.msra.mxu0 0
        %3116 = vmatprep.mubr.bf16.mxu0 0
        %3117 = vmatmul.mubr.bf16.gmra.mrb[0].mxu0 %v3079
        %v3118 = vpop.f32.mrb[0].mxu0
        %v3119 = vadd.f32 0.0, %v3118
        %v3120 = vpop.f32.mrb[0].mxu0
        %v3121 = vpop.f32.mrb[0].mxu0
        %v3122 = vadd.f32 0.0, %v3121
        %v3123 = vpop.f32.mrb[0].mxu0
        %3124 = vdwg.mxu0
        %v3126 = vsel %vm2397, %v3077, 0
        %v3129 = vsel %vm2397, %v2421, 0
        %3131 = vmatprep.subr.bf16.mxu0 0
        %3132 = vmatpush1.bf16.xpose.msra.mxu0 %v3129
        %3133 = vmatprep.subr.bf16.mxu0 0
        %3134 = vmatpush1.bf16.xpose.msra.mxu0 0
        %3135 = vmatprep.subr.bf16.mxu0 0
        %3136 = vmatpush1.bf16.xpose.msra.mxu0 0
        %3137 = vmatprep.subr.bf16.mxu0 0
        %3138 = vmatpush1.bf16.xpose.msra.mxu0 0
        %3139 = vmatprep.subr.bf16.mxu0 0
        %3140 = vmatpush1.bf16.xpose.msra.mxu0 0
        %3141 = vmatprep.subr.bf16.mxu0 0
        %3142 = vmatpush1.bf16.xpose.msra.mxu0 0
        %3143 = vmatprep.subr.bf16.mxu0 0
        %3144 = vmatpush1.bf16.xpose.msra.mxu0 0
        %3145 = vmatprep.subr.bf16.mxu0 0
        %3146 = vmatpush1.bf16.xpose.msra.mxu0 0
        %3147 = vmatprep.subr.bf16.mxu0 0
        %3148 = vmatpush1.bf16.xpose.msra.mxu0 0
        %3149 = vmatprep.subr.bf16.mxu0 0
        %3150 = vmatpush1.bf16.xpose.msra.mxu0 0
        %3151 = vmatprep.subr.bf16.mxu0 0
        %3152 = vmatpush1.bf16.xpose.msra.mxu0 0
        %3153 = vmatprep.subr.bf16.mxu0 0
        %3154 = vmatpush1.bf16.xpose.msra.mxu0 0
        %3155 = vmatprep.subr.bf16.mxu0 0
        %3156 = vmatpush1.bf16.xpose.msra.mxu0 0
        %3157 = vmatprep.subr.bf16.mxu0 0
        %3158 = vmatpush1.bf16.xpose.msra.mxu0 0
        %3159 = vmatprep.subr.bf16.mxu0 0
        %3160 = vmatpush1.bf16.xpose.msra.mxu0 0
        %3161 = vmatprep.subr.bf16.mxu0 0
        %3162 = vmatpush1.bf16.xpose.msra.mxu0 0
        %3163 = vmatprep.mubr.bf16.mxu0 0
        %3164 = vmatmul.mubr.bf16.gmra.mrb[0].mxu0 %v3126
        %v3165 = vpop.f32.mrb[0].mxu0
        %v3166 = vadd.f32 0.0, %v3165
        %v3167 = vpop.f32.mrb[0].mxu0
        %v3168 = vpop.f32.mrb[0].mxu0
        %v3169 = vadd.f32 0.0, %v3168
        %v3170 = vpop.f32.mrb[0].mxu0
        %3171 = vdwg.mxu0
        %3172 = vxpose.xlu0.b32.start [1/16] %v3119, 128
        %3173 = vxpose.xlu0.b32.cont [2/16] %v3122, 128
        %3174 = vxpose.xlu0.b32.cont [3/16] 0.0, 128
        %3175 = vxpose.xlu0.b32.cont [4/16] 0.0, 128
        %3176 = vxpose.xlu0.b32.cont [5/16] 0.0, 128
        %3177 = vxpose.xlu0.b32.cont [6/16] 0.0, 128
        %3178 = vxpose.xlu0.b32.cont [7/16] 0.0, 128
        %3179 = vxpose.xlu0.b32.cont [8/16] 0.0, 128
        %3180 = vxpose.xlu0.b32.cont [9/16] 0.0, 128
        %3181 = vxpose.xlu0.b32.cont [10/16] 0.0, 128
        %3182 = vxpose.xlu0.b32.cont [11/16] 0.0, 128
        %3183 = vxpose.xlu0.b32.cont [12/16] 0.0, 128
        %3184 = vxpose.xlu0.b32.cont [13/16] 0.0, 128
        %3185 = vxpose.xlu0.b32.cont [14/16] 0.0, 128
        %3186 = vxpose.xlu0.b32.cont [15/16] 0.0, 128
        %3187 = vxpose.xlu0.b32.end [16/16] 0.0, 128
        %v3188 = vpop.trf.xlu0
        %v3189 = vpop.trf.xlu0
        %v3190 = vpop.trf.xlu0
        %v3191 = vpop.trf.xlu0
        %v3192 = vpop.trf.xlu0
        %v3193 = vpop.trf.xlu0
        %v3194 = vpop.trf.xlu0
        %v3195 = vpop.trf.xlu0
        %v3196 = vpop.trf.xlu0
        %v3197 = vpop.trf.xlu0
        %v3198 = vpop.trf.xlu0
        %v3199 = vpop.trf.xlu0
        %v3200 = vpop.trf.xlu0
        %v3201 = vpop.trf.xlu0
        %v3202 = vpop.trf.xlu0
        %v3203 = vpop.trf.xlu0
        %3204 = vxpose.xlu0.b32.start [1/16] %v3166, 128
        %3205 = vxpose.xlu0.b32.cont [2/16] %v3169, 128
        %3206 = vxpose.xlu0.b32.cont [3/16] 0.0, 128
        %3207 = vxpose.xlu0.b32.cont [4/16] 0.0, 128
        %3208 = vxpose.xlu0.b32.cont [5/16] 0.0, 128
        %3209 = vxpose.xlu0.b32.cont [6/16] 0.0, 128
        %3210 = vxpose.xlu0.b32.cont [7/16] 0.0, 128
        %3211 = vxpose.xlu0.b32.cont [8/16] 0.0, 128
        %3212 = vxpose.xlu0.b32.cont [9/16] 0.0, 128
        %3213 = vxpose.xlu0.b32.cont [10/16] 0.0, 128
        %3214 = vxpose.xlu0.b32.cont [11/16] 0.0, 128
        %3215 = vxpose.xlu0.b32.cont [12/16] 0.0, 128
        %3216 = vxpose.xlu0.b32.cont [13/16] 0.0, 128
        %3217 = vxpose.xlu0.b32.cont [14/16] 0.0, 128
        %3218 = vxpose.xlu0.b32.cont [15/16] 0.0, 128
        %3219 = vxpose.xlu0.b32.end [16/16] 0.0, 128
        %v3220 = vpop.trf.xlu0
        %v3221 = vpop.trf.xlu0
        %v3222 = vpop.trf.xlu0
        %v3223 = vpop.trf.xlu0
        %v3224 = vpop.trf.xlu0
        %v3225 = vpop.trf.xlu0
        %v3226 = vpop.trf.xlu0
        %v3227 = vpop.trf.xlu0
        %v3228 = vpop.trf.xlu0
        %v3229 = vpop.trf.xlu0
        %v3230 = vpop.trf.xlu0
        %v3231 = vpop.trf.xlu0
        %v3232 = vpop.trf.xlu0
        %v3233 = vpop.trf.xlu0
        %v3234 = vpop.trf.xlu0
        %v3235 = vpop.trf.xlu0
        %v3236 = vcombine.high %v3188, 0.0
        %v3238 = vunpack.c.l.s4 1983009808
        %v3239 = vunpack.c.0.s8 %v3238
        %v3240 = vlaneseq
        %v3241 = vshrl.u32 %v3240, 7
        %v3242 = vsub.s32 %v3239, %v3241
        %v3243 = vrot.slane %v3188, %v3242
        %v3245 = vunpack.c.l.s4 1983009808
        %v3246 = vunpack.c.0.s8 %v3245
        %v3247 = vlaneseq
        %v3248 = vshrl.u32 %v3247, 7
        %v3249 = vsub.s32 %v3246, %v3248
        %v3250 = vrot.slane %v3236, %v3249
        %v3251 = vcombine.high %v3220, 0.0
        %v3253 = vunpack.c.l.s4 1983009808
        %v3254 = vunpack.c.0.s8 %v3253
        %v3255 = vlaneseq
        %v3256 = vshrl.u32 %v3255, 7
        %v3257 = vsub.s32 %v3254, %v3256
        %v3258 = vrot.slane %v3220, %v3257
        %v3260 = vunpack.c.l.s4 1983009808
        %v3261 = vunpack.c.0.s8 %v3260
        %v3262 = vlaneseq
        %v3263 = vshrl.u32 %v3262, 7
        %v3264 = vsub.s32 %v3261, %v3263
        %v3265 = vrot.slane %v3251, %v3264
        %v3266 = vcombine.low %v3243, %v3258
        %v3267 = vcombine.high %v3243, %v3258
        %v3269 = vunpack.c.l.s4 1934713408
        %v3270 = vunpack.c.0.s8 %v3269
        %v3271 = vlaneseq
        %v3272 = vshrl.u32 %v3271, 7
        %v3273 = vsub.s32 %v3270, %v3272
        %v3274 = vrot.slane %v3266, %v3273
        %v3276 = vunpack.c.l.s4 1934713408
        %v3277 = vunpack.c.0.s8 %v3276
        %v3278 = vlaneseq
        %v3279 = vshrl.u32 %v3278, 7
        %v3280 = vsub.s32 %v3277, %v3279
        %v3281 = vrot.slane %v3267, %v3280
        %v3282 = vcombine.low %v3250, %v3265
        %v3283 = vcombine.high %v3250, %v3265
        %v3285 = vunpack.c.l.s4 1934713408
        %v3286 = vunpack.c.0.s8 %v3285
        %v3287 = vlaneseq
        %v3288 = vshrl.u32 %v3287, 7
        %v3289 = vsub.s32 %v3286, %v3288
        %v3290 = vrot.slane %v3282, %v3289
        %v3292 = vunpack.c.l.s4 1934713408
        %v3293 = vunpack.c.0.s8 %v3292
        %v3294 = vlaneseq
        %v3295 = vshrl.u32 %v3294, 7
        %v3296 = vsub.s32 %v3293, %v3295
        %v3297 = vrot.slane %v3283, %v3296
        %v3298 = vcombine.high %v3274, 0.0
        %v3299 = vcombine.high %v3281, 0.0
        %v3300 = vcombine.high %v3290, 0.0
        %v3301 = vcombine.high %v3297, 0.0
        %v3302 = vcombine.low %v3274, %v3281
        %v3304 = vunpack.c.l.s4 1983009808
        %v3305 = vunpack.c.0.s8 %v3304
        %v3306 = vlaneseq
        %v3307 = vshrl.u32 %v3306, 7
        %v3308 = vsub.s32 %v3305, %v3307
        %v3309 = vrot.slane %v3302, %v3308
        %v3310 = vcombine.low %v3298, %v3299
        %v3312 = vunpack.c.l.s4 1983009808
        %v3313 = vunpack.c.0.s8 %v3312
        %v3314 = vlaneseq
        %v3315 = vshrl.u32 %v3314, 7
        %v3316 = vsub.s32 %v3313, %v3315
        %v3317 = vrot.slane %v3310, %v3316
        %v3318 = vcombine.low %v3290, %v3297
        %v3320 = vunpack.c.l.s4 1983009808
        %v3321 = vunpack.c.0.s8 %v3320
        %v3322 = vlaneseq
        %v3323 = vshrl.u32 %v3322, 7
        %v3324 = vsub.s32 %v3321, %v3323
        %v3325 = vrot.slane %v3318, %v3324
        %v3326 = vcombine.low %v3300, %v3301
        %v3328 = vunpack.c.l.s4 1983009808
        %v3329 = vunpack.c.0.s8 %v3328
        %v3330 = vlaneseq
        %v3331 = vshrl.u32 %v3330, 7
        %v3332 = vsub.s32 %v3329, %v3331
        %v3333 = vrot.slane %v3326, %v3332
        %v3334 = vcombine.low %v3309, %v3317
        %v3336 = vunpack.c.l.s4 1934713408
        %v3337 = vunpack.c.0.s8 %v3336
        %v3338 = vlaneseq
        %v3339 = vshrl.u32 %v3338, 7
        %v3340 = vsub.s32 %v3337, %v3339
        %v3341 = vrot.slane %v3334, %v3340
        %v3342 = vcombine.low %v3325, %v3333
        %v3344 = vunpack.c.l.s4 1934713408
        %v3345 = vunpack.c.0.s8 %v3344
        %v3346 = vlaneseq
        %v3347 = vshrl.u32 %v3346, 7
        %v3348 = vsub.s32 %v3345, %v3347
        %v3349 = vrot.slane %v3342, %v3348
        %v3350 = vcombine.low %v3341, %v3349
        %v3351 = vcombine.high %v3341, %v3349
        %3353 = vrot.lane.b32.xlu0 %v3351, 16
        %v3354 = vpop.permute.xlu0 %3353
        %v3356 = vsel %vm2310, %v3350, %v3354
        %v3357 = vpack.c.bf16 %v3356, %v3356
        %v3358 = vld [vmem:[%s1032] sm:$0xf]
        %v3359 = vld [vmem:[%s1032 + $0x4] sm:$0xf]
        %v3360 = vld [vmem:[%s1032 + $0x8] sm:$0xf]
        %v3361 = vld [vmem:[%s1032 + $0xc] sm:$0xf]
        %v3362 = vld [vmem:[%s1040] sm:$0x1]
        %v3364 = vlaneseq
        %v3365 = vshrl.u32 %v3364, 7
        %v3366 = vsub.s32 0, %v3365
        %v3367 = vrot.slane %v3362, %v3366
        %v3373 = vunpack.c.l.b16 %v3358
        %v3374 = vunpack.c.l.b16 %v3359
        %v3375 = vunpack.c.l.b16 %v3360
        %v3376 = vunpack.c.l.b16 %v3361
        %v3377 = vpack.c.b16 %v3374, %v3373
        %v3378 = vpack.c.b16 %v3376, %v3375
        %v3382 = vsel %vm1309, %v3357, 0
        %3384 = vmatprep.subr.bf16.mxu0 0
        %3385 = vmatpush1.bf16.msra.mxu0 %v3377
        %3386 = vmatprep.subr.bf16.mxu0 0
        %3387 = vmatpush1.bf16.msra.mxu0 %v3378
        %3388 = vmatprep.subr.bf16.mxu0 0
        %3389 = vmatpush1.bf16.msra.mxu0 0
        %3390 = vmatprep.subr.bf16.mxu0 0
        %3391 = vmatpush1.bf16.msra.mxu0 0
        %3392 = vmatprep.subr.bf16.mxu0 0
        %3393 = vmatpush1.bf16.msra.mxu0 0
        %3394 = vmatprep.subr.bf16.mxu0 0
        %3395 = vmatpush1.bf16.msra.mxu0 0
        %3396 = vmatprep.subr.bf16.mxu0 0
        %3397 = vmatpush1.bf16.msra.mxu0 0
        %3398 = vmatprep.subr.bf16.mxu0 0
        %3399 = vmatpush1.bf16.msra.mxu0 0
        %3400 = vmatprep.subr.bf16.mxu0 0
        %3401 = vmatpush1.bf16.msra.mxu0 0
        %3402 = vmatprep.subr.bf16.mxu0 0
        %3403 = vmatpush1.bf16.msra.mxu0 0
        %3404 = vmatprep.subr.bf16.mxu0 0
        %3405 = vmatpush1.bf16.msra.mxu0 0
        %3406 = vmatprep.subr.bf16.mxu0 0
        %3407 = vmatpush1.bf16.msra.mxu0 0
        %3408 = vmatprep.subr.bf16.mxu0 0
        %3409 = vmatpush1.bf16.msra.mxu0 0
        %3410 = vmatprep.subr.bf16.mxu0 0
        %3411 = vmatpush1.bf16.msra.mxu0 0
        %3412 = vmatprep.subr.bf16.mxu0 0
        %3413 = vmatpush1.bf16.msra.mxu0 0
        %3414 = vmatprep.subr.bf16.mxu0 0
        %3415 = vmatpush1.bf16.msra.mxu0 0
        %3416 = vmatprep.mubr.bf16.mxu0 0
        %3417 = vmatmul.mubr.bf16.gmra.mrb[0].mxu0 %v3382
        %v3418 = vpop.f32.mrb[0].mxu0
        %v3419 = vadd.f32 %v3367, %v3418
        %v3420 = vpop.f32.mrb[0].mxu0
        %v3421 = vpop.f32.mrb[0].mxu0
        %v3422 = vpop.f32.mrb[0].mxu0
        %3423 = vdwg.mxu0
        %v3424 = vadd.f32 %v3419, %v1284
        %v3425 = vld [vmem:[%s1048] sm:$0x1]
        %v3426 = vld [vmem:[%s1056] sm:$0x1]
        %v3427 = vsel %vm1309, %v3424, 0.0
        %3428 = vadd.xlane.f32.xlu0 %v3427
        %v3429 = vpop.xlane.xlu0 %3428
        %v3430 = vrcp.pop 32.0
        %v3431 = vmul.f32 %v3429, %v3430
        %v3432 = vsub.f32 %v3424, %v3431
        %v3433 = vmul.f32 %v3432, %v3432
        %v3434 = vsel %vm1309, %v3433, 0.0
        %3435 = vadd.xlane.f32.xlu0 %v3434
        %v3436 = vpop.xlane.xlu0 %3435
        %v3437 = vmul.f32 %v3436, %v3430
        %v3438 = vadd.f32 %v3437, 1e-12
        %v3439 = vrsqrt.pop %v3438
        %v3440 = vmul.f32 %v3432, %v3439
        %v3442 = vlaneseq
        %v3443 = vshrl.u32 %v3442, 7
        %v3444 = vsub.s32 0, %v3443
        %v3445 = vrot.slane %v3425, %v3444
        %v3447 = vmul.f32 %v3440, %v3445
        %v3449 = vlaneseq
        %v3450 = vshrl.u32 %v3449, 7
        %v3451 = vsub.s32 0, %v3450
        %v3452 = vrot.slane %v3426, %v3451
        %v3454 = vadd.f32 %v3447, %v3452
        %v3455 = vpack.c.bf16 %v3454, %v3454
        %v3456 = vld [vmem:[%s1065] sm:$0xf]
        %v3457 = vld [vmem:[%s1065 + $0x4] sm:$0xf]
        %v3458 = vld [vmem:[%s1065 + $0x8] sm:$0xf]
        %v3459 = vld [vmem:[%s1065 + $0xc] sm:$0xf]
        %v3460 = vld [vmem:[%s1073] sm:$0x1]
        %v3462 = vlaneseq
        %v3463 = vshrl.u32 %v3462, 7
        %v3464 = vsub.s32 0, %v3463
        %v3465 = vrot.slane %v3460, %v3464
        %v3471 = vunpack.c.l.b16 %v3456
        %v3472 = vunpack.c.l.b16 %v3457
        %v3473 = vunpack.c.l.b16 %v3458
        %v3474 = vunpack.c.l.b16 %v3459
        %v3475 = vpack.c.b16 %v3472, %v3471
        %v3476 = vpack.c.b16 %v3474, %v3473
        %v3480 = vsel %vm1309, %v3455, 0
        %3482 = vmatprep.subr.bf16.mxu0 0
        %3483 = vmatpush1.bf16.msra.mxu0 %v3475
        %3484 = vmatprep.subr.bf16.mxu0 0
        %3485 = vmatpush1.bf16.msra.mxu0 %v3476
        %3486 = vmatprep.subr.bf16.mxu0 0
        %3487 = vmatpush1.bf16.msra.mxu0 0
        %3488 = vmatprep.subr.bf16.mxu0 0
        %3489 = vmatpush1.bf16.msra.mxu0 0
        %3490 = vmatprep.subr.bf16.mxu0 0
        %3491 = vmatpush1.bf16.msra.mxu0 0
        %3492 = vmatprep.subr.bf16.mxu0 0
        %3493 = vmatpush1.bf16.msra.mxu0 0
        %3494 = vmatprep.subr.bf16.mxu0 0
        %3495 = vmatpush1.bf16.msra.mxu0 0
        %3496 = vmatprep.subr.bf16.mxu0 0
        %3497 = vmatpush1.bf16.msra.mxu0 0
        %3498 = vmatprep.subr.bf16.mxu0 0
        %3499 = vmatpush1.bf16.msra.mxu0 0
        %3500 = vmatprep.subr.bf16.mxu0 0
        %3501 = vmatpush1.bf16.msra.mxu0 0
        %3502 = vmatprep.subr.bf16.mxu0 0
        %3503 = vmatpush1.bf16.msra.mxu0 0
        %3504 = vmatprep.subr.bf16.mxu0 0
        %3505 = vmatpush1.bf16.msra.mxu0 0
        %3506 = vmatprep.subr.bf16.mxu0 0
        %3507 = vmatpush1.bf16.msra.mxu0 0
        %3508 = vmatprep.subr.bf16.mxu0 0
        %3509 = vmatpush1.bf16.msra.mxu0 0
        %3510 = vmatprep.subr.bf16.mxu0 0
        %3511 = vmatpush1.bf16.msra.mxu0 0
        %3512 = vmatprep.subr.bf16.mxu0 0
        %3513 = vmatpush1.bf16.msra.mxu0 0
        %3514 = vmatprep.mubr.bf16.mxu0 0
        %3515 = vmatmul.mubr.bf16.gmra.mrb[0].mxu0 %v3480
        %v3516 = vpop.f32.mrb[0].mxu0
        %v3517 = vadd.f32 %v3465, %v3516
        %v3518 = vpop.f32.mrb[0].mxu0
        %v3519 = vpop.f32.mrb[0].mxu0
        %v3520 = vpop.f32.mrb[0].mxu0
        %3521 = vdwg.mxu0
        %v3522 = vmul.f32 %v3517, 0.5
        %v3523 = vmul.f32 %v3517, 0.044715
        %v3524 = vmul.f32 %v3523, %v3517
        %v3525 = vmul.f32 %v3524, %v3517
        %v3526 = vadd.f32 %v3517, %v3525
        %v3527 = vmul.f32 %v3526, 0.7978846
        %v3528 = vtanh.pop %v3527
        %v3529 = vadd.f32 %v3528, 1.0
        %v3530 = vmul.f32 %v3522, %v3529
        %v3531 = vpack.c.bf16 %v3530, %v3530
        %v3532 = vld [vmem:[%s1082] sm:$0xf]
        %v3533 = vld [vmem:[%s1082 + $0x4] sm:$0xf]
        %v3534 = vld [vmem:[%s1082 + $0x8] sm:$0xf]
        %v3535 = vld [vmem:[%s1082 + $0xc] sm:$0xf]
        %v3536 = vld [vmem:[%s1082 + $0x10] sm:$0xf]
        %v3537 = vld [vmem:[%s1082 + $0x14] sm:$0xf]
        %v3538 = vld [vmem:[%s1082 + $0x18] sm:$0xf]
        %v3539 = vld [vmem:[%s1082 + $0x1c] sm:$0xf]
        %v3540 = vld [vmem:[%s1090] sm:$0x1]
        %v3542 = vlaneseq
        %v3543 = vshrl.u32 %v3542, 7
        %v3544 = vsub.s32 0, %v3543
        %v3545 = vrot.slane %v3540, %v3544
        %v3555 = vunpack.c.l.b16 %v3532
        %v3556 = vunpack.c.l.b16 %v3533
        %v3557 = vunpack.c.l.b16 %v3534
        %v3558 = vunpack.c.l.b16 %v3535
        %v3559 = vunpack.c.l.b16 %v3536
        %v3560 = vunpack.c.l.b16 %v3537
        %v3561 = vunpack.c.l.b16 %v3538
        %v3562 = vunpack.c.l.b16 %v3539
        %v3563 = vpack.c.b16 %v3556, %v3555
        %v3564 = vpack.c.b16 %v3558, %v3557
        %v3565 = vpack.c.b16 %v3560, %v3559
        %v3566 = vpack.c.b16 %v3562, %v3561
        %vm3571 = vcmask 523264
        %v3573 = vsel %vm3571, %v3531, 0
        %3575 = vmatprep.subr.bf16.mxu0 0
        %3576 = vmatpush1.bf16.msra.mxu0 %v3563
        %3577 = vmatprep.subr.bf16.mxu0 0
        %3578 = vmatpush1.bf16.msra.mxu0 %v3564
        %3579 = vmatprep.subr.bf16.mxu0 0
        %3580 = vmatpush1.bf16.msra.mxu0 %v3565
        %3581 = vmatprep.subr.bf16.mxu0 0
        %3582 = vmatpush1.bf16.msra.mxu0 %v3566
        %3583 = vmatprep.subr.bf16.mxu0 0
        %3584 = vmatpush1.bf16.msra.mxu0 0
        %3585 = vmatprep.subr.bf16.mxu0 0
        %3586 = vmatpush1.bf16.msra.mxu0 0
        %3587 = vmatprep.subr.bf16.mxu0 0
        %3588 = vmatpush1.bf16.msra.mxu0 0
        %3589 = vmatprep.subr.bf16.mxu0 0
        %3590 = vmatpush1.bf16.msra.mxu0 0
        %3591 = vmatprep.subr.bf16.mxu0 0
        %3592 = vmatpush1.bf16.msra.mxu0 0
        %3593 = vmatprep.subr.bf16.mxu0 0
        %3594 = vmatpush1.bf16.msra.mxu0 0
        %3595 = vmatprep.subr.bf16.mxu0 0
        %3596 = vmatpush1.bf16.msra.mxu0 0
        %3597 = vmatprep.subr.bf16.mxu0 0
        %3598 = vmatpush1.bf16.msra.mxu0 0
        %3599 = vmatprep.subr.bf16.mxu0 0
        %3600 = vmatpush1.bf16.msra.mxu0 0
        %3601 = vmatprep.subr.bf16.mxu0 0
        %3602 = vmatpush1.bf16.msra.mxu0 0
        %3603 = vmatprep.subr.bf16.mxu0 0
        %3604 = vmatpush1.bf16.msra.mxu0 0
        %3605 = vmatprep.subr.bf16.mxu0 0
        %3606 = vmatpush1.bf16.msra.mxu0 0
        %3607 = vmatprep.mubr.bf16.mxu0 0
        %3608 = vmatmul.mubr.bf16.gmra.mrb[0].mxu0 %v3573
        %v3609 = vpop.f32.mrb[0].mxu0
        %v3610 = vadd.f32 %v3545, %v3609
        %v3611 = vpop.f32.mrb[0].mxu0
        %v3612 = vpop.f32.mrb[0].mxu0
        %v3613 = vpop.f32.mrb[0].mxu0
        %3614 = vdwg.mxu0
        %v3615 = vadd.f32 %v3610, %v3454
        %v3616 = vld [vmem:[%s1098] sm:$0x1]
        %v3617 = vld [vmem:[%s1106] sm:$0x1]
        %v3618 = vsel %vm1309, %v3615, 0.0
        %3619 = vadd.xlane.f32.xlu0 %v3618
        %v3620 = vpop.xlane.xlu0 %3619
        %v3621 = vmul.f32 %v3620, %v3430
        %v3622 = vsub.f32 %v3615, %v3621
        %v3623 = vmul.f32 %v3622, %v3622
        %v3624 = vsel %vm1309, %v3623, 0.0
        %3625 = vadd.xlane.f32.xlu0 %v3624
        %v3626 = vpop.xlane.xlu0 %3625
        %v3627 = vmul.f32 %v3626, %v3430
        %v3628 = vadd.f32 %v3627, 1e-12
        %v3629 = vrsqrt.pop %v3628
        %v3630 = vmul.f32 %v3622, %v3629
        %v3632 = vlaneseq
        %v3633 = vshrl.u32 %v3632, 7
        %v3634 = vsub.s32 0, %v3633
        %v3635 = vrot.slane %v3616, %v3634
        %v3637 = vmul.f32 %v3630, %v3635
        %v3639 = vlaneseq
        %v3640 = vshrl.u32 %v3639, 7
        %v3641 = vsub.s32 0, %v3640
        %v3642 = vrot.slane %v3617, %v3641
        %v3644 = vadd.f32 %v3637, %v3642
        %3645 = vst.msk [vmem:[#allocation2] sm:$0xff] %vm1309, %v3644
        %p3646 = scmp.eq.s32.totalorder %s51, 1
        // Predicated region
        $region201: #{tpu_custom_call.1} parent=107 // pred_check
          %p3647 = pneg %p3646
        $region202: #{tpu_custom_call.1} parent=107 // pred_check_branch
          %3649 = sbr.rel (%p3647) target = $region204
        $region203: #{tpu_custom_call.1} parent=107 // pred_region
          %v3650 = vpack.c.bf16 %v3644, %v3644
          %v3651 = vld [vmem:[#allocation23] sm:$0xf]
          %v3652 = vld [vmem:[#allocation23 + $0x4] sm:$0xf]
          %v3653 = vld [vmem:[#allocation23 + $0x8] sm:$0xf]
          %v3654 = vld [vmem:[#allocation23 + $0xc] sm:$0xf]
          %v3655 = vld [vmem:[#allocation24] sm:$0x1]
          %v3660 = vunpack.c.l.b16 %v3651
          %v3661 = vunpack.c.l.b16 %v3652
          %v3662 = vunpack.c.l.b16 %v3653
          %v3663 = vunpack.c.l.b16 %v3654
          %v3664 = vpack.c.b16 %v3661, %v3660
          %v3665 = vpack.c.b16 %v3663, %v3662
          %v3669 = vsel %vm1309, %v3650, 0
          %3671 = vmatprep.subr.bf16.mxu0 0
          %3672 = vmatpush1.bf16.msra.mxu0 %v3664
          %3673 = vmatprep.subr.bf16.mxu0 0
          %3674 = vmatpush1.bf16.msra.mxu0 %v3665
          %3675 = vmatprep.subr.bf16.mxu0 0
          %3676 = vmatpush1.bf16.msra.mxu0 0
          %3677 = vmatprep.subr.bf16.mxu0 0
          %3678 = vmatpush1.bf16.msra.mxu0 0
          %3679 = vmatprep.subr.bf16.mxu0 0
          %3680 = vmatpush1.bf16.msra.mxu0 0
          %3681 = vmatprep.subr.bf16.mxu0 0
          %3682 = vmatpush1.bf16.msra.mxu0 0
          %3683 = vmatprep.subr.bf16.mxu0 0
          %3684 = vmatpush1.bf16.msra.mxu0 0
          %3685 = vmatprep.subr.bf16.mxu0 0
          %3686 = vmatpush1.bf16.msra.mxu0 0
          %3687 = vmatprep.subr.bf16.mxu0 0
          %3688 = vmatpush1.bf16.msra.mxu0 0
          %3689 = vmatprep.subr.bf16.mxu0 0
          %3690 = vmatpush1.bf16.msra.mxu0 0
          %3691 = vmatprep.subr.bf16.mxu0 0
          %3692 = vmatpush1.bf16.msra.mxu0 0
          %3693 = vmatprep.subr.bf16.mxu0 0
          %3694 = vmatpush1.bf16.msra.mxu0 0
          %3695 = vmatprep.subr.bf16.mxu0 0
          %3696 = vmatpush1.bf16.msra.mxu0 0
          %3697 = vmatprep.subr.bf16.mxu0 0
          %3698 = vmatpush1.bf16.msra.mxu0 0
          %3699 = vmatprep.subr.bf16.mxu0 0
          %3700 = vmatpush1.bf16.msra.mxu0 0
          %3701 = vmatprep.subr.bf16.mxu0 0
          %3702 = vmatpush1.bf16.msra.mxu0 0
          %3703 = vmatprep.mubr.bf16.mxu0 0
          %3704 = vmatmul.mubr.bf16.gmra.mrb[0].mxu0 %v3669
          %v3705 = vpop.f32.mrb[0].mxu0
          %v3706 = vadd.f32 %v3655, %v3705
          %v3707 = vpop.f32.mrb[0].mxu0
          %v3708 = vpop.f32.mrb[0].mxu0
          %v3709 = vpop.f32.mrb[0].mxu0
          %3710 = vdwg.mxu0
          %v3711 = vtanh.pop %v3706
          %v3712 = vpack.c.bf16 %v3711, %v3711
          %v3713 = vld [vmem:[#allocation26] sm:$0xff]
          %v3714 = vld [vmem:[#allocation26 + $0x8] sm:$0xff]
          %v3715 = vld [vmem:[#allocation26 + $0x10] sm:$0xff]
          %v3716 = vld [vmem:[#allocation26 + $0x18] sm:$0xff]
          %v3717 = vld [vmem:[#allocation26 + $0x20] sm:$0xff]
          %v3718 = vld [vmem:[#allocation26 + $0x28] sm:$0xff]
          %v3719 = vld [vmem:[#allocation26 + $0x30] sm:$0xff]
          %v3720 = vld [vmem:[#allocation26 + $0x38] sm:$0xff]
          %v3721 = vld [vmem:[#allocation27] sm:$0xf]
          %v3730 = vunpack.c.l.b16 %v3713
          %v3731 = vunpack.c.h.b16 %v3713
          %v3732 = vunpack.c.l.b16 %v3714
          %v3733 = vunpack.c.h.b16 %v3714
          %v3734 = vunpack.c.l.b16 %v3715
          %v3735 = vunpack.c.h.b16 %v3715
          %v3736 = vunpack.c.l.b16 %v3716
          %v3737 = vunpack.c.h.b16 %v3716
          %v3738 = vunpack.c.l.b16 %v3717
          %v3739 = vunpack.c.h.b16 %v3717
          %v3740 = vunpack.c.l.b16 %v3718
          %v3741 = vunpack.c.h.b16 %v3718
          %v3742 = vunpack.c.l.b16 %v3719
          %v3743 = vunpack.c.h.b16 %v3719
          %v3744 = vunpack.c.l.b16 %v3720
          %v3745 = vunpack.c.h.b16 %v3720
          %v3746 = vpack.c.b16 %v3734, %v3730
          %v3747 = vpack.c.b16 %v3735, %v3731
          %v3748 = vpack.c.b16 %v3736, %v3732
          %v3749 = vpack.c.b16 %v3737, %v3733
          %v3750 = vpack.c.b16 %v3742, %v3738
          %v3751 = vpack.c.b16 %v3743, %v3739
          %v3752 = vpack.c.b16 %v3744, %v3740
          %v3753 = vpack.c.b16 %v3745, %v3741
          %v3763 = vlaneseq
          %v3764 = vshrl.u32 %v3763, 7
          %v3765 = vsub.s32 0, %v3764
          %v3766 = vrot.slane %v3721, %v3765
          %v3767 = vlaneseq
          %v3768 = vshrl.u32 %v3767, 7
          %v3769 = vsub.s32 1, %v3768
          %v3770 = vrot.slane %v3721, %v3769
          %v3771 = vlaneseq
          %v3772 = vshrl.u32 %v3771, 7
          %v3773 = vsub.s32 2, %v3772
          %v3774 = vrot.slane %v3721, %v3773
          %v3775 = vlaneseq
          %v3776 = vshrl.u32 %v3775, 7
          %v3777 = vsub.s32 3, %v3776
          %v3778 = vrot.slane %v3721, %v3777
          %v3784 = vsel %vm1309, %v3712, 0
          %3786 = vmatprep.subr.bf16.mxu0 %v3747
          %3787 = vmatpush1.bf16.msra.mxu0 %v3746
          %3788 = vmatprep.subr.bf16.mxu0 %v3751
          %3789 = vmatpush1.bf16.msra.mxu0 %v3750
          %3790 = vmatprep.subr.bf16.mxu0 0
          %3791 = vmatpush1.bf16.msra.mxu0 0
          %3792 = vmatprep.subr.bf16.mxu0 0
          %3793 = vmatpush1.bf16.msra.mxu0 0
          %3794 = vmatprep.subr.bf16.mxu0 0
          %3795 = vmatpush1.bf16.msra.mxu0 0
          %3796 = vmatprep.subr.bf16.mxu0 0
          %3797 = vmatpush1.bf16.msra.mxu0 0
          %3798 = vmatprep.subr.bf16.mxu0 0
          %3799 = vmatpush1.bf16.msra.mxu0 0
          %3800 = vmatprep.subr.bf16.mxu0 0
          %3801 = vmatpush1.bf16.msra.mxu0 0
          %3802 = vmatprep.subr.bf16.mxu0 0
          %3803 = vmatpush1.bf16.msra.mxu0 0
          %3804 = vmatprep.subr.bf16.mxu0 0
          %3805 = vmatpush1.bf16.msra.mxu0 0
          %3806 = vmatprep.subr.bf16.mxu0 0
          %3807 = vmatpush1.bf16.msra.mxu0 0
          %3808 = vmatprep.subr.bf16.mxu0 0
          %3809 = vmatpush1.bf16.msra.mxu0 0
          %3810 = vmatprep.subr.bf16.mxu0 0
          %3811 = vmatpush1.bf16.msra.mxu0 0
          %3812 = vmatprep.subr.bf16.mxu0 0
          %3813 = vmatpush1.bf16.msra.mxu0 0
          %3814 = vmatprep.subr.bf16.mxu0 0
          %3815 = vmatpush1.bf16.msra.mxu0 0
          %3816 = vmatprep.subr.bf16.mxu0 0
          %3817 = vmatpush1.bf16.msra.mxu0 0
          %3818 = vmatprep.mubr.bf16.mxu0 0
          %3819 = vmatmul.mubr.bf16.gmra.mrb[0].mxu0 %v3784
          %v3820 = vpop.f32.mrb[0].mxu0
          %v3821 = vadd.f32 %v3766, %v3820
          %v3822 = vpop.f32.mrb[0].mxu0
          %v3823 = vadd.f32 %v3770, %v3822
          %v3824 = vpop.f32.mrb[0].mxu0
          %v3825 = vpop.f32.mrb[0].mxu0
          %3826 = vdwg.mxu0
          %3827 = vmatprep.subr.bf16.mxu0 %v3749
          %3828 = vmatpush1.bf16.msra.mxu0 %v3748
          %3829 = vmatprep.subr.bf16.mxu0 %v3753
          %3830 = vmatpush1.bf16.msra.mxu0 %v3752
          %3831 = vmatprep.subr.bf16.mxu0 0
          %3832 = vmatpush1.bf16.msra.mxu0 0
          %3833 = vmatprep.subr.bf16.mxu0 0
          %3834 = vmatpush1.bf16.msra.mxu0 0
          %3835 = vmatprep.subr.bf16.mxu0 0
          %3836 = vmatpush1.bf16.msra.mxu0 0
          %3837 = vmatprep.subr.bf16.mxu0 0
          %3838 = vmatpush1.bf16.msra.mxu0 0
          %3839 = vmatprep.subr.bf16.mxu0 0
          %3840 = vmatpush1.bf16.msra.mxu0 0
          %3841 = vmatprep.subr.bf16.mxu0 0
          %3842 = vmatpush1.bf16.msra.mxu0 0
          %3843 = vmatprep.subr.bf16.mxu0 0
          %3844 = vmatpush1.bf16.msra.mxu0 0
          %3845 = vmatprep.subr.bf16.mxu0 0
          %3846 = vmatpush1.bf16.msra.mxu0 0
          %3847 = vmatprep.subr.bf16.mxu0 0
          %3848 = vmatpush1.bf16.msra.mxu0 0
          %3849 = vmatprep.subr.bf16.mxu0 0
          %3850 = vmatpush1.bf16.msra.mxu0 0
          %3851 = vmatprep.subr.bf16.mxu0 0
          %3852 = vmatpush1.bf16.msra.mxu0 0
          %3853 = vmatprep.subr.bf16.mxu0 0
          %3854 = vmatpush1.bf16.msra.mxu0 0
          %3855 = vmatprep.subr.bf16.mxu0 0
          %3856 = vmatpush1.bf16.msra.mxu0 0
          %3857 = vmatprep.subr.bf16.mxu0 0
          %3858 = vmatpush1.bf16.msra.mxu0 0
          %3859 = vmatprep.mubr.bf16.mxu0 0
          %3860 = vmatmul.mubr.bf16.gmra.mrb[0].mxu0 %v3784
          %v3861 = vpop.f32.mrb[0].mxu0
          %v3862 = vadd.f32 %v3774, %v3861
          %v3863 = vpop.f32.mrb[0].mxu0
          %v3864 = vadd.f32 %v3778, %v3863
          %v3865 = vpop.f32.mrb[0].mxu0
          %v3866 = vpop.f32.mrb[0].mxu0
          %3867 = vdwg.mxu0
          %v3868 = vmax.f32 %v3821, 0.0
          %v3869 = vmax.f32 %v3823, 0.0
          %v3870 = vmax.f32 %v3862, 0.0
          %v3871 = vmax.f32 %v3864, 0.0
          %v3872 = vpack.c.bf16 %v3868, %v3868
          %v3873 = vpack.c.bf16 %v3869, %v3869
          %v3874 = vpack.c.bf16 %v3870, %v3870
          %v3875 = vpack.c.bf16 %v3871, %v3871
          %v3876 = vld [vmem:[#allocation29] sm:$0xf]
          %v3877 = vld [vmem:[#allocation29 + $0x4] sm:$0xf]
          %v3878 = vld [vmem:[#allocation29 + $0x8] sm:$0xf]
          %v3879 = vld [vmem:[#allocation29 + $0xc] sm:$0xf]
          %v3880 = vld [vmem:[#allocation29 + $0x10] sm:$0xf]
          %v3881 = vld [vmem:[#allocation29 + $0x14] sm:$0xf]
          %v3882 = vld [vmem:[#allocation29 + $0x18] sm:$0xf]
          %v3883 = vld [vmem:[#allocation29 + $0x1c] sm:$0xf]
          %v3884 = vld [vmem:[#allocation29 + $0x20] sm:$0xf]
          %v3885 = vld [vmem:[#allocation29 + $0x24] sm:$0xf]
          %v3886 = vld [vmem:[#allocation29 + $0x28] sm:$0xf]
          %v3887 = vld [vmem:[#allocation29 + $0x2c] sm:$0xf]
          %v3888 = vld [vmem:[#allocation29 + $0x30] sm:$0xf]
          %v3889 = vld [vmem:[#allocation29 + $0x34] sm:$0xf]
          %v3890 = vld [vmem:[#allocation29 + $0x38] sm:$0xf]
          %v3891 = vld [vmem:[#allocation29 + $0x3c] sm:$0xf]
          %v3892 = vld [vmem:[#allocation29 + $0x40] sm:$0xf]
          %v3893 = vld [vmem:[#allocation29 + $0x44] sm:$0xf]
          %v3894 = vld [vmem:[#allocation29 + $0x48] sm:$0xf]
          %v3895 = vld [vmem:[#allocation29 + $0x4c] sm:$0xf]
          %v3896 = vld [vmem:[#allocation29 + $0x50] sm:$0xf]
          %v3897 = vld [vmem:[#allocation29 + $0x54] sm:$0xf]
          %v3898 = vld [vmem:[#allocation29 + $0x58] sm:$0xf]
          %v3899 = vld [vmem:[#allocation29 + $0x5c] sm:$0xf]
          %v3900 = vld [vmem:[#allocation29 + $0x60] sm:$0xf]
          %v3901 = vld [vmem:[#allocation29 + $0x64] sm:$0xf]
          %v3902 = vld [vmem:[#allocation29 + $0x68] sm:$0xf]
          %v3903 = vld [vmem:[#allocation29 + $0x6c] sm:$0xf]
          %v3904 = vld [vmem:[#allocation29 + $0x70] sm:$0xf]
          %v3905 = vld [vmem:[#allocation29 + $0x74] sm:$0xf]
          %v3906 = vld [vmem:[#allocation29 + $0x78] sm:$0xf]
          %v3907 = vld [vmem:[#allocation29 + $0x7c] sm:$0xf]
          %v3908 = vld [vmem:[#allocation29 + $0x80] sm:$0xf]
          %v3909 = vld [vmem:[#allocation29 + $0x84] sm:$0xf]
          %v3910 = vld [vmem:[#allocation29 + $0x88] sm:$0xf]
          %v3911 = vld [vmem:[#allocation29 + $0x8c] sm:$0xf]
          %v3912 = vld [vmem:[#allocation29 + $0x90] sm:$0xf]
          %v3913 = vld [vmem:[#allocation29 + $0x94] sm:$0xf]
          %v3914 = vld [vmem:[#allocation29 + $0x98] sm:$0xf]
          %v3915 = vld [vmem:[#allocation29 + $0x9c] sm:$0xf]
          %v3916 = vld [vmem:[#allocation29 + $0xa0] sm:$0xf]
          %v3917 = vld [vmem:[#allocation29 + $0xa4] sm:$0xf]
          %v3918 = vld [vmem:[#allocation29 + $0xa8] sm:$0xf]
          %v3919 = vld [vmem:[#allocation29 + $0xac] sm:$0xf]
          %v3920 = vld [vmem:[#allocation29 + $0xb0] sm:$0xf]
          %v3921 = vld [vmem:[#allocation29 + $0xb4] sm:$0xf]
          %v3922 = vld [vmem:[#allocation29 + $0xb8] sm:$0xf]
          %v3923 = vld [vmem:[#allocation29 + $0xbc] sm:$0xf]
          %v3924 = vld [vmem:[#allocation29 + $0xc0] sm:$0xf]
          %v3925 = vld [vmem:[#allocation29 + $0xc4] sm:$0xf]
          %v3926 = vld [vmem:[#allocation29 + $0xc8] sm:$0xf]
          %v3927 = vld [vmem:[#allocation29 + $0xcc] sm:$0xf]
          %v3928 = vld [vmem:[#allocation29 + $0xd0] sm:$0xf]
          %v3929 = vld [vmem:[#allocation29 + $0xd4] sm:$0xf]
          %v3930 = vld [vmem:[#allocation29 + $0xd8] sm:$0xf]
          %v3931 = vld [vmem:[#allocation29 + $0xdc] sm:$0xf]
          %v3932 = vld [vmem:[#allocation29 + $0xe0] sm:$0xf]
          %v3933 = vld [vmem:[#allocation29 + $0xe4] sm:$0xf]
          %v3934 = vld [vmem:[#allocation29 + $0xe8] sm:$0xf]
          %v3935 = vld [vmem:[#allocation29 + $0xec] sm:$0xf]
          %v3936 = vld [vmem:[#allocation29 + $0xf0] sm:$0xf]
          %v3937 = vld [vmem:[#allocation29 + $0xf4] sm:$0xf]
          %v3938 = vld [vmem:[#allocation29 + $0xf8] sm:$0xf]
          %v3939 = vld [vmem:[#allocation29 + $0xfc] sm:$0xf]
          %v3940 = vld [vmem:[#allocation30] sm:$0x1]
          %v4005 = vunpack.c.l.b16 %v3876
          %v4006 = vunpack.c.l.b16 %v3877
          %v4007 = vunpack.c.l.b16 %v3878
          %v4008 = vunpack.c.l.b16 %v3879
          %v4009 = vunpack.c.l.b16 %v3880
          %v4010 = vunpack.c.l.b16 %v3881
          %v4011 = vunpack.c.l.b16 %v3882
          %v4012 = vunpack.c.l.b16 %v3883
          %v4013 = vunpack.c.l.b16 %v3884
          %v4014 = vunpack.c.l.b16 %v3885
          %v4015 = vunpack.c.l.b16 %v3886
          %v4016 = vunpack.c.l.b16 %v3887
          %v4017 = vunpack.c.l.b16 %v3888
          %v4018 = vunpack.c.l.b16 %v3889
          %v4019 = vunpack.c.l.b16 %v3890
          %v4020 = vunpack.c.l.b16 %v3891
          %v4021 = vunpack.c.l.b16 %v3892
          %v4022 = vunpack.c.l.b16 %v3893
          %v4023 = vunpack.c.l.b16 %v3894
          %v4024 = vunpack.c.l.b16 %v3895
          %v4025 = vunpack.c.l.b16 %v3896
          %v4026 = vunpack.c.l.b16 %v3897
          %v4027 = vunpack.c.l.b16 %v3898
          %v4028 = vunpack.c.l.b16 %v3899
          %v4029 = vunpack.c.l.b16 %v3900
          %v4030 = vunpack.c.l.b16 %v3901
          %v4031 = vunpack.c.l.b16 %v3902
          %v4032 = vunpack.c.l.b16 %v3903
          %v4033 = vunpack.c.l.b16 %v3904
          %v4034 = vunpack.c.l.b16 %v3905
          %v4035 = vunpack.c.l.b16 %v3906
          %v4036 = vunpack.c.l.b16 %v3907
          %v4037 = vunpack.c.l.b16 %v3908
          %v4038 = vunpack.c.l.b16 %v3909
          %v4039 = vunpack.c.l.b16 %v3910
          %v4040 = vunpack.c.l.b16 %v3911
          %v4041 = vunpack.c.l.b16 %v3912
          %v4042 = vunpack.c.l.b16 %v3913
          %v4043 = vunpack.c.l.b16 %v3914
          %v4044 = vunpack.c.l.b16 %v3915
          %v4045 = vunpack.c.l.b16 %v3916
          %v4046 = vunpack.c.l.b16 %v3917
          %v4047 = vunpack.c.l.b16 %v3918
          %v4048 = vunpack.c.l.b16 %v3919
          %v4049 = vunpack.c.l.b16 %v3920
          %v4050 = vunpack.c.l.b16 %v3921
          %v4051 = vunpack.c.l.b16 %v3922
          %v4052 = vunpack.c.l.b16 %v3923
          %v4053 = vunpack.c.l.b16 %v3924
          %v4054 = vunpack.c.l.b16 %v3925
          %v4055 = vunpack.c.l.b16 %v3926
          %v4056 = vunpack.c.l.b16 %v3927
          %v4057 = vunpack.c.l.b16 %v3928
          %v4058 = vunpack.c.l.b16 %v3929
          %v4059 = vunpack.c.l.b16 %v3930
          %v4060 = vunpack.c.l.b16 %v3931
          %v4061 = vunpack.c.l.b16 %v3932
          %v4062 = vunpack.c.l.b16 %v3933
          %v4063 = vunpack.c.l.b16 %v3934
          %v4064 = vunpack.c.l.b16 %v3935
          %v4065 = vunpack.c.l.b16 %v3936
          %v4066 = vunpack.c.l.b16 %v3937
          %v4067 = vunpack.c.l.b16 %v3938
          %v4068 = vunpack.c.l.b16 %v3939
          %v4069 = vpack.c.b16 %v4006, %v4005
          %v4070 = vpack.c.b16 %v4008, %v4007
          %v4071 = vpack.c.b16 %v4010, %v4009
          %v4072 = vpack.c.b16 %v4012, %v4011
          %v4073 = vpack.c.b16 %v4014, %v4013
          %v4074 = vpack.c.b16 %v4016, %v4015
          %v4075 = vpack.c.b16 %v4018, %v4017
          %v4076 = vpack.c.b16 %v4020, %v4019
          %v4077 = vpack.c.b16 %v4022, %v4021
          %v4078 = vpack.c.b16 %v4024, %v4023
          %v4079 = vpack.c.b16 %v4026, %v4025
          %v4080 = vpack.c.b16 %v4028, %v4027
          %v4081 = vpack.c.b16 %v4030, %v4029
          %v4082 = vpack.c.b16 %v4032, %v4031
          %v4083 = vpack.c.b16 %v4034, %v4033
          %v4084 = vpack.c.b16 %v4036, %v4035
          %v4085 = vpack.c.b16 %v4038, %v4037
          %v4086 = vpack.c.b16 %v4040, %v4039
          %v4087 = vpack.c.b16 %v4042, %v4041
          %v4088 = vpack.c.b16 %v4044, %v4043
          %v4089 = vpack.c.b16 %v4046, %v4045
          %v4090 = vpack.c.b16 %v4048, %v4047
          %v4091 = vpack.c.b16 %v4050, %v4049
          %v4092 = vpack.c.b16 %v4052, %v4051
          %v4093 = vpack.c.b16 %v4054, %v4053
          %v4094 = vpack.c.b16 %v4056, %v4055
          %v4095 = vpack.c.b16 %v4058, %v4057
          %v4096 = vpack.c.b16 %v4060, %v4059
          %v4097 = vpack.c.b16 %v4062, %v4061
          %v4098 = vpack.c.b16 %v4064, %v4063
          %v4099 = vpack.c.b16 %v4066, %v4065
          %v4100 = vpack.c.b16 %v4068, %v4067
          %4133 = vmatprep.subr.bf16.mxu0 0
          %4134 = vmatpush1.bf16.msra.mxu0 %v4069
          %4135 = vmatprep.subr.bf16.mxu0 0
          %4136 = vmatpush1.bf16.msra.mxu0 %v4070
          %4137 = vmatprep.subr.bf16.mxu0 0
          %4138 = vmatpush1.bf16.msra.mxu0 %v4071
          %4139 = vmatprep.subr.bf16.mxu0 0
          %4140 = vmatpush1.bf16.msra.mxu0 %v4072
          %4141 = vmatprep.subr.bf16.mxu0 0
          %4142 = vmatpush1.bf16.msra.mxu0 %v4073
          %4143 = vmatprep.subr.bf16.mxu0 0
          %4144 = vmatpush1.bf16.msra.mxu0 %v4074
          %4145 = vmatprep.subr.bf16.mxu0 0
          %4146 = vmatpush1.bf16.msra.mxu0 %v4075
          %4147 = vmatprep.subr.bf16.mxu0 0
          %4148 = vmatpush1.bf16.msra.mxu0 %v4076
          %4149 = vmatprep.subr.bf16.mxu0 0
          %4150 = vmatpush1.bf16.msra.mxu0 %v4077
          %4151 = vmatprep.subr.bf16.mxu0 0
          %4152 = vmatpush1.bf16.msra.mxu0 %v4078
          %4153 = vmatprep.subr.bf16.mxu0 0
          %4154 = vmatpush1.bf16.msra.mxu0 %v4079
          %4155 = vmatprep.subr.bf16.mxu0 0
          %4156 = vmatpush1.bf16.msra.mxu0 %v4080
          %4157 = vmatprep.subr.bf16.mxu0 0
          %4158 = vmatpush1.bf16.msra.mxu0 %v4081
          %4159 = vmatprep.subr.bf16.mxu0 0
          %4160 = vmatpush1.bf16.msra.mxu0 %v4082
          %4161 = vmatprep.subr.bf16.mxu0 0
          %4162 = vmatpush1.bf16.msra.mxu0 %v4083
          %4163 = vmatprep.subr.bf16.mxu0 0
          %4164 = vmatpush1.bf16.msra.mxu0 %v4084
          %4165 = vmatprep.mubr.bf16.mxu0 %v3873
          %4166 = vmatmul.mubr.bf16.gmra.mrb[0].mxu0 %v3872
          %v4167 = vpop.f32.mrb[0].mxu0
          %v4168 = vadd.f32 %v3940, %v4167
          %v4169 = vpop.f32.mrb[0].mxu0
          %v4170 = vpop.f32.mrb[0].mxu0
          %v4171 = vpop.f32.mrb[0].mxu0
          %4172 = vdwg.mxu0
          %4173 = vmatprep.subr.bf16.mxu0 0
          %4174 = vmatpush1.bf16.msra.mxu0 %v4085
          %4175 = vmatprep.subr.bf16.mxu0 0
          %4176 = vmatpush1.bf16.msra.mxu0 %v4086
          %4177 = vmatprep.subr.bf16.mxu0 0
          %4178 = vmatpush1.bf16.msra.mxu0 %v4087
          %4179 = vmatprep.subr.bf16.mxu0 0
          %4180 = vmatpush1.bf16.msra.mxu0 %v4088
          %4181 = vmatprep.subr.bf16.mxu0 0
          %4182 = vmatpush1.bf16.msra.mxu0 %v4089
          %4183 = vmatprep.subr.bf16.mxu0 0
          %4184 = vmatpush1.bf16.msra.mxu0 %v4090
          %4185 = vmatprep.subr.bf16.mxu0 0
          %4186 = vmatpush1.bf16.msra.mxu0 %v4091
          %4187 = vmatprep.subr.bf16.mxu0 0
          %4188 = vmatpush1.bf16.msra.mxu0 %v4092
          %4189 = vmatprep.subr.bf16.mxu0 0
          %4190 = vmatpush1.bf16.msra.mxu0 %v4093
          %4191 = vmatprep.subr.bf16.mxu0 0
          %4192 = vmatpush1.bf16.msra.mxu0 %v4094
          %4193 = vmatprep.subr.bf16.mxu0 0
          %4194 = vmatpush1.bf16.msra.mxu0 %v4095
          %4195 = vmatprep.subr.bf16.mxu0 0
          %4196 = vmatpush1.bf16.msra.mxu0 %v4096
          %4197 = vmatprep.subr.bf16.mxu0 0
          %4198 = vmatpush1.bf16.msra.mxu0 %v4097
          %4199 = vmatprep.subr.bf16.mxu0 0
          %4200 = vmatpush1.bf16.msra.mxu0 %v4098
          %4201 = vmatprep.subr.bf16.mxu0 0
          %4202 = vmatpush1.bf16.msra.mxu0 %v4099
          %4203 = vmatprep.subr.bf16.mxu0 0
          %4204 = vmatpush1.bf16.msra.mxu0 %v4100
          %4205 = vmatprep.mubr.bf16.mxu0 %v3875
          %4206 = vmatmul.mubr.bf16.gmra.mrb[0].mxu0 %v3874
          %v4207 = vpop.f32.mrb[0].mxu0
          %v4208 = vadd.f32 %v4168, %v4207
          %v4209 = vpop.f32.mrb[0].mxu0
          %v4210 = vpop.f32.mrb[0].mxu0
          %v4211 = vpop.f32.mrb[0].mxu0
          %4212 = vdwg.mxu0
          %4213 = vst [vmem:[%s1245] sm:$0x1] %v4208
        $region204: #{tpu_custom_call.1} parent=107 // pred_fallthru
          _
        %s4214 = sand.u32 %s598, 1
        %s4215 = scalar_lea.sflag [#allocation5], %s4214
        %s4216 = sand.u32 %s598, 1
        %s4217 = scalar_lea.vmem [#allocation32], %s4216
        // Predicated region
        $region205: #{tpu_custom_call.1} parent=107 // pred_check
          %p4218 = pneg %p608
        $region206: #{tpu_custom_call.1} parent=107 // pred_check_branch
          %4220 = sbr.rel (%p4218) target = $region208
        $region207: #{tpu_custom_call.1} parent=107 // pred_region
          %s4222 = ssub.s32 16, 16
          %4223 = vsyncadd %s4215, %s4222
          %s4224 = smul.addr %s50, 16
          %s4225 = scalar_lea.hbm %s22, %s4224
          %s4227 = sshll.u32 %s4217, 4
          %s4228 = int_to_ptr.vmem [resolvable:$true] %s4227
          %4230 = dma.vmem_to_hbm [thread:$0]  %s4228, 16, %s4225, %s4215
        $region208: #{tpu_custom_call.1} parent=107 // pred_fallthru
          _
      $region108: #{tpu_custom_call.1} parent=5 // pred_fallthru
        _
      %p4231 = scmp.le.s32.totalorder 2, %s41
      // Predicated region
      $region209: #{tpu_custom_call.1} parent=5 // pred_check
        %p4232 = pneg %p4231
      $region210: #{tpu_custom_call.1} parent=5 // pred_check_branch
        %4234 = sbr.rel (%p4232) target = $region212
      $region211: #{tpu_custom_call.1} parent=5 // pred_region
        %s4235 = ssub.s32 %s41, 2
        // Predicated region
        $region213: #{tpu_custom_call.1} parent=211 // pred_check
          %p4236 = pneg %p614
        $region214: #{tpu_custom_call.1} parent=211 // pred_check_branch
          %4238 = sbr.rel (%p4236) target = $region216
        $region215: #{tpu_custom_call.1} parent=211 // pred_region
          %s4239 = sand.u32 %s599, 1
          %s4240 = scalar_lea.sflag [#allocation5], %s4239
          %s4241 = sand.u32 %s599, 1
          %s4242 = scalar_lea.vmem [#allocation32], %s4241
          %4243 = dma.done %s4240, 16
        $region216: #{tpu_custom_call.1} parent=211 // pred_fallthru
          _
      $region212: #{tpu_custom_call.1} parent=5 // pred_fallthru
        _
    $region6: #{tpu_custom_call.1} parent=1 // loop_footer
      %s45 = sadd.s32 1, %s41
    $region7: #{tpu_custom_call.1} parent=1 // loop_footer_branch
      %40 = sbr.rel target = $region3
    $region8: #{tpu_custom_call.1} parent=1 // loop_exit
      _
    %4244 = vsyncpa [#allocation4], 1
    %s4245 = scalar_lea.sflag [#allocation4], 1
    %4246 = vsyncpa %s4245, 1
    %4247 = vsyncpa [#allocation7], 1
    %s4248 = scalar_lea.sflag [#allocation7], 1
    %4249 = vsyncpa %s4248, 1
    %4250 = vsyncpa [#allocation10], 1
    %4251 = vsyncpa [#allocation25], 1
    %4252 = vsyncpa [#allocation28], 1
    %4253 = vsyncpa [#allocation31], 1
    %4254 = vsyncpa [#allocation5], 1
    %s4255 = scalar_lea.sflag [#allocation5], 1
    %4256 = vsyncpa %s4255, 1

</llo_original>
